<compile_context>
chip_gen: v7x
topology: tpu7x:2x2x1
jax: 0.10.0
libtpu: 0.0.40
codegen_flags: <defaults>
</compile_context>

<pallas_src>
import functools

import numpy as np

import jax
import jax.numpy as jnp
from jax.experimental import pallas as pl
from jax.experimental.pallas import tpu as pltpu


# ----------------------------------------------------------------------------
# Host-side constant tables (numpy, depend only on static spatial sizes).
# ----------------------------------------------------------------------------
def _conv3x3_tap_masks(h, w):
    """0/1 validity mask per 3x3 tap for a stride-1, pad-1 conv (flat layout)."""
    p = h * w
    oy = np.arange(p) // w
    ox = np.arange(p) % w
    m = np.zeros((9, 1, p), np.float32)
    for dy in range(3):
        for dx in range(3):
            iy = oy + dy - 1
            ix = ox + dx - 1
            m[dy * 3 + dx, 0] = ((iy >= 0) & (iy < h) & (ix >= 0) & (ix < w))
    return m


def _stride2_tap_masks(h, w):
    """0/1 validity mask per 3x3 tap of the stride-2 conv (phase layout)."""
    p = h * w
    oy = np.arange(p) // w
    ox = np.arange(p) % w
    m = np.zeros((9, 1, p), np.float32)
    for ky in range(3):
        for kx in range(3):
            sy = -1 if ky == 0 else 0
            sx = -1 if kx == 0 else 0
            m[ky * 3 + kx, 0] = ((oy + sy >= 0) & (ox + sx >= 0))
    return m


def _upsample2x_matrix(n):
    """(2n, n) 1-D bilinear x2 interpolation matrix, align_corners=False."""
    out = np.zeros((2 * n, n), np.float32)
    for o in range(2 * n):
        s = max((o + 0.5) * 0.5 - 0.5, 0.0)          # PyTorch half-pixel + clamp
        i0 = min(int(np.floor(s)), n - 1)
        i1 = min(i0 + 1, n - 1)
        w1 = s - i0
        out[o, i0] += 1.0 - w1
        out[o, i1] += w1
    return out


def _upsample2x_kron(h, w):
    """(h*w, 4*h*w) operator: flat lo-res map @ UT = flat 2x-upsampled map."""
    return np.kron(_upsample2x_matrix(h), _upsample2x_matrix(w)).T.copy()


# ----------------------------------------------------------------------------
# Fused AttentionGate kernel (one grid step per batch element).
# ----------------------------------------------------------------------------
def _attention_gate_kernel(g_ref, xph_ref, x_ref, gw_ref, xw_ref, gm_ref,
                           xm_ref, b_ref, ow_ref, ut_ref, sc_ref, o_ref, *,
                           wg):
    f = gw_ref.shape[1]
    pg = g_ref.shape[2]

    g = g_ref[0]              # (Cg, Pg) f32, flat spatial in lanes
    xph = xph_ref[0]          # (4, Cx, Pg) f32, space-to-depth phases of x

    def shifted(v, off):
        # result[:, p] = v[:, (p + off) % Pg]; wrapped lanes are masked out.
        if off == 0:
            return v
        return pltpu.roll(v, (-off) % pg, axis=1)

    acc = jnp.zeros((f, pg), jnp.float32)

    # gcnn: Conv2d(Cg -> F, 3x3, stride 1, pad 1).  Zero padding is realized
    # through the precomputed per-tap edge masks (no padded copies, no
    # unaligned sublane slices, no reshapes).
    for dy in range(3):
        for dx in range(3):
            t = dy * 3 + dx
            off = (dy - 1) * wg + (dx - 1)
            tap = (shifted(g, off) * gm_ref[t]).astype(jnp.bfloat16)
            acc += jnp.dot(gw_ref[t], tap, preferred_element_type=jnp.float32)

    # xcnn: Conv2d(Cx -> F, 3x3, stride 2, pad 1) on the 2x-resolution input,
    # via its 4 space-to-depth phases; each tap is a lane shift in {-wg-1..0}.
    for ky in range(3):
        for kx in range(3):
            t = ky * 3 + kx
            ph = ((ky + 1) % 2) * 2 + ((kx + 1) % 2)
            off = (-1 if ky == 0 else 0) * wg + (-1 if kx == 0 else 0)
            tap = (shifted(xph[ph], off) * xm_ref[t]).astype(jnp.bfloat16)
            acc += jnp.dot(xw_ref[t], tap, preferred_element_type=jnp.float32)

    xg = acc + b_ref[...]                          # + (gcnn.bias + xcnn.bias)
    alpha = sc_ref[0]                              # PReLU slope (shared scalar)
    xg = jnp.where(xg >= 0.0, xg, alpha * xg)

    # ocnn (1x1 conv -> 1 channel) + sigmoid -> attention map (1, Pg)
    att = jnp.dot(ow_ref[...], xg, preferred_element_type=jnp.float32) + sc_ref[1]
    att = 1.0 / (1.0 + jnp.exp(-att))

    # 2x bilinear upsample (align_corners=False) as one lane-dense matmul,
    # then gate the hi-res input.  Output store is lane dense (Px = 4*Pg lanes).
    att_up = jnp.dot(att, ut_ref[...], preferred_element_type=jnp.float32)
    o_ref[0] = x_ref[0] * att_up


# ----------------------------------------------------------------------------
# Wrapper: NCHW in / NCHW out, matches AttentionGate.forward(g, x).
# ----------------------------------------------------------------------------
def attention_gate(g, x, params):
    gw, gb = params["gw"], params["gb"]       # (F, Cg, 3, 3), (F,)
    xw, xb = params["xw"], params["xb"]       # (F, Cx, 3, 3), (F,)
    ow, ob = params["ow"], params["ob"]       # (1, F, 1, 1), (1,)
    alpha = params["alpha"]                   # PReLU slope, scalar

    b, cg, hg, wg = g.shape
    bx, cx, hx, wx = x.shape
    assert b == bx and hx == 2 * hg and wx == 2 * wg, (
        "AttentionGate requires x at exactly 2x the spatial size of g")
    f = gw.shape[0]
    pg, px = hg * wg, hx * wx

    # ---- layout prep (cheap one-time XLA glue) ------------------------------
    g_cp = g.reshape(b, cg, pg).astype(jnp.float32)            # (B, Cg, Pg)
    x_cp = x.reshape(b, cx, px).astype(jnp.float32)            # (B, Cx, Px)
    xph = jnp.transpose(                                       # (B, 4, Cx, Pg)
        x.astype(jnp.float32).reshape(b, cx, hg, 2, wg, 2),
        (0, 3, 5, 1, 2, 4)).reshape(b, 4, cx, pg)

    gwk = jnp.transpose(gw, (2, 3, 0, 1)).reshape(9, f, cg).astype(jnp.bfloat16)
    xwk = jnp.transpose(xw, (2, 3, 0, 1)).reshape(9, f, cx).astype(jnp.bfloat16)
    bias = (gb + xb).reshape(f, 1).astype(jnp.float32)
    owk = ow.reshape(1, f).astype(jnp.float32)
    scalars = jnp.concatenate([jnp.reshape(alpha, (1,)),
                               jnp.reshape(ob, (1,))]).astype(jnp.float32)

    gmask = jnp.asarray(_conv3x3_tap_masks(hg, wg))            # (9, 1, Pg)
    xmask = jnp.asarray(_stride2_tap_masks(hg, wg))            # (9, 1, Pg)
    # TODO(synk): replace the dense Kronecker upsample operator (Pg x Px) with
    # a separable / row-tiled variant before scaling to large spatial sizes.
    ut = jnp.asarray(_upsample2x_kron(hg, wg))                 # (Pg, Px)

    kernel = functools.partial(_attention_gate_kernel, wg=wg)
    out = pl.pallas_call(
        kernel,
        out_shape=jax.ShapeDtypeStruct((b, cx, px), jnp.float32),
        grid=(b,),
        in_specs=[
            pl.BlockSpec((1, cg, pg), lambda i: (i, 0, 0)),
            pl.BlockSpec((1, 4, cx, pg), lambda i: (i, 0, 0, 0)),
            pl.BlockSpec((1, cx, px), lambda i: (i, 0, 0)),
            pl.BlockSpec((9, f, cg), lambda i: (0, 0, 0)),
            pl.BlockSpec((9, f, cx), lambda i: (0, 0, 0)),
            pl.BlockSpec((9, 1, pg), lambda i: (0, 0, 0)),
            pl.BlockSpec((9, 1, pg), lambda i: (0, 0, 0)),
            pl.BlockSpec((f, 1), lambda i: (0, 0)),
            pl.BlockSpec((1, f), lambda i: (0, 0)),
            pl.BlockSpec((pg, px), lambda i: (0, 0)),
            pl.BlockSpec(memory_space=pltpu.MemorySpace.SMEM),
        ],
        out_specs=pl.BlockSpec((1, cx, px), lambda i: (i, 0, 0)),
        # Batch axis is parallel -> shards across TensorCores on v7x.
        # TODO(synk): for B == 1 on v7x, add a parallel spatial split so both
        # TensorCores get used.
        compiler_params=pltpu.CompilerParams(dimension_semantics=("parallel",)),
    )(g_cp, xph, x_cp, gwk, xwk, gmask, xmask, bias, owk, ut, scalars)

    return out.reshape(b, cx, hx, wx)


# ----------------------------------------------------------------------------
# Deterministic parameter init (PyTorch Conv2d-style uniform bounds).
# ----------------------------------------------------------------------------
def init_params(key, g_filters, x_filters, filters):
    kgw, kgb, kxw, kxb, kow, kob = jax.random.split(key, 6)

    def conv_init(kw_, kb_, cout, cin, ksize):
        bound = 1.0 / float(np.sqrt(cin * ksize * ksize))
        w = jax.random.uniform(kw_, (cout, cin, ksize, ksize), jnp.float32,
                               minval=-bound, maxval=bound)
        bb = jax.random.uniform(kb_, (cout,), jnp.float32,
                                minval=-bound, maxval=bound)
        return w, bb

    gw, gb = conv_init(kgw, kgb, filters, g_filters, 3)
    xw, xb = conv_init(kxw, kxb, filters, x_filters, 3)
    ow, ob = conv_init(kow, kob, 1, filters, 1)
    return dict(gw=gw, gb=gb, xw=xw, xb=xb, ow=ow, ob=ob,
                alpha=jnp.float32(0.25))          # nn.PReLU() default


# ----------------------------------------------------------------------------
if __name__ == "__main__":
    B = 2
    G_FILTERS = 4       # channels of the gating signal g
    X_FILTERS = 4       # channels of the skip connection x
    FILTERS = 32        # internal attention channels
    HG = WG = 16        # g spatial size; x is (2*HG, 2*WG)

    key = jax.random.PRNGKey(0)
    kg, kx, kp = jax.random.split(key, 3)
    g = jax.random.normal(kg, (B, G_FILTERS, HG, WG), jnp.float32)
    x = jax.random.normal(kx, (B, X_FILTERS, 2 * HG, 2 * WG), jnp.float32)
    params = init_params(kp, G_FILTERS, X_FILTERS, FILTERS)

    out = jax.jit(attention_gate)(g, x, params)
    jax.block_until_ready(out)

    assert out.shape == (B, X_FILTERS, 2 * HG, 2 * WG)
    assert bool(jnp.all(jnp.isfinite(out)))
    print("KERNEL_OK")
</pallas_src>

<mosaic_0001>
module attributes {stable_mosaic.version = 11 : i64} {
  func.func @_attention_gate_kernel(%arg0: i32, %arg1: memref<1x4x256xf32, #tpu.memory_space<vmem>>, %arg2: memref<1x4x4x256xf32, #tpu.memory_space<vmem>>, %arg3: memref<1x4x1024xf32, #tpu.memory_space<vmem>>, %arg4: memref<9x32x4xbf16, #tpu.memory_space<vmem>>, %arg5: memref<9x32x4xbf16, #tpu.memory_space<vmem>>, %arg6: memref<9x1x256xf32, #tpu.memory_space<vmem>>, %arg7: memref<9x1x256xf32, #tpu.memory_space<vmem>>, %arg8: memref<32x1xf32, #tpu.memory_space<vmem>>, %arg9: memref<1x32xf32, #tpu.memory_space<vmem>>, %arg10: memref<256x1024xf32, #tpu.memory_space<vmem>>, %arg11: memref<2xf32, #tpu.memory_space<smem>>, %arg12: memref<1x4x1024xf32, #tpu.memory_space<vmem>>) attributes {dimension_semantics = [#tpu.dimension_semantics<parallel>], iteration_bounds = array<i64: 2>, scalar_prefetch = 0 : i64, scratch_operands = 0 : i64, tpu.core_type = #tpu.core_type<tc>, window_params = [{transform_indices = @transform_0, window_bounds = array<i64: 1, 4, 256>}, {transform_indices = @transform_1, window_bounds = array<i64: 1, 4, 4, 256>}, {transform_indices = @transform_2, window_bounds = array<i64: 1, 4, 1024>}, {pipeline_mode = #tpu.pipeline_mode<synchronous>, transform_indices = @transform_3, window_bounds = array<i64: 9, 32, 4>}, {pipeline_mode = #tpu.pipeline_mode<synchronous>, transform_indices = @transform_4, window_bounds = array<i64: 9, 32, 4>}, {pipeline_mode = #tpu.pipeline_mode<synchronous>, transform_indices = @transform_5, window_bounds = array<i64: 9, 1, 256>}, {pipeline_mode = #tpu.pipeline_mode<synchronous>, transform_indices = @transform_6, window_bounds = array<i64: 9, 1, 256>}, {pipeline_mode = #tpu.pipeline_mode<synchronous>, transform_indices = @transform_7, window_bounds = array<i64: 32, 1>}, {pipeline_mode = #tpu.pipeline_mode<synchronous>, transform_indices = @transform_8, window_bounds = array<i64: 1, 32>}, {pipeline_mode = #tpu.pipeline_mode<synchronous>, transform_indices = @transform_9, window_bounds = array<i64: 256, 1024>}, {transform_indices = @transform_10, window_bounds = array<i64: 2>}, {transform_indices = @transform_11, window_bounds = array<i64: 1, 4, 1024>}]} {
    %c0 = arith.constant 0 : index
    %c0_0 = arith.constant 0 : index
    %c0_1 = arith.constant 0 : index
    %0 = vector.load %arg1[%c0, %c0_0, %c0_1] : memref<1x4x256xf32, #tpu.memory_space<vmem>>, vector<1x4x256xf32>
    %1 = vector.shape_cast %0 : vector<1x4x256xf32> to vector<4x256xf32>
    %c0_2 = arith.constant 0 : index
    %c0_3 = arith.constant 0 : index
    %c0_4 = arith.constant 0 : index
    %c0_5 = arith.constant 0 : index
    %2 = vector.load %arg2[%c0_2, %c0_3, %c0_4, %c0_5] : memref<1x4x4x256xf32, #tpu.memory_space<vmem>>, vector<1x4x4x256xf32>
    %3 = vector.shape_cast %2 : vector<1x4x4x256xf32> to vector<4x4x256xf32>
    %cst = arith.constant 0.000000e+00 : f32
    %4 = vector.broadcast %cst : f32 to vector<32x256xf32>
    %c17_i32 = arith.constant 17 : i32
    %5 = tpu.dynamic_rotate %1 by %c17_i32 dim 1 : vector<4x256xf32>, i32 -> vector<4x256xf32>
    %c0_6 = arith.constant 0 : index
    %c0_7 = arith.constant 0 : index
    %c0_8 = arith.constant 0 : index
    %6 = vector.load %arg6[%c0_6, %c0_7, %c0_8] : memref<9x1x256xf32, #tpu.memory_space<vmem>>, vector<1x1x256xf32>
    %7 = vector.shape_cast %6 : vector<1x1x256xf32> to vector<1x256xf32>
    %8 = vector.broadcast %7 : vector<1x256xf32> to vector<4x256xf32>
    %9 = arith.mulf %5, %8 : vector<4x256xf32>
    %10 = arith.truncf %9 : vector<4x256xf32> to vector<4x256xbf16>
    %c0_9 = arith.constant 0 : index
    %c0_10 = arith.constant 0 : index
    %c0_11 = arith.constant 0 : index
    %11 = vector.load %arg4[%c0_9, %c0_10, %c0_11] : memref<9x32x4xbf16, #tpu.memory_space<vmem>>, vector<1x32x4xbf16>
    %12 = vector.shape_cast %11 : vector<1x32x4xbf16> to vector<32x4xbf16>
    %cst_12 = arith.constant dense<0.000000e+00> : vector<32x256xf32>
    %13 = tpu.matmul %12, %10, %cst_12 {dimension_numbers = #tpu.dot_dimension_numbers<[1], [0], [0], [1], [0, 0, 1, 1], [], []>} : vector<32x4xbf16>, vector<4x256xbf16>, vector<32x256xf32> -> vector<32x256xf32>
    %14 = arith.addf %4, %13 : vector<32x256xf32>
    %c16_i32 = arith.constant 16 : i32
    %15 = tpu.dynamic_rotate %1 by %c16_i32 dim 1 : vector<4x256xf32>, i32 -> vector<4x256xf32>
    %c1 = arith.constant 1 : index
    %c0_13 = arith.constant 0 : index
    %c0_14 = arith.constant 0 : index
    %16 = vector.load %arg6[%c1, %c0_13, %c0_14] : memref<9x1x256xf32, #tpu.memory_space<vmem>>, vector<1x1x256xf32>
    %17 = vector.shape_cast %16 : vector<1x1x256xf32> to vector<1x256xf32>
    %18 = vector.broadcast %17 : vector<1x256xf32> to vector<4x256xf32>
    %19 = arith.mulf %15, %18 : vector<4x256xf32>
    %20 = arith.truncf %19 : vector<4x256xf32> to vector<4x256xbf16>
    %c1_15 = arith.constant 1 : index
    %c0_16 = arith.constant 0 : index
    %c0_17 = arith.constant 0 : index
    %21 = vector.load %arg4[%c1_15, %c0_16, %c0_17] : memref<9x32x4xbf16, #tpu.memory_space<vmem>>, vector<1x32x4xbf16>
    %22 = vector.shape_cast %21 : vector<1x32x4xbf16> to vector<32x4xbf16>
    %cst_18 = arith.constant dense<0.000000e+00> : vector<32x256xf32>
    %23 = tpu.matmul %22, %20, %cst_18 {dimension_numbers = #tpu.dot_dimension_numbers<[1], [0], [0], [1], [0, 0, 1, 1], [], []>} : vector<32x4xbf16>, vector<4x256xbf16>, vector<32x256xf32> -> vector<32x256xf32>
    %24 = arith.addf %14, %23 : vector<32x256xf32>
    %c15_i32 = arith.constant 15 : i32
    %25 = tpu.dynamic_rotate %1 by %c15_i32 dim 1 : vector<4x256xf32>, i32 -> vector<4x256xf32>
    %c2 = arith.constant 2 : index
    %c0_19 = arith.constant 0 : index
    %c0_20 = arith.constant 0 : index
    %26 = vector.load %arg6[%c2, %c0_19, %c0_20] : memref<9x1x256xf32, #tpu.memory_space<vmem>>, vector<1x1x256xf32>
    %27 = vector.shape_cast %26 : vector<1x1x256xf32> to vector<1x256xf32>
    %28 = vector.broadcast %27 : vector<1x256xf32> to vector<4x256xf32>
    %29 = arith.mulf %25, %28 : vector<4x256xf32>
    %30 = arith.truncf %29 : vector<4x256xf32> to vector<4x256xbf16>
    %c2_21 = arith.constant 2 : index
    %c0_22 = arith.constant 0 : index
    %c0_23 = arith.constant 0 : index
    %31 = vector.load %arg4[%c2_21, %c0_22, %c0_23] : memref<9x32x4xbf16, #tpu.memory_space<vmem>>, vector<1x32x4xbf16>
    %32 = vector.shape_cast %31 : vector<1x32x4xbf16> to vector<32x4xbf16>
    %cst_24 = arith.constant dense<0.000000e+00> : vector<32x256xf32>
    %33 = tpu.matmul %32, %30, %cst_24 {dimension_numbers = #tpu.dot_dimension_numbers<[1], [0], [0], [1], [0, 0, 1, 1], [], []>} : vector<32x4xbf16>, vector<4x256xbf16>, vector<32x256xf32> -> vector<32x256xf32>
    %34 = arith.addf %24, %33 : vector<32x256xf32>
    %c1_i32 = arith.constant 1 : i32
    %35 = tpu.dynamic_rotate %1 by %c1_i32 dim 1 : vector<4x256xf32>, i32 -> vector<4x256xf32>
    %c3 = arith.constant 3 : index
    %c0_25 = arith.constant 0 : index
    %c0_26 = arith.constant 0 : index
    %36 = vector.load %arg6[%c3, %c0_25, %c0_26] : memref<9x1x256xf32, #tpu.memory_space<vmem>>, vector<1x1x256xf32>
    %37 = vector.shape_cast %36 : vector<1x1x256xf32> to vector<1x256xf32>
    %38 = vector.broadcast %37 : vector<1x256xf32> to vector<4x256xf32>
    %39 = arith.mulf %35, %38 : vector<4x256xf32>
    %40 = arith.truncf %39 : vector<4x256xf32> to vector<4x256xbf16>
    %c3_27 = arith.constant 3 : index
    %c0_28 = arith.constant 0 : index
    %c0_29 = arith.constant 0 : index
    %41 = vector.load %arg4[%c3_27, %c0_28, %c0_29] : memref<9x32x4xbf16, #tpu.memory_space<vmem>>, vector<1x32x4xbf16>
    %42 = vector.shape_cast %41 : vector<1x32x4xbf16> to vector<32x4xbf16>
    %cst_30 = arith.constant dense<0.000000e+00> : vector<32x256xf32>
    %43 = tpu.matmul %42, %40, %cst_30 {dimension_numbers = #tpu.dot_dimension_numbers<[1], [0], [0], [1], [0, 0, 1, 1], [], []>} : vector<32x4xbf16>, vector<4x256xbf16>, vector<32x256xf32> -> vector<32x256xf32>
    %44 = arith.addf %34, %43 : vector<32x256xf32>
    %c4 = arith.constant 4 : index
    %c0_31 = arith.constant 0 : index
    %c0_32 = arith.constant 0 : index
    %45 = vector.load %arg6[%c4, %c0_31, %c0_32] : memref<9x1x256xf32, #tpu.memory_space<vmem>>, vector<1x1x256xf32>
    %46 = vector.shape_cast %45 : vector<1x1x256xf32> to vector<1x256xf32>
    %47 = vector.broadcast %46 : vector<1x256xf32> to vector<4x256xf32>
    %48 = arith.mulf %1, %47 : vector<4x256xf32>
    %49 = arith.truncf %48 : vector<4x256xf32> to vector<4x256xbf16>
    %c4_33 = arith.constant 4 : index
    %c0_34 = arith.constant 0 : index
    %c0_35 = arith.constant 0 : index
    %50 = vector.load %arg4[%c4_33, %c0_34, %c0_35] : memref<9x32x4xbf16, #tpu.memory_space<vmem>>, vector<1x32x4xbf16>
    %51 = vector.shape_cast %50 : vector<1x32x4xbf16> to vector<32x4xbf16>
    %cst_36 = arith.constant dense<0.000000e+00> : vector<32x256xf32>
    %52 = tpu.matmul %51, %49, %cst_36 {dimension_numbers = #tpu.dot_dimension_numbers<[1], [0], [0], [1], [0, 0, 1, 1], [], []>} : vector<32x4xbf16>, vector<4x256xbf16>, vector<32x256xf32> -> vector<32x256xf32>
    %53 = arith.addf %44, %52 : vector<32x256xf32>
    %c255_i32 = arith.constant 255 : i32
    %54 = tpu.dynamic_rotate %1 by %c255_i32 dim 1 : vector<4x256xf32>, i32 -> vector<4x256xf32>
    %c5 = arith.constant 5 : index
    %c0_37 = arith.constant 0 : index
    %c0_38 = arith.constant 0 : index
    %55 = vector.load %arg6[%c5, %c0_37, %c0_38] : memref<9x1x256xf32, #tpu.memory_space<vmem>>, vector<1x1x256xf32>
    %56 = vector.shape_cast %55 : vector<1x1x256xf32> to vector<1x256xf32>
    %57 = vector.broadcast %56 : vector<1x256xf32> to vector<4x256xf32>
    %58 = arith.mulf %54, %57 : vector<4x256xf32>
    %59 = arith.truncf %58 : vector<4x256xf32> to vector<4x256xbf16>
    %c5_39 = arith.constant 5 : index
    %c0_40 = arith.constant 0 : index
    %c0_41 = arith.constant 0 : index
    %60 = vector.load %arg4[%c5_39, %c0_40, %c0_41] : memref<9x32x4xbf16, #tpu.memory_space<vmem>>, vector<1x32x4xbf16>
    %61 = vector.shape_cast %60 : vector<1x32x4xbf16> to vector<32x4xbf16>
    %cst_42 = arith.constant dense<0.000000e+00> : vector<32x256xf32>
    %62 = tpu.matmul %61, %59, %cst_42 {dimension_numbers = #tpu.dot_dimension_numbers<[1], [0], [0], [1], [0, 0, 1, 1], [], []>} : vector<32x4xbf16>, vector<4x256xbf16>, vector<32x256xf32> -> vector<32x256xf32>
    %63 = arith.addf %53, %62 : vector<32x256xf32>
    %c241_i32 = arith.constant 241 : i32
    %64 = tpu.dynamic_rotate %1 by %c241_i32 dim 1 : vector<4x256xf32>, i32 -> vector<4x256xf32>
    %c6 = arith.constant 6 : index
    %c0_43 = arith.constant 0 : index
    %c0_44 = arith.constant 0 : index
    %65 = vector.load %arg6[%c6, %c0_43, %c0_44] : memref<9x1x256xf32, #tpu.memory_space<vmem>>, vector<1x1x256xf32>
    %66 = vector.shape_cast %65 : vector<1x1x256xf32> to vector<1x256xf32>
    %67 = vector.broadcast %66 : vector<1x256xf32> to vector<4x256xf32>
    %68 = arith.mulf %64, %67 : vector<4x256xf32>
    %69 = arith.truncf %68 : vector<4x256xf32> to vector<4x256xbf16>
    %c6_45 = arith.constant 6 : index
    %c0_46 = arith.constant 0 : index
    %c0_47 = arith.constant 0 : index
    %70 = vector.load %arg4[%c6_45, %c0_46, %c0_47] : memref<9x32x4xbf16, #tpu.memory_space<vmem>>, vector<1x32x4xbf16>
    %71 = vector.shape_cast %70 : vector<1x32x4xbf16> to vector<32x4xbf16>
    %cst_48 = arith.constant dense<0.000000e+00> : vector<32x256xf32>
    %72 = tpu.matmul %71, %69, %cst_48 {dimension_numbers = #tpu.dot_dimension_numbers<[1], [0], [0], [1], [0, 0, 1, 1], [], []>} : vector<32x4xbf16>, vector<4x256xbf16>, vector<32x256xf32> -> vector<32x256xf32>
    %73 = arith.addf %63, %72 : vector<32x256xf32>
    %c240_i32 = arith.constant 240 : i32
    %74 = tpu.dynamic_rotate %1 by %c240_i32 dim 1 : vector<4x256xf32>, i32 -> vector<4x256xf32>
    %c7 = arith.constant 7 : index
    %c0_49 = arith.constant 0 : index
    %c0_50 = arith.constant 0 : index
    %75 = vector.load %arg6[%c7, %c0_49, %c0_50] : memref<9x1x256xf32, #tpu.memory_space<vmem>>, vector<1x1x256xf32>
    %76 = vector.shape_cast %75 : vector<1x1x256xf32> to vector<1x256xf32>
    %77 = vector.broadcast %76 : vector<1x256xf32> to vector<4x256xf32>
    %78 = arith.mulf %74, %77 : vector<4x256xf32>
    %79 = arith.truncf %78 : vector<4x256xf32> to vector<4x256xbf16>
    %c7_51 = arith.constant 7 : index
    %c0_52 = arith.constant 0 : index
    %c0_53 = arith.constant 0 : index
    %80 = vector.load %arg4[%c7_51, %c0_52, %c0_53] : memref<9x32x4xbf16, #tpu.memory_space<vmem>>, vector<1x32x4xbf16>
    %81 = vector.shape_cast %80 : vector<1x32x4xbf16> to vector<32x4xbf16>
    %cst_54 = arith.constant dense<0.000000e+00> : vector<32x256xf32>
    %82 = tpu.matmul %81, %79, %cst_54 {dimension_numbers = #tpu.dot_dimension_numbers<[1], [0], [0], [1], [0, 0, 1, 1], [], []>} : vector<32x4xbf16>, vector<4x256xbf16>, vector<32x256xf32> -> vector<32x256xf32>
    %83 = arith.addf %73, %82 : vector<32x256xf32>
    %c239_i32 = arith.constant 239 : i32
    %84 = tpu.dynamic_rotate %1 by %c239_i32 dim 1 : vector<4x256xf32>, i32 -> vector<4x256xf32>
    %c8 = arith.constant 8 : index
    %c0_55 = arith.constant 0 : index
    %c0_56 = arith.constant 0 : index
    %85 = vector.load %arg6[%c8, %c0_55, %c0_56] : memref<9x1x256xf32, #tpu.memory_space<vmem>>, vector<1x1x256xf32>
    %86 = vector.shape_cast %85 : vector<1x1x256xf32> to vector<1x256xf32>
    %87 = vector.broadcast %86 : vector<1x256xf32> to vector<4x256xf32>
    %88 = arith.mulf %84, %87 : vector<4x256xf32>
    %89 = arith.truncf %88 : vector<4x256xf32> to vector<4x256xbf16>
    %c8_57 = arith.constant 8 : index
    %c0_58 = arith.constant 0 : index
    %c0_59 = arith.constant 0 : index
    %90 = vector.load %arg4[%c8_57, %c0_58, %c0_59] : memref<9x32x4xbf16, #tpu.memory_space<vmem>>, vector<1x32x4xbf16>
    %91 = vector.shape_cast %90 : vector<1x32x4xbf16> to vector<32x4xbf16>
    %cst_60 = arith.constant dense<0.000000e+00> : vector<32x256xf32>
    %92 = tpu.matmul %91, %89, %cst_60 {dimension_numbers = #tpu.dot_dimension_numbers<[1], [0], [0], [1], [0, 0, 1, 1], [], []>} : vector<32x4xbf16>, vector<4x256xbf16>, vector<32x256xf32> -> vector<32x256xf32>
    %93 = arith.addf %83, %92 : vector<32x256xf32>
    %94 = vector.extract_strided_slice %3 {offsets = [3, 0, 0], sizes = [1, 4, 256], strides = [1, 1, 1]} : vector<4x4x256xf32> to vector<1x4x256xf32>
    %95 = vector.shape_cast %94 : vector<1x4x256xf32> to vector<4x256xf32>
    %c17_i32_61 = arith.constant 17 : i32
    %96 = tpu.dynamic_rotate %95 by %c17_i32_61 dim 1 : vector<4x256xf32>, i32 -> vector<4x256xf32>
    %c0_62 = arith.constant 0 : index
    %c0_63 = arith.constant 0 : index
    %c0_64 = arith.constant 0 : index
    %97 = vector.load %arg7[%c0_62, %c0_63, %c0_64] : memref<9x1x256xf32, #tpu.memory_space<vmem>>, vector<1x1x256xf32>
    %98 = vector.shape_cast %97 : vector<1x1x256xf32> to vector<1x256xf32>
    %99 = vector.broadcast %98 : vector<1x256xf32> to vector<4x256xf32>
    %100 = arith.mulf %96, %99 : vector<4x256xf32>
    %101 = arith.truncf %100 : vector<4x256xf32> to vector<4x256xbf16>
    %c0_65 = arith.constant 0 : index
    %c0_66 = arith.constant 0 : index
    %c0_67 = arith.constant 0 : index
    %102 = vector.load %arg5[%c0_65, %c0_66, %c0_67] : memref<9x32x4xbf16, #tpu.memory_space<vmem>>, vector<1x32x4xbf16>
    %103 = vector.shape_cast %102 : vector<1x32x4xbf16> to vector<32x4xbf16>
    %cst_68 = arith.constant dense<0.000000e+00> : vector<32x256xf32>
    %104 = tpu.matmul %103, %101, %cst_68 {dimension_numbers = #tpu.dot_dimension_numbers<[1], [0], [0], [1], [0, 0, 1, 1], [], []>} : vector<32x4xbf16>, vector<4x256xbf16>, vector<32x256xf32> -> vector<32x256xf32>
    %105 = arith.addf %93, %104 : vector<32x256xf32>
    %106 = vector.extract_strided_slice %3 {offsets = [2, 0, 0], sizes = [1, 4, 256], strides = [1, 1, 1]} : vector<4x4x256xf32> to vector<1x4x256xf32>
    %107 = vector.shape_cast %106 : vector<1x4x256xf32> to vector<4x256xf32>
    %c16_i32_69 = arith.constant 16 : i32
    %108 = tpu.dynamic_rotate %107 by %c16_i32_69 dim 1 : vector<4x256xf32>, i32 -> vector<4x256xf32>
    %c1_70 = arith.constant 1 : index
    %c0_71 = arith.constant 0 : index
    %c0_72 = arith.constant 0 : index
    %109 = vector.load %arg7[%c1_70, %c0_71, %c0_72] : memref<9x1x256xf32, #tpu.memory_space<vmem>>, vector<1x1x256xf32>
    %110 = vector.shape_cast %109 : vector<1x1x256xf32> to vector<1x256xf32>
    %111 = vector.broadcast %110 : vector<1x256xf32> to vector<4x256xf32>
    %112 = arith.mulf %108, %111 : vector<4x256xf32>
    %113 = arith.truncf %112 : vector<4x256xf32> to vector<4x256xbf16>
    %c1_73 = arith.constant 1 : index
    %c0_74 = arith.constant 0 : index
    %c0_75 = arith.constant 0 : index
    %114 = vector.load %arg5[%c1_73, %c0_74, %c0_75] : memref<9x32x4xbf16, #tpu.memory_space<vmem>>, vector<1x32x4xbf16>
    %115 = vector.shape_cast %114 : vector<1x32x4xbf16> to vector<32x4xbf16>
    %cst_76 = arith.constant dense<0.000000e+00> : vector<32x256xf32>
    %116 = tpu.matmul %115, %113, %cst_76 {dimension_numbers = #tpu.dot_dimension_numbers<[1], [0], [0], [1], [0, 0, 1, 1], [], []>} : vector<32x4xbf16>, vector<4x256xbf16>, vector<32x256xf32> -> vector<32x256xf32>
    %117 = arith.addf %105, %116 : vector<32x256xf32>
    %118 = vector.extract_strided_slice %3 {offsets = [3, 0, 0], sizes = [1, 4, 256], strides = [1, 1, 1]} : vector<4x4x256xf32> to vector<1x4x256xf32>
    %119 = vector.shape_cast %118 : vector<1x4x256xf32> to vector<4x256xf32>
    %c16_i32_77 = arith.constant 16 : i32
    %120 = tpu.dynamic_rotate %119 by %c16_i32_77 dim 1 : vector<4x256xf32>, i32 -> vector<4x256xf32>
    %c2_78 = arith.constant 2 : index
    %c0_79 = arith.constant 0 : index
    %c0_80 = arith.constant 0 : index
    %121 = vector.load %arg7[%c2_78, %c0_79, %c0_80] : memref<9x1x256xf32, #tpu.memory_space<vmem>>, vector<1x1x256xf32>
    %122 = vector.shape_cast %121 : vector<1x1x256xf32> to vector<1x256xf32>
    %123 = vector.broadcast %122 : vector<1x256xf32> to vector<4x256xf32>
    %124 = arith.mulf %120, %123 : vector<4x256xf32>
    %125 = arith.truncf %124 : vector<4x256xf32> to vector<4x256xbf16>
    %c2_81 = arith.constant 2 : index
    %c0_82 = arith.constant 0 : index
    %c0_83 = arith.constant 0 : index
    %126 = vector.load %arg5[%c2_81, %c0_82, %c0_83] : memref<9x32x4xbf16, #tpu.memory_space<vmem>>, vector<1x32x4xbf16>
    %127 = vector.shape_cast %126 : vector<1x32x4xbf16> to vector<32x4xbf16>
    %cst_84 = arith.constant dense<0.000000e+00> : vector<32x256xf32>
    %128 = tpu.matmul %127, %125, %cst_84 {dimension_numbers = #tpu.dot_dimension_numbers<[1], [0], [0], [1], [0, 0, 1, 1], [], []>} : vector<32x4xbf16>, vector<4x256xbf16>, vector<32x256xf32> -> vector<32x256xf32>
    %129 = arith.addf %117, %128 : vector<32x256xf32>
    %130 = vector.extract_strided_slice %3 {offsets = [1, 0, 0], sizes = [1, 4, 256], strides = [1, 1, 1]} : vector<4x4x256xf32> to vector<1x4x256xf32>
    %131 = vector.shape_cast %130 : vector<1x4x256xf32> to vector<4x256xf32>
    %c1_i32_85 = arith.constant 1 : i32
    %132 = tpu.dynamic_rotate %131 by %c1_i32_85 dim 1 : vector<4x256xf32>, i32 -> vector<4x256xf32>
    %c3_86 = arith.constant 3 : index
    %c0_87 = arith.constant 0 : index
    %c0_88 = arith.constant 0 : index
    %133 = vector.load %arg7[%c3_86, %c0_87, %c0_88] : memref<9x1x256xf32, #tpu.memory_space<vmem>>, vector<1x1x256xf32>
    %134 = vector.shape_cast %133 : vector<1x1x256xf32> to vector<1x256xf32>
    %135 = vector.broadcast %134 : vector<1x256xf32> to vector<4x256xf32>
    %136 = arith.mulf %132, %135 : vector<4x256xf32>
    %137 = arith.truncf %136 : vector<4x256xf32> to vector<4x256xbf16>
    %c3_89 = arith.constant 3 : index
    %c0_90 = arith.constant 0 : index
    %c0_91 = arith.constant 0 : index
    %138 = vector.load %arg5[%c3_89, %c0_90, %c0_91] : memref<9x32x4xbf16, #tpu.memory_space<vmem>>, vector<1x32x4xbf16>
    %139 = vector.shape_cast %138 : vector<1x32x4xbf16> to vector<32x4xbf16>
    %cst_92 = arith.constant dense<0.000000e+00> : vector<32x256xf32>
    %140 = tpu.matmul %139, %137, %cst_92 {dimension_numbers = #tpu.dot_dimension_numbers<[1], [0], [0], [1], [0, 0, 1, 1], [], []>} : vector<32x4xbf16>, vector<4x256xbf16>, vector<32x256xf32> -> vector<32x256xf32>
    %141 = arith.addf %129, %140 : vector<32x256xf32>
    %142 = vector.extract_strided_slice %3 {offsets = [0, 0, 0], sizes = [1, 4, 256], strides = [1, 1, 1]} : vector<4x4x256xf32> to vector<1x4x256xf32>
    %143 = vector.shape_cast %142 : vector<1x4x256xf32> to vector<4x256xf32>
    %c4_93 = arith.constant 4 : index
    %c0_94 = arith.constant 0 : index
    %c0_95 = arith.constant 0 : index
    %144 = vector.load %arg7[%c4_93, %c0_94, %c0_95] : memref<9x1x256xf32, #tpu.memory_space<vmem>>, vector<1x1x256xf32>
    %145 = vector.shape_cast %144 : vector<1x1x256xf32> to vector<1x256xf32>
    %146 = vector.broadcast %145 : vector<1x256xf32> to vector<4x256xf32>
    %147 = arith.mulf %143, %146 : vector<4x256xf32>
    %148 = arith.truncf %147 : vector<4x256xf32> to vector<4x256xbf16>
    %c4_96 = arith.constant 4 : index
    %c0_97 = arith.constant 0 : index
    %c0_98 = arith.constant 0 : index
    %149 = vector.load %arg5[%c4_96, %c0_97, %c0_98] : memref<9x32x4xbf16, #tpu.memory_space<vmem>>, vector<1x32x4xbf16>
    %150 = vector.shape_cast %149 : vector<1x32x4xbf16> to vector<32x4xbf16>
    %cst_99 = arith.constant dense<0.000000e+00> : vector<32x256xf32>
    %151 = tpu.matmul %150, %148, %cst_99 {dimension_numbers = #tpu.dot_dimension_numbers<[1], [0], [0], [1], [0, 0, 1, 1], [], []>} : vector<32x4xbf16>, vector<4x256xbf16>, vector<32x256xf32> -> vector<32x256xf32>
    %152 = arith.addf %141, %151 : vector<32x256xf32>
    %153 = vector.extract_strided_slice %3 {offsets = [1, 0, 0], sizes = [1, 4, 256], strides = [1, 1, 1]} : vector<4x4x256xf32> to vector<1x4x256xf32>
    %154 = vector.shape_cast %153 : vector<1x4x256xf32> to vector<4x256xf32>
    %c5_100 = arith.constant 5 : index
    %c0_101 = arith.constant 0 : index
    %c0_102 = arith.constant 0 : index
    %155 = vector.load %arg7[%c5_100, %c0_101, %c0_102] : memref<9x1x256xf32, #tpu.memory_space<vmem>>, vector<1x1x256xf32>
    %156 = vector.shape_cast %155 : vector<1x1x256xf32> to vector<1x256xf32>
    %157 = vector.broadcast %156 : vector<1x256xf32> to vector<4x256xf32>
    %158 = arith.mulf %154, %157 : vector<4x256xf32>
    %159 = arith.truncf %158 : vector<4x256xf32> to vector<4x256xbf16>
    %c5_103 = arith.constant 5 : index
    %c0_104 = arith.constant 0 : index
    %c0_105 = arith.constant 0 : index
    %160 = vector.load %arg5[%c5_103, %c0_104, %c0_105] : memref<9x32x4xbf16, #tpu.memory_space<vmem>>, vector<1x32x4xbf16>
    %161 = vector.shape_cast %160 : vector<1x32x4xbf16> to vector<32x4xbf16>
    %cst_106 = arith.constant dense<0.000000e+00> : vector<32x256xf32>
    %162 = tpu.matmul %161, %159, %cst_106 {dimension_numbers = #tpu.dot_dimension_numbers<[1], [0], [0], [1], [0, 0, 1, 1], [], []>} : vector<32x4xbf16>, vector<4x256xbf16>, vector<32x256xf32> -> vector<32x256xf32>
    %163 = arith.addf %152, %162 : vector<32x256xf32>
    %164 = vector.extract_strided_slice %3 {offsets = [3, 0, 0], sizes = [1, 4, 256], strides = [1, 1, 1]} : vector<4x4x256xf32> to vector<1x4x256xf32>
    %165 = vector.shape_cast %164 : vector<1x4x256xf32> to vector<4x256xf32>
    %c1_i32_107 = arith.constant 1 : i32
    %166 = tpu.dynamic_rotate %165 by %c1_i32_107 dim 1 : vector<4x256xf32>, i32 -> vector<4x256xf32>
    %c6_108 = arith.constant 6 : index
    %c0_109 = arith.constant 0 : index
    %c0_110 = arith.constant 0 : index
    %167 = vector.load %arg7[%c6_108, %c0_109, %c0_110] : memref<9x1x256xf32, #tpu.memory_space<vmem>>, vector<1x1x256xf32>
    %168 = vector.shape_cast %167 : vector<1x1x256xf32> to vector<1x256xf32>
    %169 = vector.broadcast %168 : vector<1x256xf32> to vector<4x256xf32>
    %170 = arith.mulf %166, %169 : vector<4x256xf32>
    %171 = arith.truncf %170 : vector<4x256xf32> to vector<4x256xbf16>
    %c6_111 = arith.constant 6 : index
    %c0_112 = arith.constant 0 : index
    %c0_113 = arith.constant 0 : index
    %172 = vector.load %arg5[%c6_111, %c0_112, %c0_113] : memref<9x32x4xbf16, #tpu.memory_space<vmem>>, vector<1x32x4xbf16>
    %173 = vector.shape_cast %172 : vector<1x32x4xbf16> to vector<32x4xbf16>
    %cst_114 = arith.constant dense<0.000000e+00> : vector<32x256xf32>
    %174 = tpu.matmul %173, %171, %cst_114 {dimension_numbers = #tpu.dot_dimension_numbers<[1], [0], [0], [1], [0, 0, 1, 1], [], []>} : vector<32x4xbf16>, vector<4x256xbf16>, vector<32x256xf32> -> vector<32x256xf32>
    %175 = arith.addf %163, %174 : vector<32x256xf32>
    %176 = vector.extract_strided_slice %3 {offsets = [2, 0, 0], sizes = [1, 4, 256], strides = [1, 1, 1]} : vector<4x4x256xf32> to vector<1x4x256xf32>
    %177 = vector.shape_cast %176 : vector<1x4x256xf32> to vector<4x256xf32>
    %c7_115 = arith.constant 7 : index
    %c0_116 = arith.constant 0 : index
    %c0_117 = arith.constant 0 : index
    %178 = vector.load %arg7[%c7_115, %c0_116, %c0_117] : memref<9x1x256xf32, #tpu.memory_space<vmem>>, vector<1x1x256xf32>
    %179 = vector.shape_cast %178 : vector<1x1x256xf32> to vector<1x256xf32>
    %180 = vector.broadcast %179 : vector<1x256xf32> to vector<4x256xf32>
    %181 = arith.mulf %177, %180 : vector<4x256xf32>
    %182 = arith.truncf %181 : vector<4x256xf32> to vector<4x256xbf16>
    %c7_118 = arith.constant 7 : index
    %c0_119 = arith.constant 0 : index
    %c0_120 = arith.constant 0 : index
    %183 = vector.load %arg5[%c7_118, %c0_119, %c0_120] : memref<9x32x4xbf16, #tpu.memory_space<vmem>>, vector<1x32x4xbf16>
    %184 = vector.shape_cast %183 : vector<1x32x4xbf16> to vector<32x4xbf16>
    %cst_121 = arith.constant dense<0.000000e+00> : vector<32x256xf32>
    %185 = tpu.matmul %184, %182, %cst_121 {dimension_numbers = #tpu.dot_dimension_numbers<[1], [0], [0], [1], [0, 0, 1, 1], [], []>} : vector<32x4xbf16>, vector<4x256xbf16>, vector<32x256xf32> -> vector<32x256xf32>
    %186 = arith.addf %175, %185 : vector<32x256xf32>
    %187 = vector.extract_strided_slice %3 {offsets = [3, 0, 0], sizes = [1, 4, 256], strides = [1, 1, 1]} : vector<4x4x256xf32> to vector<1x4x256xf32>
    %188 = vector.shape_cast %187 : vector<1x4x256xf32> to vector<4x256xf32>
    %c8_122 = arith.constant 8 : index
    %c0_123 = arith.constant 0 : index
    %c0_124 = arith.constant 0 : index
    %189 = vector.load %arg7[%c8_122, %c0_123, %c0_124] : memref<9x1x256xf32, #tpu.memory_space<vmem>>, vector<1x1x256xf32>
    %190 = vector.shape_cast %189 : vector<1x1x256xf32> to vector<1x256xf32>
    %191 = vector.broadcast %190 : vector<1x256xf32> to vector<4x256xf32>
    %192 = arith.mulf %188, %191 : vector<4x256xf32>
    %193 = arith.truncf %192 : vector<4x256xf32> to vector<4x256xbf16>
    %c8_125 = arith.constant 8 : index
    %c0_126 = arith.constant 0 : index
    %c0_127 = arith.constant 0 : index
    %194 = vector.load %arg5[%c8_125, %c0_126, %c0_127] : memref<9x32x4xbf16, #tpu.memory_space<vmem>>, vector<1x32x4xbf16>
    %195 = vector.shape_cast %194 : vector<1x32x4xbf16> to vector<32x4xbf16>
    %cst_128 = arith.constant dense<0.000000e+00> : vector<32x256xf32>
    %196 = tpu.matmul %195, %193, %cst_128 {dimension_numbers = #tpu.dot_dimension_numbers<[1], [0], [0], [1], [0, 0, 1, 1], [], []>} : vector<32x4xbf16>, vector<4x256xbf16>, vector<32x256xf32> -> vector<32x256xf32>
    %197 = arith.addf %186, %196 : vector<32x256xf32>
    %c0_129 = arith.constant 0 : index
    %c0_130 = arith.constant 0 : index
    %198 = vector.load %arg8[%c0_129, %c0_130] : memref<32x1xf32, #tpu.memory_space<vmem>>, vector<32x1xf32>
    %199 = vector.broadcast %198 : vector<32x1xf32> to vector<32x256xf32>
    %200 = arith.addf %197, %199 : vector<32x256xf32>
    %c0_131 = arith.constant 0 : index
    %201 = memref.load %arg11[%c0_131] : memref<2xf32, #tpu.memory_space<smem>>
    %cst_132 = arith.constant 0.000000e+00 : f32
    %202 = vector.broadcast %cst_132 : f32 to vector<32x256xf32>
    %203 = arith.cmpf oge, %200, %202 : vector<32x256xf32>
    %204 = vector.broadcast %201 : f32 to vector<32x256xf32>
    %205 = arith.mulf %204, %200 : vector<32x256xf32>
    %206 = arith.select %203, %200, %205 : vector<32x256xi1>, vector<32x256xf32>
    %c0_133 = arith.constant 0 : index
    %c0_134 = arith.constant 0 : index
    %207 = vector.load %arg9[%c0_133, %c0_134] : memref<1x32xf32, #tpu.memory_space<vmem>>, vector<1x32xf32>
    %cst_135 = arith.constant dense<0.000000e+00> : vector<1x256xf32>
    %208 = tpu.matmul %207, %206, %cst_135 {dimension_numbers = #tpu.dot_dimension_numbers<[1], [0], [0], [1], [0, 0, 1, 1], [], []>} : vector<1x32xf32>, vector<32x256xf32>, vector<1x256xf32> -> vector<1x256xf32>
    %c1_136 = arith.constant 1 : index
    %209 = memref.load %arg11[%c1_136] : memref<2xf32, #tpu.memory_space<smem>>
    %210 = vector.broadcast %209 : f32 to vector<1x256xf32>
    %211 = arith.addf %208, %210 : vector<1x256xf32>
    %cst_137 = arith.constant 0.000000e+00 : f32
    %212 = vector.broadcast %cst_137 : f32 to vector<1x256xf32>
    %213 = arith.subf %212, %211 : vector<1x256xf32>
    %214 = math.exp %213 : vector<1x256xf32>
    %cst_138 = arith.constant 1.000000e+00 : f32
    %215 = vector.broadcast %cst_138 : f32 to vector<1x256xf32>
    %216 = arith.addf %215, %214 : vector<1x256xf32>
    %cst_139 = arith.constant 1.000000e+00 : f32
    %217 = vector.broadcast %cst_139 : f32 to vector<1x256xf32>
    %218 = arith.divf %217, %216 : vector<1x256xf32>
    %c0_140 = arith.constant 0 : index
    %c0_141 = arith.constant 0 : index
    %219 = vector.load %arg10[%c0_140, %c0_141] : memref<256x1024xf32, #tpu.memory_space<vmem>>, vector<256x1024xf32>
    %cst_142 = arith.constant dense<0.000000e+00> : vector<1x1024xf32>
    %220 = tpu.matmul %218, %219, %cst_142 {dimension_numbers = #tpu.dot_dimension_numbers<[1], [0], [0], [1], [0, 0, 1, 1], [], []>} : vector<1x256xf32>, vector<256x1024xf32>, vector<1x1024xf32> -> vector<1x1024xf32>
    %c0_143 = arith.constant 0 : index
    %c0_144 = arith.constant 0 : index
    %c0_145 = arith.constant 0 : index
    %221 = vector.load %arg3[%c0_143, %c0_144, %c0_145] : memref<1x4x1024xf32, #tpu.memory_space<vmem>>, vector<1x4x1024xf32>
    %222 = vector.shape_cast %221 : vector<1x4x1024xf32> to vector<4x1024xf32>
    %223 = vector.broadcast %220 : vector<1x1024xf32> to vector<4x1024xf32>
    %224 = arith.mulf %222, %223 : vector<4x1024xf32>
    %c0_146 = arith.constant 0 : index
    %c0_147 = arith.constant 0 : index
    %c0_148 = arith.constant 0 : index
    %225 = vector.load %arg12[%c0_146, %c0_147, %c0_148] : memref<1x4x1024xf32, #tpu.memory_space<vmem>>, vector<1x4x1024xf32>
    %226 = vector.shape_cast %225 : vector<1x4x1024xf32> to vector<4x1024xf32>
    %227 = vector.shape_cast %224 : vector<4x1024xf32> to vector<1x4x1024xf32>
    tpu.vector_store %arg12[%c0_146, %c0_147, %c0_148], %227 {strides = array<i32>} : memref<1x4x1024xf32, #tpu.memory_space<vmem>>, vector<1x4x1024xf32>,
    return
  }
  func.func @transform_0(%arg0: i32) -> (i32, i32, i32) {
    %c0_i32 = arith.constant 0 : i32
    %c0_i32_0 = arith.constant 0 : i32
    %c0_i32_1 = arith.constant 0 : i32
    return %arg0, %c0_i32, %c0_i32_0 : i32, i32, i32
  }
  func.func @transform_1(%arg0: i32) -> (i32, i32, i32, i32) {
    %c0_i32 = arith.constant 0 : i32
    %c0_i32_0 = arith.constant 0 : i32
    %c0_i32_1 = arith.constant 0 : i32
    %c0_i32_2 = arith.constant 0 : i32
    return %arg0, %c0_i32, %c0_i32_0, %c0_i32_1 : i32, i32, i32, i32
  }
  func.func @transform_2(%arg0: i32) -> (i32, i32, i32) {
    %c0_i32 = arith.constant 0 : i32
    %c0_i32_0 = arith.constant 0 : i32
    %c0_i32_1 = arith.constant 0 : i32
    return %arg0, %c0_i32, %c0_i32_0 : i32, i32, i32
  }
  func.func @transform_3(%arg0: i32) -> (i32, i32, i32) {
    %c0_i32 = arith.constant 0 : i32
    %c0_i32_0 = arith.constant 0 : i32
    %c0_i32_1 = arith.constant 0 : i32
    %c0_i32_2 = arith.constant 0 : i32
    return %c0_i32, %c0_i32_0, %c0_i32_1 : i32, i32, i32
  }
  func.func @transform_4(%arg0: i32) -> (i32, i32, i32) {
    %c0_i32 = arith.constant 0 : i32
    %c0_i32_0 = arith.constant 0 : i32
    %c0_i32_1 = arith.constant 0 : i32
    %c0_i32_2 = arith.constant 0 : i32
    return %c0_i32, %c0_i32_0, %c0_i32_1 : i32, i32, i32
  }
  func.func @transform_5(%arg0: i32) -> (i32, i32, i32) {
    %c0_i32 = arith.constant 0 : i32
    %c0_i32_0 = arith.constant 0 : i32
    %c0_i32_1 = arith.constant 0 : i32
    %c0_i32_2 = arith.constant 0 : i32
    return %c0_i32, %c0_i32_0, %c0_i32_1 : i32, i32, i32
  }
  func.func @transform_6(%arg0: i32) -> (i32, i32, i32) {
    %c0_i32 = arith.constant 0 : i32
    %c0_i32_0 = arith.constant 0 : i32
    %c0_i32_1 = arith.constant 0 : i32
    %c0_i32_2 = arith.constant 0 : i32
    return %c0_i32, %c0_i32_0, %c0_i32_1 : i32, i32, i32
  }
  func.func @transform_7(%arg0: i32) -> (i32, i32) {
    %c0_i32 = arith.constant 0 : i32
    %c0_i32_0 = arith.constant 0 : i32
    %c0_i32_1 = arith.constant 0 : i32
    return %c0_i32, %c0_i32_0 : i32, i32
  }
  func.func @transform_8(%arg0: i32) -> (i32, i32) {
    %c0_i32 = arith.constant 0 : i32
    %c0_i32_0 = arith.constant 0 : i32
    %c0_i32_1 = arith.constant 0 : i32
    return %c0_i32, %c0_i32_0 : i32, i32
  }
  func.func @transform_9(%arg0: i32) -> (i32, i32) {
    %c0_i32 = arith.constant 0 : i32
    %c0_i32_0 = arith.constant 0 : i32
    %c0_i32_1 = arith.constant 0 : i32
    return %c0_i32, %c0_i32_0 : i32, i32
  }
  func.func @transform_10(%arg0: i32) -> i32 {
    %c0_i32 = arith.constant 0 : i32
    %c0_i32_0 = arith.constant 0 : i32
    return %c0_i32 : i32
  }
  func.func @transform_11(%arg0: i32) -> (i32, i32, i32) {
    %c0_i32 = arith.constant 0 : i32
    %c0_i32_0 = arith.constant 0 : i32
    %c0_i32_1 = arith.constant 0 : i32
    return %arg0, %c0_i32, %c0_i32_0 : i32, i32, i32
  }
}

</mosaic_0001>

<llo_original>
// kernel: attention_gate.1
$region0: #{attention_gate.1}
  #allocation0 [shape = 'u32[]', space=smem, size = 0x4, offset = 0x4, fixed_abs, tag = 'smem constant byte address 0x4 - core index']
  #allocation1 [shape = 'u32[144,128]{1,0:T(1,128)}', space=vmem, size = 0x12000, scoped, tag = 'internal scratch']
  %s0 = inlined_call_operand.vmem [shape: f32[2,4,256], index: 0, kind: input, shape index: {}]
  %s1 = inlined_call_operand.vmem [shape: f32[2,4,4,256], index: 1, kind: input, shape index: {}]
  %s2 = inlined_call_operand.vmem [shape: f32[2,4,1024], index: 2, kind: input, shape index: {}]
  %s3 = inlined_call_operand.vmem [shape: bf16[9,32,4], index: 3, kind: input, shape index: {}]
  %s4 = inlined_call_operand.vmem [shape: bf16[9,32,4], index: 4, kind: input, shape index: {}]
  %s5 = inlined_call_operand.vmem [shape: f32[9,1,256], index: 5, kind: input, shape index: {}]
  %s6 = inlined_call_operand.vmem [shape: f32[9,1,256], index: 6, kind: input, shape index: {}]
  %s7 = inlined_call_operand.vmem [shape: f32[32,1], index: 7, kind: input, shape index: {}]
  %s8 = inlined_call_operand.vmem [shape: f32[1,32], index: 8, kind: input, shape index: {}]
  %s9 = inlined_call_operand.vmem [shape: f32[256,1024], index: 9, kind: input, shape index: {}]
  %s10 = inlined_call_operand.vmem [shape: f32[2], index: 10, kind: input, shape index: {}]
  %s11 = inlined_call_operand.vmem [shape: f32[2,4,1024], index: 11, kind: output, shape index: {}]
  %s12 = sld [smem:[#allocation0]]
  $region81: #{attention_gate.1} parent=0
    _
  %s14 = ssub.s32 1, %s12
  %s15 = scalar_select 0, %s14, %s12
  $region1: #{attention_gate.1} parent=0
    #allocation2 [shape = 'u8[512]{0}', space=smem, size = 0x200, scoped, tag = 'input window, operand 10, single buffered']
    #allocation3 [shape = 's32[2]{0}', space=sflag, size = 0x8, scoped, tag = 'scoped memory for attention_gate.1']
    %16 = vsyncpa [#allocation3], 0
    loop: start=0, step=1, limit=4
    $region2: #{attention_gate.1} parent=1 // loop_pre_header
      _
    $region3: #{attention_gate.1} parent=1 // loop_header
      %s18 = sphi 0, %s22
      %p19 = scmp.ge.s32.totalorder %s18, 4
      %s28 = sphi 0, %s30
      %s31 = sphi 0, %s28
      %s32 = sphi 0, %s31
      %s48 = sphi 0, %s32
      %s54 = sphi 0, %s56
      %s57 = sphi 0, %s54
      %s58 = sphi 0, %s57
      %s74 = sphi 0, %s58
      %s80 = sphi 0, %s82
      %s83 = sphi 0, %s80
      %s84 = sphi 0, %s83
      %s100 = sphi 0, %s84
      %s104 = sphi 0, %s104
      %s106 = sphi 0, %s104
      %s107 = sphi 0, %s106
      %s121 = sphi 0, %s107
      %s125 = sphi 0, %s125
      %s127 = sphi 0, %s125
      %s128 = sphi 0, %s127
      %s142 = sphi 0, %s128
      %s146 = sphi 0, %s146
      %s148 = sphi 0, %s146
      %s149 = sphi 0, %s148
      %s163 = sphi 0, %s149
      %s167 = sphi 0, %s167
      %s169 = sphi 0, %s167
      %s170 = sphi 0, %s169
      %s184 = sphi 0, %s170
      %s188 = sphi 0, %s188
      %s190 = sphi 0, %s188
      %s191 = sphi 0, %s190
      %s205 = sphi 0, %s191
      %s209 = sphi 0, %s209
      %s211 = sphi 0, %s209
      %s212 = sphi 0, %s211
      %s226 = sphi 0, %s212
      %s230 = sphi 0, %s230
      %s232 = sphi 0, %s230
      %s233 = sphi 0, %s232
      %s247 = sphi 0, %s233
      %s251 = sphi 0, %s251
      %s253 = sphi 0, %s251
      %s254 = sphi 0, %s253
      %s268 = sphi 0, %s254
      %s274 = sphi 0, %s276
      %s277 = sphi 0, %s274
      %s278 = sphi 0, %s277
      %s294 = sphi 0, %s278
    $region4: #{attention_gate.1} parent=1 // loop_header_branch
      %21 = sbr.rel (%p19) target = $region8
    $region5: #{attention_gate.1} parent=1 // loop_body
      %s23 = ssub.s32 %s18, 1
      %s24 = ssub.s32 %s18, 2
      %s25 = sadd.s32 %s18, 1
      %s26 = ssub.s32 %s18, %s25
      %p27 = scmp.eq.s32.totalorder %s26, 0
      %s29 = sadd.s32 %s28, 1
      %s30 = scalar_select %p27, %s28, %s29
      %p33 = pneg %p27
      %p34 = scmp.eq.s32.totalorder %s18, 1
      %p35 = por %p33, %p34
      %p36 = scmp.ne.s32.totalorder %s28, %s31
      %p37 = scmp.eq.s32.totalorder %s18, 0
      %p38 = por %p36, %p37
      %p39 = scmp.ne.s32.totalorder %s28, %s31
      %p40 = scmp.eq.s32.totalorder %s23, 1
      %p41 = por %p39, %p40
      %p42 = scmp.ne.s32.totalorder %s31, %s32
      %p43 = scmp.eq.s32.totalorder %s23, 0
      %p44 = por %p42, %p43
      %p45 = scmp.ne.s32.totalorder %s31, %s32
      %p46 = scmp.eq.s32.totalorder %s24, 1
      %p47 = por %p45, %p46
      %p49 = scmp.ne.s32.totalorder %s32, %s48
      %p50 = scmp.eq.s32.totalorder %s24, 0
      %p51 = por %p49, %p50
      %s52 = ssub.s32 %s18, %s25
      %p53 = scmp.eq.s32.totalorder %s52, 0
      %s55 = sadd.s32 %s54, 1
      %s56 = scalar_select %p53, %s54, %s55
      %p59 = pneg %p53
      %p60 = scmp.eq.s32.totalorder %s18, 1
      %p61 = por %p59, %p60
      %p62 = scmp.ne.s32.totalorder %s54, %s57
      %p63 = scmp.eq.s32.totalorder %s18, 0
      %p64 = por %p62, %p63
      %p65 = scmp.ne.s32.totalorder %s54, %s57
      %p66 = scmp.eq.s32.totalorder %s23, 1
      %p67 = por %p65, %p66
      %p68 = scmp.ne.s32.totalorder %s57, %s58
      %p69 = scmp.eq.s32.totalorder %s23, 0
      %p70 = por %p68, %p69
      %p71 = scmp.ne.s32.totalorder %s57, %s58
      %p72 = scmp.eq.s32.totalorder %s24, 1
      %p73 = por %p71, %p72
      %p75 = scmp.ne.s32.totalorder %s58, %s74
      %p76 = scmp.eq.s32.totalorder %s24, 0
      %p77 = por %p75, %p76
      %s78 = ssub.s32 %s18, %s25
      %p79 = scmp.eq.s32.totalorder %s78, 0
      %s81 = sadd.s32 %s80, 1
      %s82 = scalar_select %p79, %s80, %s81
      %p85 = pneg %p79
      %p86 = scmp.eq.s32.totalorder %s18, 1
      %p87 = por %p85, %p86
      %p88 = scmp.ne.s32.totalorder %s80, %s83
      %p89 = scmp.eq.s32.totalorder %s18, 0
      %p90 = por %p88, %p89
      %p91 = scmp.ne.s32.totalorder %s80, %s83
      %p92 = scmp.eq.s32.totalorder %s23, 1
      %p93 = por %p91, %p92
      %p94 = scmp.ne.s32.totalorder %s83, %s84
      %p95 = scmp.eq.s32.totalorder %s23, 0
      %p96 = por %p94, %p95
      %p97 = scmp.ne.s32.totalorder %s83, %s84
      %p98 = scmp.eq.s32.totalorder %s24, 1
      %p99 = por %p97, %p98
      %p101 = scmp.ne.s32.totalorder %s84, %s100
      %p102 = scmp.eq.s32.totalorder %s24, 0
      %p103 = por %p101, %p102
      %s105 = sadd.s32 %s104, 1
      %p108 = scmp.eq.s32.totalorder %s18, 1
      %p109 = scmp.ne.s32.totalorder %s104, %s106
      %p110 = scmp.eq.s32.totalorder %s18, 0
      %p111 = por %p109, %p110
      %p112 = scmp.ne.s32.totalorder %s104, %s106
      %p113 = scmp.eq.s32.totalorder %s23, 1
      %p114 = por %p112, %p113
      %p115 = scmp.ne.s32.totalorder %s106, %s107
      %p116 = scmp.eq.s32.totalorder %s23, 0
      %p117 = por %p115, %p116
      %p118 = scmp.ne.s32.totalorder %s106, %s107
      %p119 = scmp.eq.s32.totalorder %s24, 1
      %p120 = por %p118, %p119
      %p122 = scmp.ne.s32.totalorder %s107, %s121
      %p123 = scmp.eq.s32.totalorder %s24, 0
      %p124 = por %p122, %p123
      %s126 = sadd.s32 %s125, 1
      %p129 = scmp.eq.s32.totalorder %s18, 1
      %p130 = scmp.ne.s32.totalorder %s125, %s127
      %p131 = scmp.eq.s32.totalorder %s18, 0
      %p132 = por %p130, %p131
      %p133 = scmp.ne.s32.totalorder %s125, %s127
      %p134 = scmp.eq.s32.totalorder %s23, 1
      %p135 = por %p133, %p134
      %p136 = scmp.ne.s32.totalorder %s127, %s128
      %p137 = scmp.eq.s32.totalorder %s23, 0
      %p138 = por %p136, %p137
      %p139 = scmp.ne.s32.totalorder %s127, %s128
      %p140 = scmp.eq.s32.totalorder %s24, 1
      %p141 = por %p139, %p140
      %p143 = scmp.ne.s32.totalorder %s128, %s142
      %p144 = scmp.eq.s32.totalorder %s24, 0
      %p145 = por %p143, %p144
      %s147 = sadd.s32 %s146, 1
      %p150 = scmp.eq.s32.totalorder %s18, 1
      %p151 = scmp.ne.s32.totalorder %s146, %s148
      %p152 = scmp.eq.s32.totalorder %s18, 0
      %p153 = por %p151, %p152
      %p154 = scmp.ne.s32.totalorder %s146, %s148
      %p155 = scmp.eq.s32.totalorder %s23, 1
      %p156 = por %p154, %p155
      %p157 = scmp.ne.s32.totalorder %s148, %s149
      %p158 = scmp.eq.s32.totalorder %s23, 0
      %p159 = por %p157, %p158
      %p160 = scmp.ne.s32.totalorder %s148, %s149
      %p161 = scmp.eq.s32.totalorder %s24, 1
      %p162 = por %p160, %p161
      %p164 = scmp.ne.s32.totalorder %s149, %s163
      %p165 = scmp.eq.s32.totalorder %s24, 0
      %p166 = por %p164, %p165
      %s168 = sadd.s32 %s167, 1
      %p171 = scmp.eq.s32.totalorder %s18, 1
      %p172 = scmp.ne.s32.totalorder %s167, %s169
      %p173 = scmp.eq.s32.totalorder %s18, 0
      %p174 = por %p172, %p173
      %p175 = scmp.ne.s32.totalorder %s167, %s169
      %p176 = scmp.eq.s32.totalorder %s23, 1
      %p177 = por %p175, %p176
      %p178 = scmp.ne.s32.totalorder %s169, %s170
      %p179 = scmp.eq.s32.totalorder %s23, 0
      %p180 = por %p178, %p179
      %p181 = scmp.ne.s32.totalorder %s169, %s170
      %p182 = scmp.eq.s32.totalorder %s24, 1
      %p183 = por %p181, %p182
      %p185 = scmp.ne.s32.totalorder %s170, %s184
      %p186 = scmp.eq.s32.totalorder %s24, 0
      %p187 = por %p185, %p186
      %s189 = sadd.s32 %s188, 1
      %p192 = scmp.eq.s32.totalorder %s18, 1
      %p193 = scmp.ne.s32.totalorder %s188, %s190
      %p194 = scmp.eq.s32.totalorder %s18, 0
      %p195 = por %p193, %p194
      %p196 = scmp.ne.s32.totalorder %s188, %s190
      %p197 = scmp.eq.s32.totalorder %s23, 1
      %p198 = por %p196, %p197
      %p199 = scmp.ne.s32.totalorder %s190, %s191
      %p200 = scmp.eq.s32.totalorder %s23, 0
      %p201 = por %p199, %p200
      %p202 = scmp.ne.s32.totalorder %s190, %s191
      %p203 = scmp.eq.s32.totalorder %s24, 1
      %p204 = por %p202, %p203
      %p206 = scmp.ne.s32.totalorder %s191, %s205
      %p207 = scmp.eq.s32.totalorder %s24, 0
      %p208 = por %p206, %p207
      %s210 = sadd.s32 %s209, 1
      %p213 = scmp.eq.s32.totalorder %s18, 1
      %p214 = scmp.ne.s32.totalorder %s209, %s211
      %p215 = scmp.eq.s32.totalorder %s18, 0
      %p216 = por %p214, %p215
      %p217 = scmp.ne.s32.totalorder %s209, %s211
      %p218 = scmp.eq.s32.totalorder %s23, 1
      %p219 = por %p217, %p218
      %p220 = scmp.ne.s32.totalorder %s211, %s212
      %p221 = scmp.eq.s32.totalorder %s23, 0
      %p222 = por %p220, %p221
      %p223 = scmp.ne.s32.totalorder %s211, %s212
      %p224 = scmp.eq.s32.totalorder %s24, 1
      %p225 = por %p223, %p224
      %p227 = scmp.ne.s32.totalorder %s212, %s226
      %p228 = scmp.eq.s32.totalorder %s24, 0
      %p229 = por %p227, %p228
      %s231 = sadd.s32 %s230, 1
      %p234 = scmp.eq.s32.totalorder %s18, 1
      %p235 = scmp.ne.s32.totalorder %s230, %s232
      %p236 = scmp.eq.s32.totalorder %s18, 0
      %p237 = por %p235, %p236
      %p238 = scmp.ne.s32.totalorder %s230, %s232
      %p239 = scmp.eq.s32.totalorder %s23, 1
      %p240 = por %p238, %p239
      %p241 = scmp.ne.s32.totalorder %s232, %s233
      %p242 = scmp.eq.s32.totalorder %s23, 0
      %p243 = por %p241, %p242
      %p244 = scmp.ne.s32.totalorder %s232, %s233
      %p245 = scmp.eq.s32.totalorder %s24, 1
      %p246 = por %p244, %p245
      %p248 = scmp.ne.s32.totalorder %s233, %s247
      %p249 = scmp.eq.s32.totalorder %s24, 0
      %p250 = por %p248, %p249
      %s252 = sadd.s32 %s251, 1
      %p255 = scmp.eq.s32.totalorder %s18, 1
      %p256 = scmp.ne.s32.totalorder %s251, %s253
      %p257 = scmp.eq.s32.totalorder %s18, 0
      %p258 = por %p256, %p257
      %p259 = scmp.ne.s32.totalorder %s251, %s253
      %p260 = scmp.eq.s32.totalorder %s23, 1
      %p261 = por %p259, %p260
      %p262 = scmp.ne.s32.totalorder %s253, %s254
      %p263 = scmp.eq.s32.totalorder %s23, 0
      %p264 = por %p262, %p263
      %p265 = scmp.ne.s32.totalorder %s253, %s254
      %p266 = scmp.eq.s32.totalorder %s24, 1
      %p267 = por %p265, %p266
      %p269 = scmp.ne.s32.totalorder %s254, %s268
      %p270 = scmp.eq.s32.totalorder %s24, 0
      %p271 = por %p269, %p270
      %s272 = ssub.s32 %s18, %s25
      %p273 = scmp.eq.s32.totalorder %s272, 0
      %s275 = sadd.s32 %s274, 1
      %s276 = scalar_select %p273, %s274, %s275
      %p279 = pneg %p273
      %p280 = scmp.eq.s32.totalorder %s18, 1
      %p281 = por %p279, %p280
      %p282 = scmp.ne.s32.totalorder %s274, %s277
      %p283 = scmp.eq.s32.totalorder %s18, 0
      %p284 = por %p282, %p283
      %p285 = scmp.ne.s32.totalorder %s274, %s277
      %p286 = scmp.eq.s32.totalorder %s23, 1
      %p287 = por %p285, %p286
      %p288 = scmp.ne.s32.totalorder %s277, %s278
      %p289 = scmp.eq.s32.totalorder %s23, 0
      %p290 = por %p288, %p289
      %p291 = scmp.ne.s32.totalorder %s277, %s278
      %p292 = scmp.eq.s32.totalorder %s24, 1
      %p293 = por %p291, %p292
      %p295 = scmp.ne.s32.totalorder %s278, %s294
      %p296 = scmp.eq.s32.totalorder %s24, 0
      %p297 = por %p295, %p296
      %p298 = scmp.le.s32.totalorder 1, %s18
      %p299 = scmp.lt.s32.totalorder %s18, 3
      %p300 = pnand %p298, %p299
      %p301 = pneg %p300
      // Predicated region
      $region9: #{attention_gate.1} parent=5 // pred_check
        _
      $region10: #{attention_gate.1} parent=5 // pred_check_branch
        %303 = sbr.rel (%p300) target = $region12
      $region11: #{attention_gate.1} parent=5 // pred_region
        %s304 = ssub.s32 %s18, 1
        // Predicated region
        $region13: #{attention_gate.1} parent=11 // pred_check
          %p305 = pneg %p117
        $region14: #{attention_gate.1} parent=11 // pred_check_branch
          %307 = sbr.rel (%p305) target = $region16
        $region15: #{attention_gate.1} parent=11 // pred_region
          _
        $region16: #{attention_gate.1} parent=11 // pred_fallthru
          _
        // Predicated region
        $region17: #{attention_gate.1} parent=11 // pred_check
          %p308 = pneg %p138
        $region18: #{attention_gate.1} parent=11 // pred_check_branch
          %310 = sbr.rel (%p308) target = $region20
        $region19: #{attention_gate.1} parent=11 // pred_region
          _
        $region20: #{attention_gate.1} parent=11 // pred_fallthru
          _
        // Predicated region
        $region21: #{attention_gate.1} parent=11 // pred_check
          %p311 = pneg %p159
        $region22: #{attention_gate.1} parent=11 // pred_check_branch
          %313 = sbr.rel (%p311) target = $region24
        $region23: #{attention_gate.1} parent=11 // pred_region
          _
        $region24: #{attention_gate.1} parent=11 // pred_fallthru
          _
        // Predicated region
        $region25: #{attention_gate.1} parent=11 // pred_check
          %p314 = pneg %p180
        $region26: #{attention_gate.1} parent=11 // pred_check_branch
          %316 = sbr.rel (%p314) target = $region28
        $region27: #{attention_gate.1} parent=11 // pred_region
          _
        $region28: #{attention_gate.1} parent=11 // pred_fallthru
          _
        // Predicated region
        $region29: #{attention_gate.1} parent=11 // pred_check
          %p317 = pneg %p201
        $region30: #{attention_gate.1} parent=11 // pred_check_branch
          %319 = sbr.rel (%p317) target = $region32
        $region31: #{attention_gate.1} parent=11 // pred_region
          _
        $region32: #{attention_gate.1} parent=11 // pred_fallthru
          _
        // Predicated region
        $region33: #{attention_gate.1} parent=11 // pred_check
          %p320 = pneg %p222
        $region34: #{attention_gate.1} parent=11 // pred_check_branch
          %322 = sbr.rel (%p320) target = $region36
        $region35: #{attention_gate.1} parent=11 // pred_region
          _
        $region36: #{attention_gate.1} parent=11 // pred_fallthru
          _
        // Predicated region
        $region37: #{attention_gate.1} parent=11 // pred_check
          %p323 = pneg %p243
        $region38: #{attention_gate.1} parent=11 // pred_check_branch
          %325 = sbr.rel (%p323) target = $region40
        $region39: #{attention_gate.1} parent=11 // pred_region
          _
        $region40: #{attention_gate.1} parent=11 // pred_fallthru
          _
        // Predicated region
        $region41: #{attention_gate.1} parent=11 // pred_check
          %p326 = pneg %p264
        $region42: #{attention_gate.1} parent=11 // pred_check_branch
          %328 = sbr.rel (%p326) target = $region44
        $region43: #{attention_gate.1} parent=11 // pred_region
          %s330 = ssub.s32 16, 16
          %331 = vsyncadd [#allocation3], %s330
          %s333 = sshll.u32 %s10, 4
          %s334 = int_to_ptr.vmem [resolvable:$true] %s333
          %336 = dma.vmem_to_smem %s334, 16, [#allocation2], [#allocation3]
        $region44: #{attention_gate.1} parent=11 // pred_fallthru
          _
      $region12: #{attention_gate.1} parent=5 // pred_fallthru
        _
      %p337 = scmp.lt.s32.totalorder %s18, 2
      // Predicated region
      $region45: #{attention_gate.1} parent=5 // pred_check
        %p338 = pneg %p337
      $region46: #{attention_gate.1} parent=5 // pred_check_branch
        %340 = sbr.rel (%p338) target = $region48
      $region47: #{attention_gate.1} parent=5 // pred_region
        // Predicated region
        $region49: #{attention_gate.1} parent=47 // pred_check
          %p341 = pneg %p38
        $region50: #{attention_gate.1} parent=47 // pred_check_branch
          %343 = sbr.rel (%p341) target = $region52
        $region51: #{attention_gate.1} parent=47 // pred_region
          %p344 = scmp.lt.s32.totalorder %s18, 1
          %s345 = scalar_select %p344, %s18, 1
          %s346 = smul.addr %s345, 2
          %s347 = smul.addr %s346, 4
          %s348 = scalar_lea.vmem %s0, %s347
        $region52: #{attention_gate.1} parent=47 // pred_fallthru
          _
        // Predicated region
        $region53: #{attention_gate.1} parent=47 // pred_check
          %p349 = pneg %p64
        $region54: #{attention_gate.1} parent=47 // pred_check_branch
          %351 = sbr.rel (%p349) target = $region56
        $region55: #{attention_gate.1} parent=47 // pred_region
          %p352 = scmp.lt.s32.totalorder %s18, 1
          %s353 = scalar_select %p352, %s18, 1
          %s354 = smul.addr %s353, 8
          %s355 = smul.addr %s354, 4
          %s356 = scalar_lea.vmem %s1, %s355
        $region56: #{attention_gate.1} parent=47 // pred_fallthru
          _
        // Predicated region
        $region57: #{attention_gate.1} parent=47 // pred_check
          %p357 = pneg %p90
        $region58: #{attention_gate.1} parent=47 // pred_check_branch
          %359 = sbr.rel (%p357) target = $region60
        $region59: #{attention_gate.1} parent=47 // pred_region
          %p360 = scmp.lt.s32.totalorder %s18, 1
          %s361 = scalar_select %p360, %s18, 1
          %s362 = smul.addr %s361, 8
          %s363 = smul.addr %s362, 4
          %s364 = scalar_lea.vmem %s2, %s363
        $region60: #{attention_gate.1} parent=47 // pred_fallthru
          _
      $region48: #{attention_gate.1} parent=5 // pred_fallthru
        _
      %p365 = scmp.le.s32.totalorder 1, %s18
      %p366 = scmp.lt.s32.totalorder %s18, 3
      %p367 = pnand %p365, %p366
      %p368 = pneg %p367
      // Predicated region
      $region61: #{attention_gate.1} parent=5 // pred_check
        _
      $region62: #{attention_gate.1} parent=5 // pred_check_branch
        %370 = sbr.rel (%p367) target = $region64
      $region63: #{attention_gate.1} parent=5 // pred_region
        %s371 = ssub.s32 %s18, 1
        // Predicated region
        $region65: #{attention_gate.1} parent=63 // pred_check
          %p372 = pneg %p264
        $region66: #{attention_gate.1} parent=63 // pred_check_branch
          %374 = sbr.rel (%p372) target = $region68
        $region67: #{attention_gate.1} parent=63 // pred_region
          %375 = dma.done [#allocation3], 16
        $region68: #{attention_gate.1} parent=63 // pred_fallthru
          _
        %376 = sfence
        %p377 = scmp.lt.s32.totalorder %s23, 1
        %s378 = scalar_select %p377, %s23, 1
        %s379 = smul.addr %s378, 2
        %s380 = smul.addr %s379, 4
        %s381 = scalar_lea.vmem %s0, %s380
        %p382 = pneg %p44
        %p383 = pneg %p41
        %p384 = scmp.lt.s32.totalorder %s23, 1
        %s385 = scalar_select %p384, %s23, 1
        %s386 = smul.addr %s385, 8
        %s387 = smul.addr %s386, 4
        %s388 = scalar_lea.vmem %s1, %s387
        %p389 = pneg %p70
        %p390 = pneg %p67
        %p391 = scmp.lt.s32.totalorder %s23, 1
        %s392 = scalar_select %p391, %s23, 1
        %s393 = smul.addr %s392, 8
        %s394 = smul.addr %s393, 4
        %s395 = scalar_lea.vmem %s2, %s394
        %p396 = pneg %p96
        %p397 = pneg %p93
        %p398 = pneg %p117
        %p399 = pneg %p114
        %p400 = pneg %p138
        %p401 = pneg %p135
        %p402 = pneg %p159
        %p403 = pneg %p156
        %p404 = pneg %p180
        %p405 = pneg %p177
        %p406 = pneg %p201
        %p407 = pneg %p198
        %p408 = pneg %p222
        %p409 = pneg %p219
        %p410 = pneg %p243
        %p411 = pneg %p240
        %p412 = pneg %p264
        %p413 = pneg %p261
        %p414 = pneg %p290
        %p415 = pneg %p287
        %p416 = scmp.lt.s32.totalorder %s23, 1
        %s417 = scalar_select %p416, %s23, 1
        %s418 = smul.addr %s417, 8
        %s419 = smul.addr %s418, 4
        %s420 = scalar_lea.vmem %s11, %s419
        %p421 = scmp.lt.s32.totalorder %s23, 1
        %s422 = scalar_select %p421, %s23, 1
        %s423 = smul.addr %s422, 2
        %s424 = smul.addr %s423, 4
        %s425 = scalar_lea.vmem %s0, %s424
        %p426 = scmp.lt.s32.totalorder %s23, 1
        %s427 = scalar_select %p426, %s23, 1
        %s428 = smul.addr %s427, 8
        %s429 = smul.addr %s428, 4
        %s430 = scalar_lea.vmem %s1, %s429
        %p431 = scmp.lt.s32.totalorder %s23, 1
        %s432 = scalar_select %p431, %s23, 1
        %s433 = smul.addr %s432, 8
        %s434 = smul.addr %s433, 4
        %s435 = scalar_lea.vmem %s2, %s434
        %p436 = scmp.lt.s32.totalorder %s23, 1
        %s437 = scalar_select %p436, %s23, 1
        %s438 = smul.addr %s437, 8
        %s439 = smul.addr %s438, 4
        %s440 = scalar_lea.vmem %s11, %s439
        %v442 = vld [vmem:[%s425] sm:$0xff]
        %v443 = vld [vmem:[%s430] sm:$0xff]
        %v444 = vld [vmem:[%s430 + $0x8] sm:$0xff]
        %v445 = vld [vmem:[%s430 + $0x10] sm:$0xff]
        %v446 = vld [vmem:[%s430 + $0x18] sm:$0xff]
        %v448 = vcombine.high %v442, %v442
        %450 = vrot.lane.b32.xlu0 %v442, 17
        %v451 = vpop.permute.xlu0 %450
        %452 = vrot.lane.b32.xlu0 %v448, 17
        %v453 = vpop.permute.xlu0 %452
        %v454 = vlaneseq
        %v455 = vand.u32 %v454, 127
        %vm456 = vcmp.lt.s32.totalorder %v455, 17
        %v457 = vsel %vm456, %v451, %v453
        %v458 = vsel %vm456, %v453, %v451
        %v459 = vld [vmem:[%s5] sm:$0x3]
        %v461 = vlaneseq
        %v462 = vshrl.u32 %v461, 7
        %v463 = vsub.s32 0, %v462
        %v464 = vrot.slane %v459, %v463
        %v465 = vlaneseq
        %v466 = vshrl.u32 %v465, 7
        %v467 = vsub.s32 1, %v466
        %v468 = vrot.slane %v459, %v467
        %v471 = vmul.f32 %v458, %v464
        %v472 = vmul.f32 %v457, %v468
        %v473 = vpack.c.bf16 %v471, %v471
        %v474 = vpack.c.bf16 %v472, %v472
        %v475 = vld [vmem:[%s3] sm:$0xf]
        %v476 = vld [vmem:[%s3 + $0x4] sm:$0xf]
        %v477 = vld [vmem:[%s3 + $0x8] sm:$0xf]
        %v478 = vld [vmem:[%s3 + $0xc] sm:$0xf]
        %479 = vrot.lane.b32.xlu0 %v442, 16
        %v480 = vpop.permute.xlu0 %479
        %481 = vrot.lane.b32.xlu0 %v448, 16
        %v482 = vpop.permute.xlu0 %481
        %vm483 = vcmp.lt.s32.totalorder %v455, 16
        %v484 = vsel %vm483, %v480, %v482
        %v485 = vsel %vm483, %v482, %v480
        %s486 = scalar_lea.vmem %s5, 2
        %v487 = vld [vmem:[%s486] sm:$0x3]
        %v489 = vlaneseq
        %v490 = vshrl.u32 %v489, 7
        %v491 = vsub.s32 0, %v490
        %v492 = vrot.slane %v487, %v491
        %v493 = vlaneseq
        %v494 = vshrl.u32 %v493, 7
        %v495 = vsub.s32 1, %v494
        %v496 = vrot.slane %v487, %v495
        %v499 = vmul.f32 %v485, %v492
        %v500 = vmul.f32 %v484, %v496
        %v501 = vpack.c.bf16 %v499, %v499
        %v502 = vpack.c.bf16 %v500, %v500
        %s503 = scalar_lea.vmem %s3, 16
        %v504 = vld [vmem:[%s503] sm:$0xf]
        %v505 = vld [vmem:[%s503 + $0x4] sm:$0xf]
        %v506 = vld [vmem:[%s503 + $0x8] sm:$0xf]
        %v507 = vld [vmem:[%s503 + $0xc] sm:$0xf]
        %v512 = vunpack.c.l.b16 %v504
        %v513 = vunpack.c.l.b16 %v505
        %v514 = vunpack.c.l.b16 %v506
        %v515 = vunpack.c.l.b16 %v507
        %v516 = vpack.c.b16 %v513, %v512
        %v517 = vpack.c.b16 %v515, %v514
        %vm518 = vcmask 31744
        %v520 = vsel %vm518, %v516, 0
        %v523 = vsel %vm518, %v517, 0
        %vm525 = vcmask 1041408
        %v527 = vsel %vm525, %v501, 0
        %v530 = vsel %vm525, %v502, 0
        %532 = vmatprep.subr.bf16.mxu0 %v530
        %533 = vmatpush1.bf16.msra.mxu0 %v527
        %534 = vmatprep.subr.bf16.mxu0 0
        %535 = vmatpush1.bf16.msra.mxu0 0
        %536 = vmatprep.subr.bf16.mxu0 0
        %537 = vmatpush1.bf16.msra.mxu0 0
        %538 = vmatprep.subr.bf16.mxu0 0
        %539 = vmatpush1.bf16.msra.mxu0 0
        %540 = vmatprep.subr.bf16.mxu0 0
        %541 = vmatpush1.bf16.msra.mxu0 0
        %542 = vmatprep.subr.bf16.mxu0 0
        %543 = vmatpush1.bf16.msra.mxu0 0
        %544 = vmatprep.subr.bf16.mxu0 0
        %545 = vmatpush1.bf16.msra.mxu0 0
        %546 = vmatprep.subr.bf16.mxu0 0
        %547 = vmatpush1.bf16.msra.mxu0 0
        %548 = vmatprep.subr.bf16.mxu0 0
        %549 = vmatpush1.bf16.msra.mxu0 0
        %550 = vmatprep.subr.bf16.mxu0 0
        %551 = vmatpush1.bf16.msra.mxu0 0
        %552 = vmatprep.subr.bf16.mxu0 0
        %553 = vmatpush1.bf16.msra.mxu0 0
        %554 = vmatprep.subr.bf16.mxu0 0
        %555 = vmatpush1.bf16.msra.mxu0 0
        %556 = vmatprep.subr.bf16.mxu0 0
        %557 = vmatpush1.bf16.msra.mxu0 0
        %558 = vmatprep.subr.bf16.mxu0 0
        %559 = vmatpush1.bf16.msra.mxu0 0
        %560 = vmatprep.subr.bf16.mxu0 0
        %561 = vmatpush1.bf16.msra.mxu0 0
        %562 = vmatprep.subr.bf16.mxu0 0
        %563 = vmatpush1.bf16.msra.mxu0 0
        %564 = vmatprep.mubr.bf16.mxu0 0
        %565 = vmatmul.mubr.bf16.gmra.mrb[0].mxu0 %v520
        %v566 = vpop.f32.mrb[0].mxu0
        %v567 = vadd.f32 0.0, %v566
        %v568 = vpop.f32.mrb[0].mxu0
        %v569 = vadd.f32 0.0, %v568
        %v570 = vpop.f32.mrb[0].mxu0
        %v571 = vadd.f32 0.0, %v570
        %v572 = vpop.f32.mrb[0].mxu0
        %v573 = vadd.f32 0.0, %v572
        %574 = vmatprep.mubr.bf16.mxu0 0
        %575 = vmatmul.mubr.bf16.gmra.mrb[0].mxu0 %v523
        %v576 = vpop.f32.mrb[0].mxu0
        %v577 = vadd.f32 0.0, %v576
        %v578 = vpop.f32.mrb[0].mxu0
        %v579 = vadd.f32 0.0, %v578
        %v580 = vpop.f32.mrb[0].mxu0
        %v581 = vadd.f32 0.0, %v580
        %v582 = vpop.f32.mrb[0].mxu0
        %v583 = vadd.f32 0.0, %v582
        %584 = vdwg.mxu0
        %v589 = vunpack.c.l.b16 %v475
        %v590 = vunpack.c.l.b16 %v476
        %v591 = vunpack.c.l.b16 %v477
        %v592 = vunpack.c.l.b16 %v478
        %v593 = vpack.c.b16 %v590, %v589
        %v594 = vpack.c.b16 %v592, %v591
        %v596 = vsel %vm518, %v593, 0
        %v599 = vsel %vm518, %v594, 0
        %v602 = vsel %vm525, %v473, 0
        %v605 = vsel %vm525, %v474, 0
        %607 = vmatprep.subr.bf16.mxu0 %v605
        %608 = vmatpush1.bf16.msra.mxu0 %v602
        %609 = vmatprep.subr.bf16.mxu0 0
        %610 = vmatpush1.bf16.msra.mxu0 0
        %611 = vmatprep.subr.bf16.mxu0 0
        %612 = vmatpush1.bf16.msra.mxu0 0
        %613 = vmatprep.subr.bf16.mxu0 0
        %614 = vmatpush1.bf16.msra.mxu0 0
        %615 = vmatprep.subr.bf16.mxu0 0
        %616 = vmatpush1.bf16.msra.mxu0 0
        %617 = vmatprep.subr.bf16.mxu0 0
        %618 = vmatpush1.bf16.msra.mxu0 0
        %619 = vmatprep.subr.bf16.mxu0 0
        %620 = vmatpush1.bf16.msra.mxu0 0
        %621 = vmatprep.subr.bf16.mxu0 0
        %622 = vmatpush1.bf16.msra.mxu0 0
        %623 = vmatprep.subr.bf16.mxu0 0
        %624 = vmatpush1.bf16.msra.mxu0 0
        %625 = vmatprep.subr.bf16.mxu0 0
        %626 = vmatpush1.bf16.msra.mxu0 0
        %627 = vmatprep.subr.bf16.mxu0 0
        %628 = vmatpush1.bf16.msra.mxu0 0
        %629 = vmatprep.subr.bf16.mxu0 0
        %630 = vmatpush1.bf16.msra.mxu0 0
        %631 = vmatprep.subr.bf16.mxu0 0
        %632 = vmatpush1.bf16.msra.mxu0 0
        %633 = vmatprep.subr.bf16.mxu0 0
        %634 = vmatpush1.bf16.msra.mxu0 0
        %635 = vmatprep.subr.bf16.mxu0 0
        %636 = vmatpush1.bf16.msra.mxu0 0
        %637 = vmatprep.subr.bf16.mxu0 0
        %638 = vmatpush1.bf16.msra.mxu0 0
        %639 = vmatprep.mubr.bf16.mxu0 0
        %640 = vmatmul.mubr.bf16.gmra.mrb[0].mxu0 %v596
        %v641 = vpop.f32.mrb[0].mxu0
        %v642 = vadd.f32 %v567, %v641
        %v643 = vpop.f32.mrb[0].mxu0
        %v644 = vadd.f32 %v569, %v643
        %v645 = vpop.f32.mrb[0].mxu0
        %v646 = vadd.f32 %v571, %v645
        %v647 = vpop.f32.mrb[0].mxu0
        %v648 = vadd.f32 %v573, %v647
        %649 = vmatprep.mubr.bf16.mxu0 0
        %650 = vmatmul.mubr.bf16.gmra.mrb[0].mxu0 %v599
        %v651 = vpop.f32.mrb[0].mxu0
        %v652 = vadd.f32 %v577, %v651
        %v653 = vpop.f32.mrb[0].mxu0
        %v654 = vadd.f32 %v579, %v653
        %v655 = vpop.f32.mrb[0].mxu0
        %v656 = vadd.f32 %v581, %v655
        %v657 = vpop.f32.mrb[0].mxu0
        %v658 = vadd.f32 %v583, %v657
        %659 = vdwg.mxu0
        %660 = vrot.lane.b32.xlu0 %v442, 15
        %v661 = vpop.permute.xlu0 %660
        %662 = vrot.lane.b32.xlu0 %v448, 15
        %v663 = vpop.permute.xlu0 %662
        %vm664 = vcmp.lt.s32.totalorder %v455, 15
        %v665 = vsel %vm664, %v661, %v663
        %v666 = vsel %vm664, %v663, %v661
        %s667 = scalar_lea.vmem %s5, 4
        %v668 = vld [vmem:[%s667] sm:$0x3]
        %v670 = vlaneseq
        %v671 = vshrl.u32 %v670, 7
        %v672 = vsub.s32 0, %v671
        %v673 = vrot.slane %v668, %v672
        %v674 = vlaneseq
        %v675 = vshrl.u32 %v674, 7
        %v676 = vsub.s32 1, %v675
        %v677 = vrot.slane %v668, %v676
        %v680 = vmul.f32 %v666, %v673
        %v681 = vmul.f32 %v665, %v677
        %v682 = vpack.c.bf16 %v680, %v680
        %v683 = vpack.c.bf16 %v681, %v681
        %s684 = scalar_lea.vmem %s3, 32
        %v685 = vld [vmem:[%s684] sm:$0xf]
        %v686 = vld [vmem:[%s684 + $0x4] sm:$0xf]
        %v687 = vld [vmem:[%s684 + $0x8] sm:$0xf]
        %v688 = vld [vmem:[%s684 + $0xc] sm:$0xf]
        %v693 = vunpack.c.l.b16 %v685
        %v694 = vunpack.c.l.b16 %v686
        %v695 = vunpack.c.l.b16 %v687
        %v696 = vunpack.c.l.b16 %v688
        %v697 = vpack.c.b16 %v694, %v693
        %v698 = vpack.c.b16 %v696, %v695
        %v700 = vsel %vm518, %v697, 0
        %v703 = vsel %vm518, %v698, 0
        %v706 = vsel %vm525, %v682, 0
        %v709 = vsel %vm525, %v683, 0
        %711 = vmatprep.subr.bf16.mxu0 %v709
        %712 = vmatpush1.bf16.msra.mxu0 %v706
        %713 = vmatprep.subr.bf16.mxu0 0
        %714 = vmatpush1.bf16.msra.mxu0 0
        %715 = vmatprep.subr.bf16.mxu0 0
        %716 = vmatpush1.bf16.msra.mxu0 0
        %717 = vmatprep.subr.bf16.mxu0 0
        %718 = vmatpush1.bf16.msra.mxu0 0
        %719 = vmatprep.subr.bf16.mxu0 0
        %720 = vmatpush1.bf16.msra.mxu0 0
        %721 = vmatprep.subr.bf16.mxu0 0
        %722 = vmatpush1.bf16.msra.mxu0 0
        %723 = vmatprep.subr.bf16.mxu0 0
        %724 = vmatpush1.bf16.msra.mxu0 0
        %725 = vmatprep.subr.bf16.mxu0 0
        %726 = vmatpush1.bf16.msra.mxu0 0
        %727 = vmatprep.subr.bf16.mxu0 0
        %728 = vmatpush1.bf16.msra.mxu0 0
        %729 = vmatprep.subr.bf16.mxu0 0
        %730 = vmatpush1.bf16.msra.mxu0 0
        %731 = vmatprep.subr.bf16.mxu0 0
        %732 = vmatpush1.bf16.msra.mxu0 0
        %733 = vmatprep.subr.bf16.mxu0 0
        %734 = vmatpush1.bf16.msra.mxu0 0
        %735 = vmatprep.subr.bf16.mxu0 0
        %736 = vmatpush1.bf16.msra.mxu0 0
        %737 = vmatprep.subr.bf16.mxu0 0
        %738 = vmatpush1.bf16.msra.mxu0 0
        %739 = vmatprep.subr.bf16.mxu0 0
        %740 = vmatpush1.bf16.msra.mxu0 0
        %741 = vmatprep.subr.bf16.mxu0 0
        %742 = vmatpush1.bf16.msra.mxu0 0
        %743 = vmatprep.mubr.bf16.mxu0 0
        %744 = vmatmul.mubr.bf16.gmra.mrb[0].mxu0 %v700
        %v745 = vpop.f32.mrb[0].mxu0
        %v746 = vadd.f32 0.0, %v745
        %v747 = vpop.f32.mrb[0].mxu0
        %v748 = vadd.f32 0.0, %v747
        %v749 = vpop.f32.mrb[0].mxu0
        %v750 = vadd.f32 0.0, %v749
        %v751 = vpop.f32.mrb[0].mxu0
        %v752 = vadd.f32 0.0, %v751
        %753 = vmatprep.mubr.bf16.mxu0 0
        %754 = vmatmul.mubr.bf16.gmra.mrb[0].mxu0 %v703
        %v755 = vpop.f32.mrb[0].mxu0
        %v756 = vadd.f32 0.0, %v755
        %v757 = vpop.f32.mrb[0].mxu0
        %v758 = vadd.f32 0.0, %v757
        %v759 = vpop.f32.mrb[0].mxu0
        %v760 = vadd.f32 0.0, %v759
        %v761 = vpop.f32.mrb[0].mxu0
        %v762 = vadd.f32 0.0, %v761
        %763 = vdwg.mxu0
        %v764 = vadd.f32 %v642, %v746
        %v765 = vadd.f32 %v644, %v748
        %v766 = vadd.f32 %v646, %v750
        %v767 = vadd.f32 %v648, %v752
        %v768 = vadd.f32 %v652, %v756
        %v769 = vadd.f32 %v654, %v758
        %v770 = vadd.f32 %v656, %v760
        %v771 = vadd.f32 %v658, %v762
        %772 = vrot.lane.b32.xlu0 %v442, 1
        %v773 = vpop.permute.xlu0 %772
        %774 = vrot.lane.b32.xlu0 %v448, 1
        %v775 = vpop.permute.xlu0 %774
        %vm776 = vcmp.lt.s32.totalorder %v455, 1
        %v777 = vsel %vm776, %v773, %v775
        %v778 = vsel %vm776, %v775, %v773
        %s779 = scalar_lea.vmem %s5, 6
        %v780 = vld [vmem:[%s779] sm:$0x3]
        %v782 = vlaneseq
        %v783 = vshrl.u32 %v782, 7
        %v784 = vsub.s32 0, %v783
        %v785 = vrot.slane %v780, %v784
        %v786 = vlaneseq
        %v787 = vshrl.u32 %v786, 7
        %v788 = vsub.s32 1, %v787
        %v789 = vrot.slane %v780, %v788
        %v792 = vmul.f32 %v778, %v785
        %v793 = vmul.f32 %v777, %v789
        %v794 = vpack.c.bf16 %v792, %v792
        %v795 = vpack.c.bf16 %v793, %v793
        %s796 = scalar_lea.vmem %s3, 48
        %v797 = vld [vmem:[%s796] sm:$0xf]
        %v798 = vld [vmem:[%s796 + $0x4] sm:$0xf]
        %v799 = vld [vmem:[%s796 + $0x8] sm:$0xf]
        %v800 = vld [vmem:[%s796 + $0xc] sm:$0xf]
        %v805 = vunpack.c.l.b16 %v797
        %v806 = vunpack.c.l.b16 %v798
        %v807 = vunpack.c.l.b16 %v799
        %v808 = vunpack.c.l.b16 %v800
        %v809 = vpack.c.b16 %v806, %v805
        %v810 = vpack.c.b16 %v808, %v807
        %v812 = vsel %vm518, %v809, 0
        %v815 = vsel %vm518, %v810, 0
        %v818 = vsel %vm525, %v794, 0
        %v821 = vsel %vm525, %v795, 0
        %823 = vmatprep.subr.bf16.mxu0 %v821
        %824 = vmatpush1.bf16.msra.mxu0 %v818
        %825 = vmatprep.subr.bf16.mxu0 0
        %826 = vmatpush1.bf16.msra.mxu0 0
        %827 = vmatprep.subr.bf16.mxu0 0
        %828 = vmatpush1.bf16.msra.mxu0 0
        %829 = vmatprep.subr.bf16.mxu0 0
        %830 = vmatpush1.bf16.msra.mxu0 0
        %831 = vmatprep.subr.bf16.mxu0 0
        %832 = vmatpush1.bf16.msra.mxu0 0
        %833 = vmatprep.subr.bf16.mxu0 0
        %834 = vmatpush1.bf16.msra.mxu0 0
        %835 = vmatprep.subr.bf16.mxu0 0
        %836 = vmatpush1.bf16.msra.mxu0 0
        %837 = vmatprep.subr.bf16.mxu0 0
        %838 = vmatpush1.bf16.msra.mxu0 0
        %839 = vmatprep.subr.bf16.mxu0 0
        %840 = vmatpush1.bf16.msra.mxu0 0
        %841 = vmatprep.subr.bf16.mxu0 0
        %842 = vmatpush1.bf16.msra.mxu0 0
        %843 = vmatprep.subr.bf16.mxu0 0
        %844 = vmatpush1.bf16.msra.mxu0 0
        %845 = vmatprep.subr.bf16.mxu0 0
        %846 = vmatpush1.bf16.msra.mxu0 0
        %847 = vmatprep.subr.bf16.mxu0 0
        %848 = vmatpush1.bf16.msra.mxu0 0
        %849 = vmatprep.subr.bf16.mxu0 0
        %850 = vmatpush1.bf16.msra.mxu0 0
        %851 = vmatprep.subr.bf16.mxu0 0
        %852 = vmatpush1.bf16.msra.mxu0 0
        %853 = vmatprep.subr.bf16.mxu0 0
        %854 = vmatpush1.bf16.msra.mxu0 0
        %855 = vmatprep.mubr.bf16.mxu0 0
        %856 = vmatmul.mubr.bf16.gmra.mrb[0].mxu0 %v812
        %v857 = vpop.f32.mrb[0].mxu0
        %v858 = vadd.f32 0.0, %v857
        %v859 = vpop.f32.mrb[0].mxu0
        %v860 = vadd.f32 0.0, %v859
        %v861 = vpop.f32.mrb[0].mxu0
        %v862 = vadd.f32 0.0, %v861
        %v863 = vpop.f32.mrb[0].mxu0
        %v864 = vadd.f32 0.0, %v863
        %865 = vmatprep.mubr.bf16.mxu0 0
        %866 = vmatmul.mubr.bf16.gmra.mrb[0].mxu0 %v815
        %v867 = vpop.f32.mrb[0].mxu0
        %v868 = vadd.f32 0.0, %v867
        %v869 = vpop.f32.mrb[0].mxu0
        %v870 = vadd.f32 0.0, %v869
        %v871 = vpop.f32.mrb[0].mxu0
        %v872 = vadd.f32 0.0, %v871
        %v873 = vpop.f32.mrb[0].mxu0
        %v874 = vadd.f32 0.0, %v873
        %875 = vdwg.mxu0
        %v876 = vadd.f32 %v764, %v858
        %v877 = vadd.f32 %v765, %v860
        %v878 = vadd.f32 %v766, %v862
        %v879 = vadd.f32 %v767, %v864
        %v880 = vadd.f32 %v768, %v868
        %v881 = vadd.f32 %v769, %v870
        %v882 = vadd.f32 %v770, %v872
        %v883 = vadd.f32 %v771, %v874
        %s884 = scalar_lea.vmem %s5, 8
        %v885 = vld [vmem:[%s884] sm:$0x3]
        %v887 = vlaneseq
        %v888 = vshrl.u32 %v887, 7
        %v889 = vsub.s32 0, %v888
        %v890 = vrot.slane %v885, %v889
        %v891 = vlaneseq
        %v892 = vshrl.u32 %v891, 7
        %v893 = vsub.s32 1, %v892
        %v894 = vrot.slane %v885, %v893
        %v895 = vcombine.low %v890, %v894
        %v897 = vmul.f32 %v442, %v895
        %v899 = vcombine.high %v897, %v897
        %v901 = vpack.c.bf16 %v897, %v897
        %v902 = vpack.c.bf16 %v899, %v899
        %s903 = scalar_lea.vmem %s3, 64
        %v904 = vld [vmem:[%s903] sm:$0xf]
        %v905 = vld [vmem:[%s903 + $0x4] sm:$0xf]
        %v906 = vld [vmem:[%s903 + $0x8] sm:$0xf]
        %v907 = vld [vmem:[%s903 + $0xc] sm:$0xf]
        %v912 = vunpack.c.l.b16 %v904
        %v913 = vunpack.c.l.b16 %v905
        %v914 = vunpack.c.l.b16 %v906
        %v915 = vunpack.c.l.b16 %v907
        %v916 = vpack.c.b16 %v913, %v912
        %v917 = vpack.c.b16 %v915, %v914
        %v919 = vsel %vm518, %v916, 0
        %v922 = vsel %vm518, %v917, 0
        %v925 = vsel %vm525, %v901, 0
        %v928 = vsel %vm525, %v902, 0
        %930 = vmatprep.subr.bf16.mxu0 %v928
        %931 = vmatpush1.bf16.msra.mxu0 %v925
        %932 = vmatprep.subr.bf16.mxu0 0
        %933 = vmatpush1.bf16.msra.mxu0 0
        %934 = vmatprep.subr.bf16.mxu0 0
        %935 = vmatpush1.bf16.msra.mxu0 0
        %936 = vmatprep.subr.bf16.mxu0 0
        %937 = vmatpush1.bf16.msra.mxu0 0
        %938 = vmatprep.subr.bf16.mxu0 0
        %939 = vmatpush1.bf16.msra.mxu0 0
        %940 = vmatprep.subr.bf16.mxu0 0
        %941 = vmatpush1.bf16.msra.mxu0 0
        %942 = vmatprep.subr.bf16.mxu0 0
        %943 = vmatpush1.bf16.msra.mxu0 0
        %944 = vmatprep.subr.bf16.mxu0 0
        %945 = vmatpush1.bf16.msra.mxu0 0
        %946 = vmatprep.subr.bf16.mxu0 0
        %947 = vmatpush1.bf16.msra.mxu0 0
        %948 = vmatprep.subr.bf16.mxu0 0
        %949 = vmatpush1.bf16.msra.mxu0 0
        %950 = vmatprep.subr.bf16.mxu0 0
        %951 = vmatpush1.bf16.msra.mxu0 0
        %952 = vmatprep.subr.bf16.mxu0 0
        %953 = vmatpush1.bf16.msra.mxu0 0
        %954 = vmatprep.subr.bf16.mxu0 0
        %955 = vmatpush1.bf16.msra.mxu0 0
        %956 = vmatprep.subr.bf16.mxu0 0
        %957 = vmatpush1.bf16.msra.mxu0 0
        %958 = vmatprep.subr.bf16.mxu0 0
        %959 = vmatpush1.bf16.msra.mxu0 0
        %960 = vmatprep.subr.bf16.mxu0 0
        %961 = vmatpush1.bf16.msra.mxu0 0
        %962 = vmatprep.mubr.bf16.mxu0 0
        %963 = vmatmul.mubr.bf16.gmra.mrb[0].mxu0 %v919
        %v964 = vpop.f32.mrb[0].mxu0
        %v965 = vadd.f32 0.0, %v964
        %v966 = vpop.f32.mrb[0].mxu0
        %v967 = vadd.f32 0.0, %v966
        %v968 = vpop.f32.mrb[0].mxu0
        %v969 = vadd.f32 0.0, %v968
        %v970 = vpop.f32.mrb[0].mxu0
        %v971 = vadd.f32 0.0, %v970
        %972 = vmatprep.mubr.bf16.mxu0 0
        %973 = vmatmul.mubr.bf16.gmra.mrb[0].mxu0 %v922
        %v974 = vpop.f32.mrb[0].mxu0
        %v975 = vadd.f32 0.0, %v974
        %v976 = vpop.f32.mrb[0].mxu0
        %v977 = vadd.f32 0.0, %v976
        %v978 = vpop.f32.mrb[0].mxu0
        %v979 = vadd.f32 0.0, %v978
        %v980 = vpop.f32.mrb[0].mxu0
        %v981 = vadd.f32 0.0, %v980
        %982 = vdwg.mxu0
        %v983 = vadd.f32 %v876, %v965
        %v984 = vadd.f32 %v877, %v967
        %v985 = vadd.f32 %v878, %v969
        %v986 = vadd.f32 %v879, %v971
        %v987 = vadd.f32 %v880, %v975
        %v988 = vadd.f32 %v881, %v977
        %v989 = vadd.f32 %v882, %v979
        %v990 = vadd.f32 %v883, %v981
        %991 = vrot.lane.b32.xlu0 %v442, 127
        %v992 = vpop.permute.xlu0 %991
        %993 = vrot.lane.b32.xlu0 %v448, 127
        %v994 = vpop.permute.xlu0 %993
        %vm995 = vcmp.lt.s32.totalorder %v455, 127
        %v996 = vsel %vm995, %v992, %v994
        %v997 = vsel %vm995, %v994, %v992
        %s998 = scalar_lea.vmem %s5, 10
        %v999 = vld [vmem:[%s998] sm:$0x3]
        %v1001 = vlaneseq
        %v1002 = vshrl.u32 %v1001, 7
        %v1003 = vsub.s32 0, %v1002
        %v1004 = vrot.slane %v999, %v1003
        %v1005 = vlaneseq
        %v1006 = vshrl.u32 %v1005, 7
        %v1007 = vsub.s32 1, %v1006
        %v1008 = vrot.slane %v999, %v1007
        %v1011 = vmul.f32 %v996, %v1004
        %v1012 = vmul.f32 %v997, %v1008
        %v1013 = vpack.c.bf16 %v1011, %v1011
        %v1014 = vpack.c.bf16 %v1012, %v1012
        %s1015 = scalar_lea.vmem %s3, 80
        %v1016 = vld [vmem:[%s1015] sm:$0xf]
        %v1017 = vld [vmem:[%s1015 + $0x4] sm:$0xf]
        %v1018 = vld [vmem:[%s1015 + $0x8] sm:$0xf]
        %v1019 = vld [vmem:[%s1015 + $0xc] sm:$0xf]
        %v1024 = vunpack.c.l.b16 %v1016
        %v1025 = vunpack.c.l.b16 %v1017
        %v1026 = vunpack.c.l.b16 %v1018
        %v1027 = vunpack.c.l.b16 %v1019
        %v1028 = vpack.c.b16 %v1025, %v1024
        %v1029 = vpack.c.b16 %v1027, %v1026
        %v1031 = vsel %vm518, %v1028, 0
        %v1034 = vsel %vm518, %v1029, 0
        %v1037 = vsel %vm525, %v1013, 0
        %v1040 = vsel %vm525, %v1014, 0
        %1042 = vmatprep.subr.bf16.mxu0 %v1040
        %1043 = vmatpush1.bf16.msra.mxu0 %v1037
        %1044 = vmatprep.subr.bf16.mxu0 0
        %1045 = vmatpush1.bf16.msra.mxu0 0
        %1046 = vmatprep.subr.bf16.mxu0 0
        %1047 = vmatpush1.bf16.msra.mxu0 0
        %1048 = vmatprep.subr.bf16.mxu0 0
        %1049 = vmatpush1.bf16.msra.mxu0 0
        %1050 = vmatprep.subr.bf16.mxu0 0
        %1051 = vmatpush1.bf16.msra.mxu0 0
        %1052 = vmatprep.subr.bf16.mxu0 0
        %1053 = vmatpush1.bf16.msra.mxu0 0
        %1054 = vmatprep.subr.bf16.mxu0 0
        %1055 = vmatpush1.bf16.msra.mxu0 0
        %1056 = vmatprep.subr.bf16.mxu0 0
        %1057 = vmatpush1.bf16.msra.mxu0 0
        %1058 = vmatprep.subr.bf16.mxu0 0
        %1059 = vmatpush1.bf16.msra.mxu0 0
        %1060 = vmatprep.subr.bf16.mxu0 0
        %1061 = vmatpush1.bf16.msra.mxu0 0
        %1062 = vmatprep.subr.bf16.mxu0 0
        %1063 = vmatpush1.bf16.msra.mxu0 0
        %1064 = vmatprep.subr.bf16.mxu0 0
        %1065 = vmatpush1.bf16.msra.mxu0 0
        %1066 = vmatprep.subr.bf16.mxu0 0
        %1067 = vmatpush1.bf16.msra.mxu0 0
        %1068 = vmatprep.subr.bf16.mxu0 0
        %1069 = vmatpush1.bf16.msra.mxu0 0
        %1070 = vmatprep.subr.bf16.mxu0 0
        %1071 = vmatpush1.bf16.msra.mxu0 0
        %1072 = vmatprep.subr.bf16.mxu0 0
        %1073 = vmatpush1.bf16.msra.mxu0 0
        %1074 = vmatprep.mubr.bf16.mxu0 0
        %1075 = vmatmul.mubr.bf16.gmra.mrb[0].mxu0 %v1031
        %v1076 = vpop.f32.mrb[0].mxu0
        %v1077 = vadd.f32 0.0, %v1076
        %v1078 = vpop.f32.mrb[0].mxu0
        %v1079 = vadd.f32 0.0, %v1078
        %v1080 = vpop.f32.mrb[0].mxu0
        %v1081 = vadd.f32 0.0, %v1080
        %v1082 = vpop.f32.mrb[0].mxu0
        %v1083 = vadd.f32 0.0, %v1082
        %1084 = vmatprep.mubr.bf16.mxu0 0
        %1085 = vmatmul.mubr.bf16.gmra.mrb[0].mxu0 %v1034
        %v1086 = vpop.f32.mrb[0].mxu0
        %v1087 = vadd.f32 0.0, %v1086
        %v1088 = vpop.f32.mrb[0].mxu0
        %v1089 = vadd.f32 0.0, %v1088
        %v1090 = vpop.f32.mrb[0].mxu0
        %v1091 = vadd.f32 0.0, %v1090
        %v1092 = vpop.f32.mrb[0].mxu0
        %v1093 = vadd.f32 0.0, %v1092
        %1094 = vdwg.mxu0
        %v1095 = vadd.f32 %v983, %v1077
        %v1096 = vadd.f32 %v984, %v1079
        %v1097 = vadd.f32 %v985, %v1081
        %v1098 = vadd.f32 %v986, %v1083
        %v1099 = vadd.f32 %v987, %v1087
        %v1100 = vadd.f32 %v988, %v1089
        %v1101 = vadd.f32 %v989, %v1091
        %v1102 = vadd.f32 %v990, %v1093
        %1103 = vrot.lane.b32.xlu0 %v442, 113
        %v1104 = vpop.permute.xlu0 %1103
        %1105 = vrot.lane.b32.xlu0 %v448, 113
        %v1106 = vpop.permute.xlu0 %1105
        %vm1107 = vcmp.lt.s32.totalorder %v455, 113
        %v1108 = vsel %vm1107, %v1104, %v1106
        %v1109 = vsel %vm1107, %v1106, %v1104
        %s1110 = scalar_lea.vmem %s5, 12
        %v1111 = vld [vmem:[%s1110] sm:$0x3]
        %v1113 = vlaneseq
        %v1114 = vshrl.u32 %v1113, 7
        %v1115 = vsub.s32 0, %v1114
        %v1116 = vrot.slane %v1111, %v1115
        %v1117 = vlaneseq
        %v1118 = vshrl.u32 %v1117, 7
        %v1119 = vsub.s32 1, %v1118
        %v1120 = vrot.slane %v1111, %v1119
        %v1123 = vmul.f32 %v1108, %v1116
        %v1124 = vmul.f32 %v1109, %v1120
        %v1125 = vpack.c.bf16 %v1123, %v1123
        %v1126 = vpack.c.bf16 %v1124, %v1124
        %s1127 = scalar_lea.vmem %s3, 96
        %v1128 = vld [vmem:[%s1127] sm:$0xf]
        %v1129 = vld [vmem:[%s1127 + $0x4] sm:$0xf]
        %v1130 = vld [vmem:[%s1127 + $0x8] sm:$0xf]
        %v1131 = vld [vmem:[%s1127 + $0xc] sm:$0xf]
        %v1136 = vunpack.c.l.b16 %v1128
        %v1137 = vunpack.c.l.b16 %v1129
        %v1138 = vunpack.c.l.b16 %v1130
        %v1139 = vunpack.c.l.b16 %v1131
        %v1140 = vpack.c.b16 %v1137, %v1136
        %v1141 = vpack.c.b16 %v1139, %v1138
        %v1143 = vsel %vm518, %v1140, 0
        %v1146 = vsel %vm518, %v1141, 0
        %v1149 = vsel %vm525, %v1125, 0
        %v1152 = vsel %vm525, %v1126, 0
        %1154 = vmatprep.subr.bf16.mxu0 %v1152
        %1155 = vmatpush1.bf16.msra.mxu0 %v1149
        %1156 = vmatprep.subr.bf16.mxu0 0
        %1157 = vmatpush1.bf16.msra.mxu0 0
        %1158 = vmatprep.subr.bf16.mxu0 0
        %1159 = vmatpush1.bf16.msra.mxu0 0
        %1160 = vmatprep.subr.bf16.mxu0 0
        %1161 = vmatpush1.bf16.msra.mxu0 0
        %1162 = vmatprep.subr.bf16.mxu0 0
        %1163 = vmatpush1.bf16.msra.mxu0 0
        %1164 = vmatprep.subr.bf16.mxu0 0
        %1165 = vmatpush1.bf16.msra.mxu0 0
        %1166 = vmatprep.subr.bf16.mxu0 0
        %1167 = vmatpush1.bf16.msra.mxu0 0
        %1168 = vmatprep.subr.bf16.mxu0 0
        %1169 = vmatpush1.bf16.msra.mxu0 0
        %1170 = vmatprep.subr.bf16.mxu0 0
        %1171 = vmatpush1.bf16.msra.mxu0 0
        %1172 = vmatprep.subr.bf16.mxu0 0
        %1173 = vmatpush1.bf16.msra.mxu0 0
        %1174 = vmatprep.subr.bf16.mxu0 0
        %1175 = vmatpush1.bf16.msra.mxu0 0
        %1176 = vmatprep.subr.bf16.mxu0 0
        %1177 = vmatpush1.bf16.msra.mxu0 0
        %1178 = vmatprep.subr.bf16.mxu0 0
        %1179 = vmatpush1.bf16.msra.mxu0 0
        %1180 = vmatprep.subr.bf16.mxu0 0
        %1181 = vmatpush1.bf16.msra.mxu0 0
        %1182 = vmatprep.subr.bf16.mxu0 0
        %1183 = vmatpush1.bf16.msra.mxu0 0
        %1184 = vmatprep.subr.bf16.mxu0 0
        %1185 = vmatpush1.bf16.msra.mxu0 0
        %1186 = vmatprep.mubr.bf16.mxu0 0
        %1187 = vmatmul.mubr.bf16.gmra.mrb[0].mxu0 %v1143
        %v1188 = vpop.f32.mrb[0].mxu0
        %v1189 = vadd.f32 0.0, %v1188
        %v1190 = vpop.f32.mrb[0].mxu0
        %v1191 = vadd.f32 0.0, %v1190
        %v1192 = vpop.f32.mrb[0].mxu0
        %v1193 = vadd.f32 0.0, %v1192
        %v1194 = vpop.f32.mrb[0].mxu0
        %v1195 = vadd.f32 0.0, %v1194
        %1196 = vmatprep.mubr.bf16.mxu0 0
        %1197 = vmatmul.mubr.bf16.gmra.mrb[0].mxu0 %v1146
        %v1198 = vpop.f32.mrb[0].mxu0
        %v1199 = vadd.f32 0.0, %v1198
        %v1200 = vpop.f32.mrb[0].mxu0
        %v1201 = vadd.f32 0.0, %v1200
        %v1202 = vpop.f32.mrb[0].mxu0
        %v1203 = vadd.f32 0.0, %v1202
        %v1204 = vpop.f32.mrb[0].mxu0
        %v1205 = vadd.f32 0.0, %v1204
        %1206 = vdwg.mxu0
        %v1207 = vadd.f32 %v1095, %v1189
        %v1208 = vadd.f32 %v1096, %v1191
        %v1209 = vadd.f32 %v1097, %v1193
        %v1210 = vadd.f32 %v1098, %v1195
        %v1211 = vadd.f32 %v1099, %v1199
        %v1212 = vadd.f32 %v1100, %v1201
        %v1213 = vadd.f32 %v1101, %v1203
        %v1214 = vadd.f32 %v1102, %v1205
        %1215 = vrot.lane.b32.xlu0 %v442, 112
        %v1216 = vpop.permute.xlu0 %1215
        %1217 = vrot.lane.b32.xlu0 %v448, 112
        %v1218 = vpop.permute.xlu0 %1217
        %vm1219 = vcmp.lt.s32.totalorder %v455, 112
        %v1220 = vsel %vm1219, %v1216, %v1218
        %v1221 = vsel %vm1219, %v1218, %v1216
        %s1222 = scalar_lea.vmem %s5, 14
        %v1223 = vld [vmem:[%s1222] sm:$0x3]
        %v1225 = vlaneseq
        %v1226 = vshrl.u32 %v1225, 7
        %v1227 = vsub.s32 0, %v1226
        %v1228 = vrot.slane %v1223, %v1227
        %v1229 = vlaneseq
        %v1230 = vshrl.u32 %v1229, 7
        %v1231 = vsub.s32 1, %v1230
        %v1232 = vrot.slane %v1223, %v1231
        %v1235 = vmul.f32 %v1220, %v1228
        %v1236 = vmul.f32 %v1221, %v1232
        %v1237 = vpack.c.bf16 %v1235, %v1235
        %v1238 = vpack.c.bf16 %v1236, %v1236
        %s1239 = scalar_lea.vmem %s3, 112
        %v1240 = vld [vmem:[%s1239] sm:$0xf]
        %v1241 = vld [vmem:[%s1239 + $0x4] sm:$0xf]
        %v1242 = vld [vmem:[%s1239 + $0x8] sm:$0xf]
        %v1243 = vld [vmem:[%s1239 + $0xc] sm:$0xf]
        %v1248 = vunpack.c.l.b16 %v1240
        %v1249 = vunpack.c.l.b16 %v1241
        %v1250 = vunpack.c.l.b16 %v1242
        %v1251 = vunpack.c.l.b16 %v1243
        %v1252 = vpack.c.b16 %v1249, %v1248
        %v1253 = vpack.c.b16 %v1251, %v1250
        %v1255 = vsel %vm518, %v1252, 0
        %v1258 = vsel %vm518, %v1253, 0
        %v1261 = vsel %vm525, %v1237, 0
        %v1264 = vsel %vm525, %v1238, 0
        %1266 = vmatprep.subr.bf16.mxu0 %v1264
        %1267 = vmatpush1.bf16.msra.mxu0 %v1261
        %1268 = vmatprep.subr.bf16.mxu0 0
        %1269 = vmatpush1.bf16.msra.mxu0 0
        %1270 = vmatprep.subr.bf16.mxu0 0
        %1271 = vmatpush1.bf16.msra.mxu0 0
        %1272 = vmatprep.subr.bf16.mxu0 0
        %1273 = vmatpush1.bf16.msra.mxu0 0
        %1274 = vmatprep.subr.bf16.mxu0 0
        %1275 = vmatpush1.bf16.msra.mxu0 0
        %1276 = vmatprep.subr.bf16.mxu0 0
        %1277 = vmatpush1.bf16.msra.mxu0 0
        %1278 = vmatprep.subr.bf16.mxu0 0
        %1279 = vmatpush1.bf16.msra.mxu0 0
        %1280 = vmatprep.subr.bf16.mxu0 0
        %1281 = vmatpush1.bf16.msra.mxu0 0
        %1282 = vmatprep.subr.bf16.mxu0 0
        %1283 = vmatpush1.bf16.msra.mxu0 0
        %1284 = vmatprep.subr.bf16.mxu0 0
        %1285 = vmatpush1.bf16.msra.mxu0 0
        %1286 = vmatprep.subr.bf16.mxu0 0
        %1287 = vmatpush1.bf16.msra.mxu0 0
        %1288 = vmatprep.subr.bf16.mxu0 0
        %1289 = vmatpush1.bf16.msra.mxu0 0
        %1290 = vmatprep.subr.bf16.mxu0 0
        %1291 = vmatpush1.bf16.msra.mxu0 0
        %1292 = vmatprep.subr.bf16.mxu0 0
        %1293 = vmatpush1.bf16.msra.mxu0 0
        %1294 = vmatprep.subr.bf16.mxu0 0
        %1295 = vmatpush1.bf16.msra.mxu0 0
        %1296 = vmatprep.subr.bf16.mxu0 0
        %1297 = vmatpush1.bf16.msra.mxu0 0
        %1298 = vmatprep.mubr.bf16.mxu0 0
        %1299 = vmatmul.mubr.bf16.gmra.mrb[0].mxu0 %v1255
        %v1300 = vpop.f32.mrb[0].mxu0
        %v1301 = vadd.f32 0.0, %v1300
        %v1302 = vpop.f32.mrb[0].mxu0
        %v1303 = vadd.f32 0.0, %v1302
        %v1304 = vpop.f32.mrb[0].mxu0
        %v1305 = vadd.f32 0.0, %v1304
        %v1306 = vpop.f32.mrb[0].mxu0
        %v1307 = vadd.f32 0.0, %v1306
        %1308 = vmatprep.mubr.bf16.mxu0 0
        %1309 = vmatmul.mubr.bf16.gmra.mrb[0].mxu0 %v1258
        %v1310 = vpop.f32.mrb[0].mxu0
        %v1311 = vadd.f32 0.0, %v1310
        %v1312 = vpop.f32.mrb[0].mxu0
        %v1313 = vadd.f32 0.0, %v1312
        %v1314 = vpop.f32.mrb[0].mxu0
        %v1315 = vadd.f32 0.0, %v1314
        %v1316 = vpop.f32.mrb[0].mxu0
        %v1317 = vadd.f32 0.0, %v1316
        %1318 = vdwg.mxu0
        %v1319 = vadd.f32 %v1207, %v1301
        %v1320 = vadd.f32 %v1208, %v1303
        %v1321 = vadd.f32 %v1209, %v1305
        %v1322 = vadd.f32 %v1210, %v1307
        %v1323 = vadd.f32 %v1211, %v1311
        %v1324 = vadd.f32 %v1212, %v1313
        %v1325 = vadd.f32 %v1213, %v1315
        %v1326 = vadd.f32 %v1214, %v1317
        %1327 = vrot.lane.b32.xlu0 %v442, 111
        %v1328 = vpop.permute.xlu0 %1327
        %1329 = vrot.lane.b32.xlu0 %v448, 111
        %v1330 = vpop.permute.xlu0 %1329
        %vm1331 = vcmp.lt.s32.totalorder %v455, 111
        %v1332 = vsel %vm1331, %v1328, %v1330
        %v1333 = vsel %vm1331, %v1330, %v1328
        %s1334 = scalar_lea.vmem %s5, 16
        %v1335 = vld [vmem:[%s1334] sm:$0x3]
        %v1337 = vlaneseq
        %v1338 = vshrl.u32 %v1337, 7
        %v1339 = vsub.s32 0, %v1338
        %v1340 = vrot.slane %v1335, %v1339
        %v1341 = vlaneseq
        %v1342 = vshrl.u32 %v1341, 7
        %v1343 = vsub.s32 1, %v1342
        %v1344 = vrot.slane %v1335, %v1343
        %v1347 = vmul.f32 %v1332, %v1340
        %v1348 = vmul.f32 %v1333, %v1344
        %v1349 = vpack.c.bf16 %v1347, %v1347
        %v1350 = vpack.c.bf16 %v1348, %v1348
        %s1351 = scalar_lea.vmem %s3, 128
        %v1352 = vld [vmem:[%s1351] sm:$0xf]
        %v1353 = vld [vmem:[%s1351 + $0x4] sm:$0xf]
        %v1354 = vld [vmem:[%s1351 + $0x8] sm:$0xf]
        %v1355 = vld [vmem:[%s1351 + $0xc] sm:$0xf]
        %v1360 = vunpack.c.l.b16 %v1352
        %v1361 = vunpack.c.l.b16 %v1353
        %v1362 = vunpack.c.l.b16 %v1354
        %v1363 = vunpack.c.l.b16 %v1355
        %v1364 = vpack.c.b16 %v1361, %v1360
        %v1365 = vpack.c.b16 %v1363, %v1362
        %v1367 = vsel %vm518, %v1364, 0
        %v1370 = vsel %vm518, %v1365, 0
        %v1373 = vsel %vm525, %v1349, 0
        %v1376 = vsel %vm525, %v1350, 0
        %1378 = vmatprep.subr.bf16.mxu0 %v1376
        %1379 = vmatpush1.bf16.msra.mxu0 %v1373
        %1380 = vmatprep.subr.bf16.mxu0 0
        %1381 = vmatpush1.bf16.msra.mxu0 0
        %1382 = vmatprep.subr.bf16.mxu0 0
        %1383 = vmatpush1.bf16.msra.mxu0 0
        %1384 = vmatprep.subr.bf16.mxu0 0
        %1385 = vmatpush1.bf16.msra.mxu0 0
        %1386 = vmatprep.subr.bf16.mxu0 0
        %1387 = vmatpush1.bf16.msra.mxu0 0
        %1388 = vmatprep.subr.bf16.mxu0 0
        %1389 = vmatpush1.bf16.msra.mxu0 0
        %1390 = vmatprep.subr.bf16.mxu0 0
        %1391 = vmatpush1.bf16.msra.mxu0 0
        %1392 = vmatprep.subr.bf16.mxu0 0
        %1393 = vmatpush1.bf16.msra.mxu0 0
        %1394 = vmatprep.subr.bf16.mxu0 0
        %1395 = vmatpush1.bf16.msra.mxu0 0
        %1396 = vmatprep.subr.bf16.mxu0 0
        %1397 = vmatpush1.bf16.msra.mxu0 0
        %1398 = vmatprep.subr.bf16.mxu0 0
        %1399 = vmatpush1.bf16.msra.mxu0 0
        %1400 = vmatprep.subr.bf16.mxu0 0
        %1401 = vmatpush1.bf16.msra.mxu0 0
        %1402 = vmatprep.subr.bf16.mxu0 0
        %1403 = vmatpush1.bf16.msra.mxu0 0
        %1404 = vmatprep.subr.bf16.mxu0 0
        %1405 = vmatpush1.bf16.msra.mxu0 0
        %1406 = vmatprep.subr.bf16.mxu0 0
        %1407 = vmatpush1.bf16.msra.mxu0 0
        %1408 = vmatprep.subr.bf16.mxu0 0
        %1409 = vmatpush1.bf16.msra.mxu0 0
        %1410 = vmatprep.mubr.bf16.mxu0 0
        %1411 = vmatmul.mubr.bf16.gmra.mrb[0].mxu0 %v1367
        %v1412 = vpop.f32.mrb[0].mxu0
        %v1413 = vadd.f32 0.0, %v1412
        %v1414 = vpop.f32.mrb[0].mxu0
        %v1415 = vadd.f32 0.0, %v1414
        %v1416 = vpop.f32.mrb[0].mxu0
        %v1417 = vadd.f32 0.0, %v1416
        %v1418 = vpop.f32.mrb[0].mxu0
        %v1419 = vadd.f32 0.0, %v1418
        %1420 = vmatprep.mubr.bf16.mxu0 0
        %1421 = vmatmul.mubr.bf16.gmra.mrb[0].mxu0 %v1370
        %v1422 = vpop.f32.mrb[0].mxu0
        %v1423 = vadd.f32 0.0, %v1422
        %v1424 = vpop.f32.mrb[0].mxu0
        %v1425 = vadd.f32 0.0, %v1424
        %v1426 = vpop.f32.mrb[0].mxu0
        %v1427 = vadd.f32 0.0, %v1426
        %v1428 = vpop.f32.mrb[0].mxu0
        %v1429 = vadd.f32 0.0, %v1428
        %1430 = vdwg.mxu0
        %v1431 = vadd.f32 %v1319, %v1413
        %v1432 = vadd.f32 %v1320, %v1415
        %v1433 = vadd.f32 %v1321, %v1417
        %v1434 = vadd.f32 %v1322, %v1419
        %v1435 = vadd.f32 %v1323, %v1423
        %v1436 = vadd.f32 %v1324, %v1425
        %v1437 = vadd.f32 %v1325, %v1427
        %v1438 = vadd.f32 %v1326, %v1429
        %v1440 = vcombine.high %v446, %v446
        %1442 = vrot.lane.b32.xlu0 %v446, 17
        %v1443 = vpop.permute.xlu0 %1442
        %1444 = vrot.lane.b32.xlu0 %v1440, 17
        %v1445 = vpop.permute.xlu0 %1444
        %v1446 = vsel %vm456, %v1443, %v1445
        %v1447 = vsel %vm456, %v1445, %v1443
        %v1448 = vld [vmem:[%s6] sm:$0x3]
        %v1450 = vlaneseq
        %v1451 = vshrl.u32 %v1450, 7
        %v1452 = vsub.s32 0, %v1451
        %v1453 = vrot.slane %v1448, %v1452
        %v1454 = vlaneseq
        %v1455 = vshrl.u32 %v1454, 7
        %v1456 = vsub.s32 1, %v1455
        %v1457 = vrot.slane %v1448, %v1456
        %v1460 = vmul.f32 %v1447, %v1453
        %v1461 = vmul.f32 %v1446, %v1457
        %v1462 = vpack.c.bf16 %v1460, %v1460
        %v1463 = vpack.c.bf16 %v1461, %v1461
        %v1464 = vld [vmem:[%s4] sm:$0xf]
        %v1465 = vld [vmem:[%s4 + $0x4] sm:$0xf]
        %v1466 = vld [vmem:[%s4 + $0x8] sm:$0xf]
        %v1467 = vld [vmem:[%s4 + $0xc] sm:$0xf]
        %v1472 = vunpack.c.l.b16 %v1464
        %v1473 = vunpack.c.l.b16 %v1465
        %v1474 = vunpack.c.l.b16 %v1466
        %v1475 = vunpack.c.l.b16 %v1467
        %v1476 = vpack.c.b16 %v1473, %v1472
        %v1477 = vpack.c.b16 %v1475, %v1474
        %v1479 = vsel %vm518, %v1476, 0
        %v1482 = vsel %vm518, %v1477, 0
        %v1485 = vsel %vm525, %v1462, 0
        %v1488 = vsel %vm525, %v1463, 0
        %1490 = vmatprep.subr.bf16.mxu0 %v1488
        %1491 = vmatpush1.bf16.msra.mxu0 %v1485
        %1492 = vmatprep.subr.bf16.mxu0 0
        %1493 = vmatpush1.bf16.msra.mxu0 0
        %1494 = vmatprep.subr.bf16.mxu0 0
        %1495 = vmatpush1.bf16.msra.mxu0 0
        %1496 = vmatprep.subr.bf16.mxu0 0
        %1497 = vmatpush1.bf16.msra.mxu0 0
        %1498 = vmatprep.subr.bf16.mxu0 0
        %1499 = vmatpush1.bf16.msra.mxu0 0
        %1500 = vmatprep.subr.bf16.mxu0 0
        %1501 = vmatpush1.bf16.msra.mxu0 0
        %1502 = vmatprep.subr.bf16.mxu0 0
        %1503 = vmatpush1.bf16.msra.mxu0 0
        %1504 = vmatprep.subr.bf16.mxu0 0
        %1505 = vmatpush1.bf16.msra.mxu0 0
        %1506 = vmatprep.subr.bf16.mxu0 0
        %1507 = vmatpush1.bf16.msra.mxu0 0
        %1508 = vmatprep.subr.bf16.mxu0 0
        %1509 = vmatpush1.bf16.msra.mxu0 0
        %1510 = vmatprep.subr.bf16.mxu0 0
        %1511 = vmatpush1.bf16.msra.mxu0 0
        %1512 = vmatprep.subr.bf16.mxu0 0
        %1513 = vmatpush1.bf16.msra.mxu0 0
        %1514 = vmatprep.subr.bf16.mxu0 0
        %1515 = vmatpush1.bf16.msra.mxu0 0
        %1516 = vmatprep.subr.bf16.mxu0 0
        %1517 = vmatpush1.bf16.msra.mxu0 0
        %1518 = vmatprep.subr.bf16.mxu0 0
        %1519 = vmatpush1.bf16.msra.mxu0 0
        %1520 = vmatprep.subr.bf16.mxu0 0
        %1521 = vmatpush1.bf16.msra.mxu0 0
        %1522 = vmatprep.mubr.bf16.mxu0 0
        %1523 = vmatmul.mubr.bf16.gmra.mrb[0].mxu0 %v1479
        %v1524 = vpop.f32.mrb[0].mxu0
        %v1525 = vadd.f32 0.0, %v1524
        %v1526 = vpop.f32.mrb[0].mxu0
        %v1527 = vadd.f32 0.0, %v1526
        %v1528 = vpop.f32.mrb[0].mxu0
        %v1529 = vadd.f32 0.0, %v1528
        %v1530 = vpop.f32.mrb[0].mxu0
        %v1531 = vadd.f32 0.0, %v1530
        %1532 = vmatprep.mubr.bf16.mxu0 0
        %1533 = vmatmul.mubr.bf16.gmra.mrb[0].mxu0 %v1482
        %v1534 = vpop.f32.mrb[0].mxu0
        %v1535 = vadd.f32 0.0, %v1534
        %v1536 = vpop.f32.mrb[0].mxu0
        %v1537 = vadd.f32 0.0, %v1536
        %v1538 = vpop.f32.mrb[0].mxu0
        %v1539 = vadd.f32 0.0, %v1538
        %v1540 = vpop.f32.mrb[0].mxu0
        %v1541 = vadd.f32 0.0, %v1540
        %1542 = vdwg.mxu0
        %v1543 = vadd.f32 %v1431, %v1525
        %v1544 = vadd.f32 %v1432, %v1527
        %v1545 = vadd.f32 %v1433, %v1529
        %v1546 = vadd.f32 %v1434, %v1531
        %v1547 = vadd.f32 %v1435, %v1535
        %v1548 = vadd.f32 %v1436, %v1537
        %v1549 = vadd.f32 %v1437, %v1539
        %v1550 = vadd.f32 %v1438, %v1541
        %v1552 = vcombine.high %v445, %v445
        %1554 = vrot.lane.b32.xlu0 %v445, 16
        %v1555 = vpop.permute.xlu0 %1554
        %1556 = vrot.lane.b32.xlu0 %v1552, 16
        %v1557 = vpop.permute.xlu0 %1556
        %v1558 = vsel %vm483, %v1555, %v1557
        %v1559 = vsel %vm483, %v1557, %v1555
        %s1560 = scalar_lea.vmem %s6, 2
        %v1561 = vld [vmem:[%s1560] sm:$0x3]
        %v1563 = vlaneseq
        %v1564 = vshrl.u32 %v1563, 7
        %v1565 = vsub.s32 0, %v1564
        %v1566 = vrot.slane %v1561, %v1565
        %v1567 = vlaneseq
        %v1568 = vshrl.u32 %v1567, 7
        %v1569 = vsub.s32 1, %v1568
        %v1570 = vrot.slane %v1561, %v1569
        %v1573 = vmul.f32 %v1559, %v1566
        %v1574 = vmul.f32 %v1558, %v1570
        %v1575 = vpack.c.bf16 %v1573, %v1573
        %v1576 = vpack.c.bf16 %v1574, %v1574
        %s1577 = scalar_lea.vmem %s4, 16
        %v1578 = vld [vmem:[%s1577] sm:$0xf]
        %v1579 = vld [vmem:[%s1577 + $0x4] sm:$0xf]
        %v1580 = vld [vmem:[%s1577 + $0x8] sm:$0xf]
        %v1581 = vld [vmem:[%s1577 + $0xc] sm:$0xf]
        %v1586 = vunpack.c.l.b16 %v1578
        %v1587 = vunpack.c.l.b16 %v1579
        %v1588 = vunpack.c.l.b16 %v1580
        %v1589 = vunpack.c.l.b16 %v1581
        %v1590 = vpack.c.b16 %v1587, %v1586
        %v1591 = vpack.c.b16 %v1589, %v1588
        %v1593 = vsel %vm518, %v1590, 0
        %v1596 = vsel %vm518, %v1591, 0
        %v1599 = vsel %vm525, %v1575, 0
        %v1602 = vsel %vm525, %v1576, 0
        %1604 = vmatprep.subr.bf16.mxu0 %v1602
        %1605 = vmatpush1.bf16.msra.mxu0 %v1599
        %1606 = vmatprep.subr.bf16.mxu0 0
        %1607 = vmatpush1.bf16.msra.mxu0 0
        %1608 = vmatprep.subr.bf16.mxu0 0
        %1609 = vmatpush1.bf16.msra.mxu0 0
        %1610 = vmatprep.subr.bf16.mxu0 0
        %1611 = vmatpush1.bf16.msra.mxu0 0
        %1612 = vmatprep.subr.bf16.mxu0 0
        %1613 = vmatpush1.bf16.msra.mxu0 0
        %1614 = vmatprep.subr.bf16.mxu0 0
        %1615 = vmatpush1.bf16.msra.mxu0 0
        %1616 = vmatprep.subr.bf16.mxu0 0
        %1617 = vmatpush1.bf16.msra.mxu0 0
        %1618 = vmatprep.subr.bf16.mxu0 0
        %1619 = vmatpush1.bf16.msra.mxu0 0
        %1620 = vmatprep.subr.bf16.mxu0 0
        %1621 = vmatpush1.bf16.msra.mxu0 0
        %1622 = vmatprep.subr.bf16.mxu0 0
        %1623 = vmatpush1.bf16.msra.mxu0 0
        %1624 = vmatprep.subr.bf16.mxu0 0
        %1625 = vmatpush1.bf16.msra.mxu0 0
        %1626 = vmatprep.subr.bf16.mxu0 0
        %1627 = vmatpush1.bf16.msra.mxu0 0
        %1628 = vmatprep.subr.bf16.mxu0 0
        %1629 = vmatpush1.bf16.msra.mxu0 0
        %1630 = vmatprep.subr.bf16.mxu0 0
        %1631 = vmatpush1.bf16.msra.mxu0 0
        %1632 = vmatprep.subr.bf16.mxu0 0
        %1633 = vmatpush1.bf16.msra.mxu0 0
        %1634 = vmatprep.subr.bf16.mxu0 0
        %1635 = vmatpush1.bf16.msra.mxu0 0
        %1636 = vmatprep.mubr.bf16.mxu0 0
        %1637 = vmatmul.mubr.bf16.gmra.mrb[0].mxu0 %v1593
        %v1638 = vpop.f32.mrb[0].mxu0
        %v1639 = vadd.f32 0.0, %v1638
        %v1640 = vpop.f32.mrb[0].mxu0
        %v1641 = vadd.f32 0.0, %v1640
        %v1642 = vpop.f32.mrb[0].mxu0
        %v1643 = vadd.f32 0.0, %v1642
        %v1644 = vpop.f32.mrb[0].mxu0
        %v1645 = vadd.f32 0.0, %v1644
        %1646 = vmatprep.mubr.bf16.mxu0 0
        %1647 = vmatmul.mubr.bf16.gmra.mrb[0].mxu0 %v1596
        %v1648 = vpop.f32.mrb[0].mxu0
        %v1649 = vadd.f32 0.0, %v1648
        %v1650 = vpop.f32.mrb[0].mxu0
        %v1651 = vadd.f32 0.0, %v1650
        %v1652 = vpop.f32.mrb[0].mxu0
        %v1653 = vadd.f32 0.0, %v1652
        %v1654 = vpop.f32.mrb[0].mxu0
        %v1655 = vadd.f32 0.0, %v1654
        %1656 = vdwg.mxu0
        %v1657 = vadd.f32 %v1543, %v1639
        %v1658 = vadd.f32 %v1544, %v1641
        %v1659 = vadd.f32 %v1545, %v1643
        %v1660 = vadd.f32 %v1546, %v1645
        %v1661 = vadd.f32 %v1547, %v1649
        %v1662 = vadd.f32 %v1548, %v1651
        %v1663 = vadd.f32 %v1549, %v1653
        %v1664 = vadd.f32 %v1550, %v1655
        %1665 = vrot.lane.b32.xlu0 %v446, 16
        %v1666 = vpop.permute.xlu0 %1665
        %1667 = vrot.lane.b32.xlu0 %v1440, 16
        %v1668 = vpop.permute.xlu0 %1667
        %v1669 = vsel %vm483, %v1666, %v1668
        %v1670 = vsel %vm483, %v1668, %v1666
        %s1671 = scalar_lea.vmem %s6, 4
        %v1672 = vld [vmem:[%s1671] sm:$0x3]
        %v1674 = vlaneseq
        %v1675 = vshrl.u32 %v1674, 7
        %v1676 = vsub.s32 0, %v1675
        %v1677 = vrot.slane %v1672, %v1676
        %v1678 = vlaneseq
        %v1679 = vshrl.u32 %v1678, 7
        %v1680 = vsub.s32 1, %v1679
        %v1681 = vrot.slane %v1672, %v1680
        %v1684 = vmul.f32 %v1670, %v1677
        %v1685 = vmul.f32 %v1669, %v1681
        %v1686 = vpack.c.bf16 %v1684, %v1684
        %v1687 = vpack.c.bf16 %v1685, %v1685
        %s1688 = scalar_lea.vmem %s4, 32
        %v1689 = vld [vmem:[%s1688] sm:$0xf]
        %v1690 = vld [vmem:[%s1688 + $0x4] sm:$0xf]
        %v1691 = vld [vmem:[%s1688 + $0x8] sm:$0xf]
        %v1692 = vld [vmem:[%s1688 + $0xc] sm:$0xf]
        %v1697 = vunpack.c.l.b16 %v1689
        %v1698 = vunpack.c.l.b16 %v1690
        %v1699 = vunpack.c.l.b16 %v1691
        %v1700 = vunpack.c.l.b16 %v1692
        %v1701 = vpack.c.b16 %v1698, %v1697
        %v1702 = vpack.c.b16 %v1700, %v1699
        %v1704 = vsel %vm518, %v1701, 0
        %v1707 = vsel %vm518, %v1702, 0
        %v1710 = vsel %vm525, %v1686, 0
        %v1713 = vsel %vm525, %v1687, 0
        %1715 = vmatprep.subr.bf16.mxu0 %v1713
        %1716 = vmatpush1.bf16.msra.mxu0 %v1710
        %1717 = vmatprep.subr.bf16.mxu0 0
        %1718 = vmatpush1.bf16.msra.mxu0 0
        %1719 = vmatprep.subr.bf16.mxu0 0
        %1720 = vmatpush1.bf16.msra.mxu0 0
        %1721 = vmatprep.subr.bf16.mxu0 0
        %1722 = vmatpush1.bf16.msra.mxu0 0
        %1723 = vmatprep.subr.bf16.mxu0 0
        %1724 = vmatpush1.bf16.msra.mxu0 0
        %1725 = vmatprep.subr.bf16.mxu0 0
        %1726 = vmatpush1.bf16.msra.mxu0 0
        %1727 = vmatprep.subr.bf16.mxu0 0
        %1728 = vmatpush1.bf16.msra.mxu0 0
        %1729 = vmatprep.subr.bf16.mxu0 0
        %1730 = vmatpush1.bf16.msra.mxu0 0
        %1731 = vmatprep.subr.bf16.mxu0 0
        %1732 = vmatpush1.bf16.msra.mxu0 0
        %1733 = vmatprep.subr.bf16.mxu0 0
        %1734 = vmatpush1.bf16.msra.mxu0 0
        %1735 = vmatprep.subr.bf16.mxu0 0
        %1736 = vmatpush1.bf16.msra.mxu0 0
        %1737 = vmatprep.subr.bf16.mxu0 0
        %1738 = vmatpush1.bf16.msra.mxu0 0
        %1739 = vmatprep.subr.bf16.mxu0 0
        %1740 = vmatpush1.bf16.msra.mxu0 0
        %1741 = vmatprep.subr.bf16.mxu0 0
        %1742 = vmatpush1.bf16.msra.mxu0 0
        %1743 = vmatprep.subr.bf16.mxu0 0
        %1744 = vmatpush1.bf16.msra.mxu0 0
        %1745 = vmatprep.subr.bf16.mxu0 0
        %1746 = vmatpush1.bf16.msra.mxu0 0
        %1747 = vmatprep.mubr.bf16.mxu0 0
        %1748 = vmatmul.mubr.bf16.gmra.mrb[0].mxu0 %v1704
        %v1749 = vpop.f32.mrb[0].mxu0
        %v1750 = vadd.f32 0.0, %v1749
        %v1751 = vpop.f32.mrb[0].mxu0
        %v1752 = vadd.f32 0.0, %v1751
        %v1753 = vpop.f32.mrb[0].mxu0
        %v1754 = vadd.f32 0.0, %v1753
        %v1755 = vpop.f32.mrb[0].mxu0
        %v1756 = vadd.f32 0.0, %v1755
        %1757 = vmatprep.mubr.bf16.mxu0 0
        %1758 = vmatmul.mubr.bf16.gmra.mrb[0].mxu0 %v1707
        %v1759 = vpop.f32.mrb[0].mxu0
        %v1760 = vadd.f32 0.0, %v1759
        %v1761 = vpop.f32.mrb[0].mxu0
        %v1762 = vadd.f32 0.0, %v1761
        %v1763 = vpop.f32.mrb[0].mxu0
        %v1764 = vadd.f32 0.0, %v1763
        %v1765 = vpop.f32.mrb[0].mxu0
        %v1766 = vadd.f32 0.0, %v1765
        %1767 = vdwg.mxu0
        %v1768 = vadd.f32 %v1657, %v1750
        %v1769 = vadd.f32 %v1658, %v1752
        %v1770 = vadd.f32 %v1659, %v1754
        %v1771 = vadd.f32 %v1660, %v1756
        %v1772 = vadd.f32 %v1661, %v1760
        %v1773 = vadd.f32 %v1662, %v1762
        %v1774 = vadd.f32 %v1663, %v1764
        %v1775 = vadd.f32 %v1664, %v1766
        %v1777 = vcombine.high %v444, %v444
        %1779 = vrot.lane.b32.xlu0 %v444, 1
        %v1780 = vpop.permute.xlu0 %1779
        %1781 = vrot.lane.b32.xlu0 %v1777, 1
        %v1782 = vpop.permute.xlu0 %1781
        %v1783 = vsel %vm776, %v1780, %v1782
        %v1784 = vsel %vm776, %v1782, %v1780
        %s1785 = scalar_lea.vmem %s6, 6
        %v1786 = vld [vmem:[%s1785] sm:$0x3]
        %v1788 = vlaneseq
        %v1789 = vshrl.u32 %v1788, 7
        %v1790 = vsub.s32 0, %v1789
        %v1791 = vrot.slane %v1786, %v1790
        %v1792 = vlaneseq
        %v1793 = vshrl.u32 %v1792, 7
        %v1794 = vsub.s32 1, %v1793
        %v1795 = vrot.slane %v1786, %v1794
        %v1798 = vmul.f32 %v1784, %v1791
        %v1799 = vmul.f32 %v1783, %v1795
        %v1800 = vpack.c.bf16 %v1798, %v1798
        %v1801 = vpack.c.bf16 %v1799, %v1799
        %s1802 = scalar_lea.vmem %s4, 48
        %v1803 = vld [vmem:[%s1802] sm:$0xf]
        %v1804 = vld [vmem:[%s1802 + $0x4] sm:$0xf]
        %v1805 = vld [vmem:[%s1802 + $0x8] sm:$0xf]
        %v1806 = vld [vmem:[%s1802 + $0xc] sm:$0xf]
        %v1811 = vunpack.c.l.b16 %v1803
        %v1812 = vunpack.c.l.b16 %v1804
        %v1813 = vunpack.c.l.b16 %v1805
        %v1814 = vunpack.c.l.b16 %v1806
        %v1815 = vpack.c.b16 %v1812, %v1811
        %v1816 = vpack.c.b16 %v1814, %v1813
        %v1818 = vsel %vm518, %v1815, 0
        %v1821 = vsel %vm518, %v1816, 0
        %v1824 = vsel %vm525, %v1800, 0
        %v1827 = vsel %vm525, %v1801, 0
        %1829 = vmatprep.subr.bf16.mxu0 %v1827
        %1830 = vmatpush1.bf16.msra.mxu0 %v1824
        %1831 = vmatprep.subr.bf16.mxu0 0
        %1832 = vmatpush1.bf16.msra.mxu0 0
        %1833 = vmatprep.subr.bf16.mxu0 0
        %1834 = vmatpush1.bf16.msra.mxu0 0
        %1835 = vmatprep.subr.bf16.mxu0 0
        %1836 = vmatpush1.bf16.msra.mxu0 0
        %1837 = vmatprep.subr.bf16.mxu0 0
        %1838 = vmatpush1.bf16.msra.mxu0 0
        %1839 = vmatprep.subr.bf16.mxu0 0
        %1840 = vmatpush1.bf16.msra.mxu0 0
        %1841 = vmatprep.subr.bf16.mxu0 0
        %1842 = vmatpush1.bf16.msra.mxu0 0
        %1843 = vmatprep.subr.bf16.mxu0 0
        %1844 = vmatpush1.bf16.msra.mxu0 0
        %1845 = vmatprep.subr.bf16.mxu0 0
        %1846 = vmatpush1.bf16.msra.mxu0 0
        %1847 = vmatprep.subr.bf16.mxu0 0
        %1848 = vmatpush1.bf16.msra.mxu0 0
        %1849 = vmatprep.subr.bf16.mxu0 0
        %1850 = vmatpush1.bf16.msra.mxu0 0
        %1851 = vmatprep.subr.bf16.mxu0 0
        %1852 = vmatpush1.bf16.msra.mxu0 0
        %1853 = vmatprep.subr.bf16.mxu0 0
        %1854 = vmatpush1.bf16.msra.mxu0 0
        %1855 = vmatprep.subr.bf16.mxu0 0
        %1856 = vmatpush1.bf16.msra.mxu0 0
        %1857 = vmatprep.subr.bf16.mxu0 0
        %1858 = vmatpush1.bf16.msra.mxu0 0
        %1859 = vmatprep.subr.bf16.mxu0 0
        %1860 = vmatpush1.bf16.msra.mxu0 0
        %1861 = vmatprep.mubr.bf16.mxu0 0
        %1862 = vmatmul.mubr.bf16.gmra.mrb[0].mxu0 %v1818
        %v1863 = vpop.f32.mrb[0].mxu0
        %v1864 = vadd.f32 0.0, %v1863
        %v1865 = vpop.f32.mrb[0].mxu0
        %v1866 = vadd.f32 0.0, %v1865
        %v1867 = vpop.f32.mrb[0].mxu0
        %v1868 = vadd.f32 0.0, %v1867
        %v1869 = vpop.f32.mrb[0].mxu0
        %v1870 = vadd.f32 0.0, %v1869
        %1871 = vmatprep.mubr.bf16.mxu0 0
        %1872 = vmatmul.mubr.bf16.gmra.mrb[0].mxu0 %v1821
        %v1873 = vpop.f32.mrb[0].mxu0
        %v1874 = vadd.f32 0.0, %v1873
        %v1875 = vpop.f32.mrb[0].mxu0
        %v1876 = vadd.f32 0.0, %v1875
        %v1877 = vpop.f32.mrb[0].mxu0
        %v1878 = vadd.f32 0.0, %v1877
        %v1879 = vpop.f32.mrb[0].mxu0
        %v1880 = vadd.f32 0.0, %v1879
        %1881 = vdwg.mxu0
        %v1882 = vadd.f32 %v1768, %v1864
        %v1883 = vadd.f32 %v1769, %v1866
        %v1884 = vadd.f32 %v1770, %v1868
        %v1885 = vadd.f32 %v1771, %v1870
        %v1886 = vadd.f32 %v1772, %v1874
        %v1887 = vadd.f32 %v1773, %v1876
        %v1888 = vadd.f32 %v1774, %v1878
        %v1889 = vadd.f32 %v1775, %v1880
        %s1890 = scalar_lea.vmem %s6, 8
        %v1891 = vld [vmem:[%s1890] sm:$0x3]
        %v1893 = vlaneseq
        %v1894 = vshrl.u32 %v1893, 7
        %v1895 = vsub.s32 0, %v1894
        %v1896 = vrot.slane %v1891, %v1895
        %v1897 = vlaneseq
        %v1898 = vshrl.u32 %v1897, 7
        %v1899 = vsub.s32 1, %v1898
        %v1900 = vrot.slane %v1891, %v1899
        %v1901 = vcombine.low %v1896, %v1900
        %v1903 = vmul.f32 %v443, %v1901
        %v1905 = vcombine.high %v1903, %v1903
        %v1907 = vpack.c.bf16 %v1903, %v1903
        %v1908 = vpack.c.bf16 %v1905, %v1905
        %s1909 = scalar_lea.vmem %s4, 64
        %v1910 = vld [vmem:[%s1909] sm:$0xf]
        %v1911 = vld [vmem:[%s1909 + $0x4] sm:$0xf]
        %v1912 = vld [vmem:[%s1909 + $0x8] sm:$0xf]
        %v1913 = vld [vmem:[%s1909 + $0xc] sm:$0xf]
        %v1918 = vunpack.c.l.b16 %v1910
        %v1919 = vunpack.c.l.b16 %v1911
        %v1920 = vunpack.c.l.b16 %v1912
        %v1921 = vunpack.c.l.b16 %v1913
        %v1922 = vpack.c.b16 %v1919, %v1918
        %v1923 = vpack.c.b16 %v1921, %v1920
        %v1925 = vsel %vm518, %v1922, 0
        %v1928 = vsel %vm518, %v1923, 0
        %v1931 = vsel %vm525, %v1907, 0
        %v1934 = vsel %vm525, %v1908, 0
        %1936 = vmatprep.subr.bf16.mxu0 %v1934
        %1937 = vmatpush1.bf16.msra.mxu0 %v1931
        %1938 = vmatprep.subr.bf16.mxu0 0
        %1939 = vmatpush1.bf16.msra.mxu0 0
        %1940 = vmatprep.subr.bf16.mxu0 0
        %1941 = vmatpush1.bf16.msra.mxu0 0
        %1942 = vmatprep.subr.bf16.mxu0 0
        %1943 = vmatpush1.bf16.msra.mxu0 0
        %1944 = vmatprep.subr.bf16.mxu0 0
        %1945 = vmatpush1.bf16.msra.mxu0 0
        %1946 = vmatprep.subr.bf16.mxu0 0
        %1947 = vmatpush1.bf16.msra.mxu0 0
        %1948 = vmatprep.subr.bf16.mxu0 0
        %1949 = vmatpush1.bf16.msra.mxu0 0
        %1950 = vmatprep.subr.bf16.mxu0 0
        %1951 = vmatpush1.bf16.msra.mxu0 0
        %1952 = vmatprep.subr.bf16.mxu0 0
        %1953 = vmatpush1.bf16.msra.mxu0 0
        %1954 = vmatprep.subr.bf16.mxu0 0
        %1955 = vmatpush1.bf16.msra.mxu0 0
        %1956 = vmatprep.subr.bf16.mxu0 0
        %1957 = vmatpush1.bf16.msra.mxu0 0
        %1958 = vmatprep.subr.bf16.mxu0 0
        %1959 = vmatpush1.bf16.msra.mxu0 0
        %1960 = vmatprep.subr.bf16.mxu0 0
        %1961 = vmatpush1.bf16.msra.mxu0 0
        %1962 = vmatprep.subr.bf16.mxu0 0
        %1963 = vmatpush1.bf16.msra.mxu0 0
        %1964 = vmatprep.subr.bf16.mxu0 0
        %1965 = vmatpush1.bf16.msra.mxu0 0
        %1966 = vmatprep.subr.bf16.mxu0 0
        %1967 = vmatpush1.bf16.msra.mxu0 0
        %1968 = vmatprep.mubr.bf16.mxu0 0
        %1969 = vmatmul.mubr.bf16.gmra.mrb[0].mxu0 %v1925
        %v1970 = vpop.f32.mrb[0].mxu0
        %v1971 = vadd.f32 0.0, %v1970
        %v1972 = vpop.f32.mrb[0].mxu0
        %v1973 = vadd.f32 0.0, %v1972
        %v1974 = vpop.f32.mrb[0].mxu0
        %v1975 = vadd.f32 0.0, %v1974
        %v1976 = vpop.f32.mrb[0].mxu0
        %v1977 = vadd.f32 0.0, %v1976
        %1978 = vmatprep.mubr.bf16.mxu0 0
        %1979 = vmatmul.mubr.bf16.gmra.mrb[0].mxu0 %v1928
        %v1980 = vpop.f32.mrb[0].mxu0
        %v1981 = vadd.f32 0.0, %v1980
        %v1982 = vpop.f32.mrb[0].mxu0
        %v1983 = vadd.f32 0.0, %v1982
        %v1984 = vpop.f32.mrb[0].mxu0
        %v1985 = vadd.f32 0.0, %v1984
        %v1986 = vpop.f32.mrb[0].mxu0
        %v1987 = vadd.f32 0.0, %v1986
        %1988 = vdwg.mxu0
        %v1989 = vadd.f32 %v1882, %v1971
        %v1990 = vadd.f32 %v1883, %v1973
        %v1991 = vadd.f32 %v1884, %v1975
        %v1992 = vadd.f32 %v1885, %v1977
        %v1993 = vadd.f32 %v1886, %v1981
        %v1994 = vadd.f32 %v1887, %v1983
        %v1995 = vadd.f32 %v1888, %v1985
        %v1996 = vadd.f32 %v1889, %v1987
        %s1997 = scalar_lea.vmem %s6, 10
        %v1998 = vld [vmem:[%s1997] sm:$0x3]
        %v2000 = vlaneseq
        %v2001 = vshrl.u32 %v2000, 7
        %v2002 = vsub.s32 0, %v2001
        %v2003 = vrot.slane %v1998, %v2002
        %v2004 = vlaneseq
        %v2005 = vshrl.u32 %v2004, 7
        %v2006 = vsub.s32 1, %v2005
        %v2007 = vrot.slane %v1998, %v2006
        %v2008 = vcombine.low %v2003, %v2007
        %v2010 = vmul.f32 %v444, %v2008
        %v2012 = vcombine.high %v2010, %v2010
        %v2014 = vpack.c.bf16 %v2010, %v2010
        %v2015 = vpack.c.bf16 %v2012, %v2012
        %s2016 = scalar_lea.vmem %s4, 80
        %v2017 = vld [vmem:[%s2016] sm:$0xf]
        %v2018 = vld [vmem:[%s2016 + $0x4] sm:$0xf]
        %v2019 = vld [vmem:[%s2016 + $0x8] sm:$0xf]
        %v2020 = vld [vmem:[%s2016 + $0xc] sm:$0xf]
        %v2025 = vunpack.c.l.b16 %v2017
        %v2026 = vunpack.c.l.b16 %v2018
        %v2027 = vunpack.c.l.b16 %v2019
        %v2028 = vunpack.c.l.b16 %v2020
        %v2029 = vpack.c.b16 %v2026, %v2025
        %v2030 = vpack.c.b16 %v2028, %v2027
        %v2032 = vsel %vm518, %v2029, 0
        %v2035 = vsel %vm518, %v2030, 0
        %v2038 = vsel %vm525, %v2014, 0
        %v2041 = vsel %vm525, %v2015, 0
        %2043 = vmatprep.subr.bf16.mxu0 %v2041
        %2044 = vmatpush1.bf16.msra.mxu0 %v2038
        %2045 = vmatprep.subr.bf16.mxu0 0
        %2046 = vmatpush1.bf16.msra.mxu0 0
        %2047 = vmatprep.subr.bf16.mxu0 0
        %2048 = vmatpush1.bf16.msra.mxu0 0
        %2049 = vmatprep.subr.bf16.mxu0 0
        %2050 = vmatpush1.bf16.msra.mxu0 0
        %2051 = vmatprep.subr.bf16.mxu0 0
        %2052 = vmatpush1.bf16.msra.mxu0 0
        %2053 = vmatprep.subr.bf16.mxu0 0
        %2054 = vmatpush1.bf16.msra.mxu0 0
        %2055 = vmatprep.subr.bf16.mxu0 0
        %2056 = vmatpush1.bf16.msra.mxu0 0
        %2057 = vmatprep.subr.bf16.mxu0 0
        %2058 = vmatpush1.bf16.msra.mxu0 0
        %2059 = vmatprep.subr.bf16.mxu0 0
        %2060 = vmatpush1.bf16.msra.mxu0 0
        %2061 = vmatprep.subr.bf16.mxu0 0
        %2062 = vmatpush1.bf16.msra.mxu0 0
        %2063 = vmatprep.subr.bf16.mxu0 0
        %2064 = vmatpush1.bf16.msra.mxu0 0
        %2065 = vmatprep.subr.bf16.mxu0 0
        %2066 = vmatpush1.bf16.msra.mxu0 0
        %2067 = vmatprep.subr.bf16.mxu0 0
        %2068 = vmatpush1.bf16.msra.mxu0 0
        %2069 = vmatprep.subr.bf16.mxu0 0
        %2070 = vmatpush1.bf16.msra.mxu0 0
        %2071 = vmatprep.subr.bf16.mxu0 0
        %2072 = vmatpush1.bf16.msra.mxu0 0
        %2073 = vmatprep.subr.bf16.mxu0 0
        %2074 = vmatpush1.bf16.msra.mxu0 0
        %2075 = vmatprep.mubr.bf16.mxu0 0
        %2076 = vmatmul.mubr.bf16.gmra.mrb[0].mxu0 %v2032
        %v2077 = vpop.f32.mrb[0].mxu0
        %v2078 = vadd.f32 0.0, %v2077
        %v2079 = vpop.f32.mrb[0].mxu0
        %v2080 = vadd.f32 0.0, %v2079
        %v2081 = vpop.f32.mrb[0].mxu0
        %v2082 = vadd.f32 0.0, %v2081
        %v2083 = vpop.f32.mrb[0].mxu0
        %v2084 = vadd.f32 0.0, %v2083
        %2085 = vmatprep.mubr.bf16.mxu0 0
        %2086 = vmatmul.mubr.bf16.gmra.mrb[0].mxu0 %v2035
        %v2087 = vpop.f32.mrb[0].mxu0
        %v2088 = vadd.f32 0.0, %v2087
        %v2089 = vpop.f32.mrb[0].mxu0
        %v2090 = vadd.f32 0.0, %v2089
        %v2091 = vpop.f32.mrb[0].mxu0
        %v2092 = vadd.f32 0.0, %v2091
        %v2093 = vpop.f32.mrb[0].mxu0
        %v2094 = vadd.f32 0.0, %v2093
        %2095 = vdwg.mxu0
        %v2096 = vadd.f32 %v1989, %v2078
        %v2097 = vadd.f32 %v1990, %v2080
        %v2098 = vadd.f32 %v1991, %v2082
        %v2099 = vadd.f32 %v1992, %v2084
        %v2100 = vadd.f32 %v1993, %v2088
        %v2101 = vadd.f32 %v1994, %v2090
        %v2102 = vadd.f32 %v1995, %v2092
        %v2103 = vadd.f32 %v1996, %v2094
        %2104 = vrot.lane.b32.xlu0 %v446, 1
        %v2105 = vpop.permute.xlu0 %2104
        %2106 = vrot.lane.b32.xlu0 %v1440, 1
        %v2107 = vpop.permute.xlu0 %2106
        %v2108 = vsel %vm776, %v2105, %v2107
        %v2109 = vsel %vm776, %v2107, %v2105
        %s2110 = scalar_lea.vmem %s6, 12
        %v2111 = vld [vmem:[%s2110] sm:$0x3]
        %v2113 = vlaneseq
        %v2114 = vshrl.u32 %v2113, 7
        %v2115 = vsub.s32 0, %v2114
        %v2116 = vrot.slane %v2111, %v2115
        %v2117 = vlaneseq
        %v2118 = vshrl.u32 %v2117, 7
        %v2119 = vsub.s32 1, %v2118
        %v2120 = vrot.slane %v2111, %v2119
        %v2123 = vmul.f32 %v2109, %v2116
        %v2124 = vmul.f32 %v2108, %v2120
        %v2125 = vpack.c.bf16 %v2123, %v2123
        %v2126 = vpack.c.bf16 %v2124, %v2124
        %s2127 = scalar_lea.vmem %s4, 96
        %v2128 = vld [vmem:[%s2127] sm:$0xf]
        %v2129 = vld [vmem:[%s2127 + $0x4] sm:$0xf]
        %v2130 = vld [vmem:[%s2127 + $0x8] sm:$0xf]
        %v2131 = vld [vmem:[%s2127 + $0xc] sm:$0xf]
        %v2136 = vunpack.c.l.b16 %v2128
        %v2137 = vunpack.c.l.b16 %v2129
        %v2138 = vunpack.c.l.b16 %v2130
        %v2139 = vunpack.c.l.b16 %v2131
        %v2140 = vpack.c.b16 %v2137, %v2136
        %v2141 = vpack.c.b16 %v2139, %v2138
        %v2143 = vsel %vm518, %v2140, 0
        %v2146 = vsel %vm518, %v2141, 0
        %v2149 = vsel %vm525, %v2125, 0
        %v2152 = vsel %vm525, %v2126, 0
        %2154 = vmatprep.subr.bf16.mxu0 %v2152
        %2155 = vmatpush1.bf16.msra.mxu0 %v2149
        %2156 = vmatprep.subr.bf16.mxu0 0
        %2157 = vmatpush1.bf16.msra.mxu0 0
        %2158 = vmatprep.subr.bf16.mxu0 0
        %2159 = vmatpush1.bf16.msra.mxu0 0
        %2160 = vmatprep.subr.bf16.mxu0 0
        %2161 = vmatpush1.bf16.msra.mxu0 0
        %2162 = vmatprep.subr.bf16.mxu0 0
        %2163 = vmatpush1.bf16.msra.mxu0 0
        %2164 = vmatprep.subr.bf16.mxu0 0
        %2165 = vmatpush1.bf16.msra.mxu0 0
        %2166 = vmatprep.subr.bf16.mxu0 0
        %2167 = vmatpush1.bf16.msra.mxu0 0
        %2168 = vmatprep.subr.bf16.mxu0 0
        %2169 = vmatpush1.bf16.msra.mxu0 0
        %2170 = vmatprep.subr.bf16.mxu0 0
        %2171 = vmatpush1.bf16.msra.mxu0 0
        %2172 = vmatprep.subr.bf16.mxu0 0
        %2173 = vmatpush1.bf16.msra.mxu0 0
        %2174 = vmatprep.subr.bf16.mxu0 0
        %2175 = vmatpush1.bf16.msra.mxu0 0
        %2176 = vmatprep.subr.bf16.mxu0 0
        %2177 = vmatpush1.bf16.msra.mxu0 0
        %2178 = vmatprep.subr.bf16.mxu0 0
        %2179 = vmatpush1.bf16.msra.mxu0 0
        %2180 = vmatprep.subr.bf16.mxu0 0
        %2181 = vmatpush1.bf16.msra.mxu0 0
        %2182 = vmatprep.subr.bf16.mxu0 0
        %2183 = vmatpush1.bf16.msra.mxu0 0
        %2184 = vmatprep.subr.bf16.mxu0 0
        %2185 = vmatpush1.bf16.msra.mxu0 0
        %2186 = vmatprep.mubr.bf16.mxu0 0
        %2187 = vmatmul.mubr.bf16.gmra.mrb[0].mxu0 %v2143
        %v2188 = vpop.f32.mrb[0].mxu0
        %v2189 = vadd.f32 0.0, %v2188
        %v2190 = vpop.f32.mrb[0].mxu0
        %v2191 = vadd.f32 0.0, %v2190
        %v2192 = vpop.f32.mrb[0].mxu0
        %v2193 = vadd.f32 0.0, %v2192
        %v2194 = vpop.f32.mrb[0].mxu0
        %v2195 = vadd.f32 0.0, %v2194
        %2196 = vmatprep.mubr.bf16.mxu0 0
        %2197 = vmatmul.mubr.bf16.gmra.mrb[0].mxu0 %v2146
        %v2198 = vpop.f32.mrb[0].mxu0
        %v2199 = vadd.f32 0.0, %v2198
        %v2200 = vpop.f32.mrb[0].mxu0
        %v2201 = vadd.f32 0.0, %v2200
        %v2202 = vpop.f32.mrb[0].mxu0
        %v2203 = vadd.f32 0.0, %v2202
        %v2204 = vpop.f32.mrb[0].mxu0
        %v2205 = vadd.f32 0.0, %v2204
        %2206 = vdwg.mxu0
        %v2207 = vadd.f32 %v2096, %v2189
        %v2208 = vadd.f32 %v2097, %v2191
        %v2209 = vadd.f32 %v2098, %v2193
        %v2210 = vadd.f32 %v2099, %v2195
        %v2211 = vadd.f32 %v2100, %v2199
        %v2212 = vadd.f32 %v2101, %v2201
        %v2213 = vadd.f32 %v2102, %v2203
        %v2214 = vadd.f32 %v2103, %v2205
        %s2215 = scalar_lea.vmem %s6, 14
        %v2216 = vld [vmem:[%s2215] sm:$0x3]
        %v2218 = vlaneseq
        %v2219 = vshrl.u32 %v2218, 7
        %v2220 = vsub.s32 0, %v2219
        %v2221 = vrot.slane %v2216, %v2220
        %v2222 = vlaneseq
        %v2223 = vshrl.u32 %v2222, 7
        %v2224 = vsub.s32 1, %v2223
        %v2225 = vrot.slane %v2216, %v2224
        %v2226 = vcombine.low %v2221, %v2225
        %v2228 = vmul.f32 %v445, %v2226
        %v2230 = vcombine.high %v2228, %v2228
        %v2232 = vpack.c.bf16 %v2228, %v2228
        %v2233 = vpack.c.bf16 %v2230, %v2230
        %s2234 = scalar_lea.vmem %s4, 112
        %v2235 = vld [vmem:[%s2234] sm:$0xf]
        %v2236 = vld [vmem:[%s2234 + $0x4] sm:$0xf]
        %v2237 = vld [vmem:[%s2234 + $0x8] sm:$0xf]
        %v2238 = vld [vmem:[%s2234 + $0xc] sm:$0xf]
        %v2243 = vunpack.c.l.b16 %v2235
        %v2244 = vunpack.c.l.b16 %v2236
        %v2245 = vunpack.c.l.b16 %v2237
        %v2246 = vunpack.c.l.b16 %v2238
        %v2247 = vpack.c.b16 %v2244, %v2243
        %v2248 = vpack.c.b16 %v2246, %v2245
        %v2250 = vsel %vm518, %v2247, 0
        %v2253 = vsel %vm518, %v2248, 0
        %v2256 = vsel %vm525, %v2232, 0
        %v2259 = vsel %vm525, %v2233, 0
        %2261 = vmatprep.subr.bf16.mxu0 %v2259
        %2262 = vmatpush1.bf16.msra.mxu0 %v2256
        %2263 = vmatprep.subr.bf16.mxu0 0
        %2264 = vmatpush1.bf16.msra.mxu0 0
        %2265 = vmatprep.subr.bf16.mxu0 0
        %2266 = vmatpush1.bf16.msra.mxu0 0
        %2267 = vmatprep.subr.bf16.mxu0 0
        %2268 = vmatpush1.bf16.msra.mxu0 0
        %2269 = vmatprep.subr.bf16.mxu0 0
        %2270 = vmatpush1.bf16.msra.mxu0 0
        %2271 = vmatprep.subr.bf16.mxu0 0
        %2272 = vmatpush1.bf16.msra.mxu0 0
        %2273 = vmatprep.subr.bf16.mxu0 0
        %2274 = vmatpush1.bf16.msra.mxu0 0
        %2275 = vmatprep.subr.bf16.mxu0 0
        %2276 = vmatpush1.bf16.msra.mxu0 0
        %2277 = vmatprep.subr.bf16.mxu0 0
        %2278 = vmatpush1.bf16.msra.mxu0 0
        %2279 = vmatprep.subr.bf16.mxu0 0
        %2280 = vmatpush1.bf16.msra.mxu0 0
        %2281 = vmatprep.subr.bf16.mxu0 0
        %2282 = vmatpush1.bf16.msra.mxu0 0
        %2283 = vmatprep.subr.bf16.mxu0 0
        %2284 = vmatpush1.bf16.msra.mxu0 0
        %2285 = vmatprep.subr.bf16.mxu0 0
        %2286 = vmatpush1.bf16.msra.mxu0 0
        %2287 = vmatprep.subr.bf16.mxu0 0
        %2288 = vmatpush1.bf16.msra.mxu0 0
        %2289 = vmatprep.subr.bf16.mxu0 0
        %2290 = vmatpush1.bf16.msra.mxu0 0
        %2291 = vmatprep.subr.bf16.mxu0 0
        %2292 = vmatpush1.bf16.msra.mxu0 0
        %2293 = vmatprep.mubr.bf16.mxu0 0
        %2294 = vmatmul.mubr.bf16.gmra.mrb[0].mxu0 %v2250
        %v2295 = vpop.f32.mrb[0].mxu0
        %v2296 = vadd.f32 0.0, %v2295
        %v2297 = vpop.f32.mrb[0].mxu0
        %v2298 = vadd.f32 0.0, %v2297
        %v2299 = vpop.f32.mrb[0].mxu0
        %v2300 = vadd.f32 0.0, %v2299
        %v2301 = vpop.f32.mrb[0].mxu0
        %v2302 = vadd.f32 0.0, %v2301
        %2303 = vmatprep.mubr.bf16.mxu0 0
        %2304 = vmatmul.mubr.bf16.gmra.mrb[0].mxu0 %v2253
        %v2305 = vpop.f32.mrb[0].mxu0
        %v2306 = vadd.f32 0.0, %v2305
        %v2307 = vpop.f32.mrb[0].mxu0
        %v2308 = vadd.f32 0.0, %v2307
        %v2309 = vpop.f32.mrb[0].mxu0
        %v2310 = vadd.f32 0.0, %v2309
        %v2311 = vpop.f32.mrb[0].mxu0
        %v2312 = vadd.f32 0.0, %v2311
        %2313 = vdwg.mxu0
        %v2314 = vadd.f32 %v2207, %v2296
        %v2315 = vadd.f32 %v2208, %v2298
        %v2316 = vadd.f32 %v2209, %v2300
        %v2317 = vadd.f32 %v2210, %v2302
        %v2318 = vadd.f32 %v2211, %v2306
        %v2319 = vadd.f32 %v2212, %v2308
        %v2320 = vadd.f32 %v2213, %v2310
        %v2321 = vadd.f32 %v2214, %v2312
        %s2322 = scalar_lea.vmem %s6, 16
        %v2323 = vld [vmem:[%s2322] sm:$0x3]
        %v2325 = vlaneseq
        %v2326 = vshrl.u32 %v2325, 7
        %v2327 = vsub.s32 0, %v2326
        %v2328 = vrot.slane %v2323, %v2327
        %v2329 = vlaneseq
        %v2330 = vshrl.u32 %v2329, 7
        %v2331 = vsub.s32 1, %v2330
        %v2332 = vrot.slane %v2323, %v2331
        %v2333 = vcombine.low %v2328, %v2332
        %v2335 = vmul.f32 %v446, %v2333
        %v2337 = vcombine.high %v2335, %v2335
        %v2339 = vpack.c.bf16 %v2335, %v2335
        %v2340 = vpack.c.bf16 %v2337, %v2337
        %s2341 = scalar_lea.vmem %s4, 128
        %v2342 = vld [vmem:[%s2341] sm:$0xf]
        %v2343 = vld [vmem:[%s2341 + $0x4] sm:$0xf]
        %v2344 = vld [vmem:[%s2341 + $0x8] sm:$0xf]
        %v2345 = vld [vmem:[%s2341 + $0xc] sm:$0xf]
        %v2350 = vunpack.c.l.b16 %v2342
        %v2351 = vunpack.c.l.b16 %v2343
        %v2352 = vunpack.c.l.b16 %v2344
        %v2353 = vunpack.c.l.b16 %v2345
        %v2354 = vpack.c.b16 %v2351, %v2350
        %v2355 = vpack.c.b16 %v2353, %v2352
        %v2357 = vsel %vm518, %v2354, 0
        %v2360 = vsel %vm518, %v2355, 0
        %v2363 = vsel %vm525, %v2339, 0
        %v2366 = vsel %vm525, %v2340, 0
        %2368 = vmatprep.subr.bf16.mxu0 %v2366
        %2369 = vmatpush1.bf16.msra.mxu0 %v2363
        %2370 = vmatprep.subr.bf16.mxu0 0
        %2371 = vmatpush1.bf16.msra.mxu0 0
        %2372 = vmatprep.subr.bf16.mxu0 0
        %2373 = vmatpush1.bf16.msra.mxu0 0
        %2374 = vmatprep.subr.bf16.mxu0 0
        %2375 = vmatpush1.bf16.msra.mxu0 0
        %2376 = vmatprep.subr.bf16.mxu0 0
        %2377 = vmatpush1.bf16.msra.mxu0 0
        %2378 = vmatprep.subr.bf16.mxu0 0
        %2379 = vmatpush1.bf16.msra.mxu0 0
        %2380 = vmatprep.subr.bf16.mxu0 0
        %2381 = vmatpush1.bf16.msra.mxu0 0
        %2382 = vmatprep.subr.bf16.mxu0 0
        %2383 = vmatpush1.bf16.msra.mxu0 0
        %2384 = vmatprep.subr.bf16.mxu0 0
        %2385 = vmatpush1.bf16.msra.mxu0 0
        %2386 = vmatprep.subr.bf16.mxu0 0
        %2387 = vmatpush1.bf16.msra.mxu0 0
        %2388 = vmatprep.subr.bf16.mxu0 0
        %2389 = vmatpush1.bf16.msra.mxu0 0
        %2390 = vmatprep.subr.bf16.mxu0 0
        %2391 = vmatpush1.bf16.msra.mxu0 0
        %2392 = vmatprep.subr.bf16.mxu0 0
        %2393 = vmatpush1.bf16.msra.mxu0 0
        %2394 = vmatprep.subr.bf16.mxu0 0
        %2395 = vmatpush1.bf16.msra.mxu0 0
        %2396 = vmatprep.subr.bf16.mxu0 0
        %2397 = vmatpush1.bf16.msra.mxu0 0
        %2398 = vmatprep.subr.bf16.mxu0 0
        %2399 = vmatpush1.bf16.msra.mxu0 0
        %2400 = vmatprep.mubr.bf16.mxu0 0
        %2401 = vmatmul.mubr.bf16.gmra.mrb[0].mxu0 %v2357
        %v2402 = vpop.f32.mrb[0].mxu0
        %v2403 = vadd.f32 0.0, %v2402
        %v2404 = vpop.f32.mrb[0].mxu0
        %v2405 = vadd.f32 0.0, %v2404
        %v2406 = vpop.f32.mrb[0].mxu0
        %v2407 = vadd.f32 0.0, %v2406
        %v2408 = vpop.f32.mrb[0].mxu0
        %v2409 = vadd.f32 0.0, %v2408
        %2410 = vmatprep.mubr.bf16.mxu0 0
        %2411 = vmatmul.mubr.bf16.gmra.mrb[0].mxu0 %v2360
        %v2412 = vpop.f32.mrb[0].mxu0
        %v2413 = vadd.f32 0.0, %v2412
        %v2414 = vpop.f32.mrb[0].mxu0
        %v2415 = vadd.f32 0.0, %v2414
        %v2416 = vpop.f32.mrb[0].mxu0
        %v2417 = vadd.f32 0.0, %v2416
        %v2418 = vpop.f32.mrb[0].mxu0
        %v2419 = vadd.f32 0.0, %v2418
        %2420 = vdwg.mxu0
        %v2421 = vadd.f32 %v2314, %v2403
        %v2422 = vadd.f32 %v2315, %v2405
        %v2423 = vadd.f32 %v2316, %v2407
        %v2424 = vadd.f32 %v2317, %v2409
        %v2425 = vadd.f32 %v2318, %v2413
        %v2426 = vadd.f32 %v2319, %v2415
        %v2427 = vadd.f32 %v2320, %v2417
        %v2428 = vadd.f32 %v2321, %v2419
        %v2429 = vld [vmem:[%s7] sm:$0xff]
        %v2430 = vld [vmem:[%s7 + $0x8] sm:$0xff]
        %v2431 = vld [vmem:[%s7 + $0x10] sm:$0xff]
        %v2432 = vld [vmem:[%s7 + $0x18] sm:$0xff]
        %2434 = vset.pattern.permute.xlu0 0
        %2435 = vperm.xlu0 %2434, %v2429
        %v2436 = vpop.permute.xlu0 %2435
        %2439 = vset.pattern.permute.xlu0 0
        %2440 = vperm.xlu0 %2439, %v2430
        %v2441 = vpop.permute.xlu0 %2440
        %2444 = vset.pattern.permute.xlu0 0
        %2445 = vperm.xlu0 %2444, %v2431
        %v2446 = vpop.permute.xlu0 %2445
        %2449 = vset.pattern.permute.xlu0 0
        %2450 = vperm.xlu0 %2449, %v2432
        %v2451 = vpop.permute.xlu0 %2450
        %v2453 = vadd.f32 %v2421, %v2436
        %v2454 = vadd.f32 %v2422, %v2436
        %v2455 = vadd.f32 %v2423, %v2441
        %v2456 = vadd.f32 %v2424, %v2441
        %v2457 = vadd.f32 %v2425, %v2446
        %v2458 = vadd.f32 %v2426, %v2446
        %v2459 = vadd.f32 %v2427, %v2451
        %v2460 = vadd.f32 %v2428, %v2451
        %s2461 = sld [smem:[#allocation2]]
        %vm2462 = vcmp.ge.f32.partialorder %v2453, 0.0
        %vm2463 = vcmp.ge.f32.partialorder %v2454, 0.0
        %vm2464 = vcmp.ge.f32.partialorder %v2455, 0.0
        %vm2465 = vcmp.ge.f32.partialorder %v2456, 0.0
        %vm2466 = vcmp.ge.f32.partialorder %v2457, 0.0
        %vm2467 = vcmp.ge.f32.partialorder %v2458, 0.0
        %vm2468 = vcmp.ge.f32.partialorder %v2459, 0.0
        %vm2469 = vcmp.ge.f32.partialorder %v2460, 0.0
        %v2470 = vstv %s2461
        %v2471 = vmul.f32 %v2470, %v2453
        %v2472 = vmul.f32 %v2470, %v2454
        %v2473 = vmul.f32 %v2470, %v2455
        %v2474 = vmul.f32 %v2470, %v2456
        %v2475 = vmul.f32 %v2470, %v2457
        %v2476 = vmul.f32 %v2470, %v2458
        %v2477 = vmul.f32 %v2470, %v2459
        %v2478 = vmul.f32 %v2470, %v2460
        %v2479 = vsel %vm2462, %v2453, %v2471
        %v2480 = vsel %vm2463, %v2454, %v2472
        %v2481 = vsel %vm2464, %v2455, %v2473
        %v2482 = vsel %vm2465, %v2456, %v2474
        %v2483 = vsel %vm2466, %v2457, %v2475
        %v2484 = vsel %vm2467, %v2458, %v2476
        %v2485 = vsel %vm2468, %v2459, %v2477
        %v2486 = vsel %vm2469, %v2460, %v2478
        %v2487 = vld [vmem:[%s8] sm:$0x1]
        %s2488 = sld [smem:[#allocation2 + $0x1]]
        %v2489 = vstv %s2488
        %vm2490 = vcmask 261120
        %v2492 = vsel %vm2490, %v2487, 0
        %2494 = vmatprep.subr.mxu0 %v2480
        %2495 = vmatpush1.msra.mxu0 %v2479
        %2496 = vmatprep.subr.mxu0 %v2482
        %2497 = vmatpush1.msra.mxu0 %v2481
        %2498 = vmatprep.subr.mxu0 %v2484
        %2499 = vmatpush1.msra.mxu0 %v2483
        %2500 = vmatprep.subr.mxu0 %v2486
        %2501 = vmatpush1.msra.mxu0 %v2485
        %2502 = vmatprep.subr.mxu0 0.0
        %2503 = vmatpush1.msra.mxu0 0.0
        %2504 = vmatprep.subr.mxu0 0.0
        %2505 = vmatpush1.msra.mxu0 0.0
        %2506 = vmatprep.subr.mxu0 0.0
        %2507 = vmatpush1.msra.mxu0 0.0
        %2508 = vmatprep.subr.mxu0 0.0
        %2509 = vmatpush1.msra.mxu0 0.0
        %2510 = vmatprep.subr.mxu0 0.0
        %2511 = vmatpush1.msra.mxu0 0.0
        %2512 = vmatprep.subr.mxu0 0.0
        %2513 = vmatpush1.msra.mxu0 0.0
        %2514 = vmatprep.subr.mxu0 0.0
        %2515 = vmatpush1.msra.mxu0 0.0
        %2516 = vmatprep.subr.mxu0 0.0
        %2517 = vmatpush1.msra.mxu0 0.0
        %2518 = vmatprep.subr.mxu0 0.0
        %2519 = vmatpush1.msra.mxu0 0.0
        %2520 = vmatprep.subr.mxu0 0.0
        %2521 = vmatpush1.msra.mxu0 0.0
        %2522 = vmatprep.subr.mxu0 0.0
        %2523 = vmatpush1.msra.mxu0 0.0
        %2524 = vmatprep.subr.mxu0 0.0
        %2525 = vmatpush1.msra.mxu0 0.0
        %2526 = vmatprep.subr.mxu0 0.0
        %2527 = vmatpush1.msra.mxu0 0.0
        %2528 = vmatprep.subr.mxu0 0.0
        %2529 = vmatpush1.msra.mxu0 0.0
        %2530 = vmatprep.subr.mxu0 0.0
        %2531 = vmatpush1.msra.mxu0 0.0
        %2532 = vmatprep.subr.mxu0 0.0
        %2533 = vmatpush1.msra.mxu0 0.0
        %2534 = vmatprep.subr.mxu0 0.0
        %2535 = vmatpush1.msra.mxu0 0.0
        %2536 = vmatprep.subr.mxu0 0.0
        %2537 = vmatpush1.msra.mxu0 0.0
        %2538 = vmatprep.subr.mxu0 0.0
        %2539 = vmatpush1.msra.mxu0 0.0
        %2540 = vmatprep.subr.mxu0 0.0
        %2541 = vmatpush1.msra.mxu0 0.0
        %2542 = vmatprep.subr.mxu0 0.0
        %2543 = vmatpush1.msra.mxu0 0.0
        %2544 = vmatprep.subr.mxu0 0.0
        %2545 = vmatpush1.msra.mxu0 0.0
        %2546 = vmatprep.subr.mxu0 0.0
        %2547 = vmatpush1.msra.mxu0 0.0
        %2548 = vmatprep.subr.mxu0 0.0
        %2549 = vmatpush1.msra.mxu0 0.0
        %2550 = vmatprep.subr.mxu0 0.0
        %2551 = vmatpush1.msra.mxu0 0.0
        %2552 = vmatprep.subr.mxu0 0.0
        %2553 = vmatpush1.msra.mxu0 0.0
        %2554 = vmatprep.subr.mxu0 0.0
        %2555 = vmatpush1.msra.mxu0 0.0
        %2556 = vmatprep.subr.mxu0 0.0
        %2557 = vmatpush1.msra.mxu0 0.0
        %2558 = vmatprep.mubr.f32.mxu0 0.0
        %2559 = vmatmul.mubr.f32.gmra.mrb[0].mxu0 %v2492
        %v2560 = vpop.f32.mrb[0].mxu0
        %v2561 = vadd.f32 %v2489, %v2560
        %v2562 = vpop.f32.mrb[0].mxu0
        %v2563 = vadd.f32 %v2489, %v2562
        %2564 = vdwg.mxu0
        %v2565 = vsub.f32 0.0, %v2561
        %v2566 = vsub.f32 0.0, %v2563
        %v2567 = vmul.f32 %v2565, 1.442695
        %v2568 = vpow.pop %v2567
        %v2569 = vmul.f32 %v2566, 1.442695
        %v2570 = vpow.pop %v2569
        %v2571 = vadd.f32 %v2568, 1.0
        %v2572 = vadd.f32 %v2570, 1.0
        %v2573 = vrcp.pop %v2571
        %v2574 = vmul.f32 1.0, %v2573
        %v2575 = vrcp.pop %v2572
        %v2576 = vmul.f32 1.0, %v2575
        %v2577 = vld [vmem:[%s9] sm:$0xff]
        %v2578 = vld [vmem:[%s9 + $0x8] sm:$0xff]
        %v2579 = vld [vmem:[%s9 + $0x10] sm:$0xff]
        %v2580 = vld [vmem:[%s9 + $0x18] sm:$0xff]
        %v2581 = vld [vmem:[%s9 + $0x20] sm:$0xff]
        %v2582 = vld [vmem:[%s9 + $0x28] sm:$0xff]
        %v2583 = vld [vmem:[%s9 + $0x30] sm:$0xff]
        %v2584 = vld [vmem:[%s9 + $0x38] sm:$0xff]
        %v2585 = vld [vmem:[%s9 + $0x40] sm:$0xff]
        %v2586 = vld [vmem:[%s9 + $0x48] sm:$0xff]
        %v2587 = vld [vmem:[%s9 + $0x50] sm:$0xff]
        %v2588 = vld [vmem:[%s9 + $0x58] sm:$0xff]
        %v2589 = vld [vmem:[%s9 + $0x60] sm:$0xff]
        %v2590 = vld [vmem:[%s9 + $0x68] sm:$0xff]
        %v2591 = vld [vmem:[%s9 + $0x70] sm:$0xff]
        %v2592 = vld [vmem:[%s9 + $0x78] sm:$0xff]
        %v2593 = vld [vmem:[%s9 + $0x80] sm:$0xff]
        %v2594 = vld [vmem:[%s9 + $0x88] sm:$0xff]
        %v2595 = vld [vmem:[%s9 + $0x90] sm:$0xff]
        %v2596 = vld [vmem:[%s9 + $0x98] sm:$0xff]
        %v2597 = vld [vmem:[%s9 + $0xa0] sm:$0xff]
        %v2598 = vld [vmem:[%s9 + $0xa8] sm:$0xff]
        %v2599 = vld [vmem:[%s9 + $0xb0] sm:$0xff]
        %v2600 = vld [vmem:[%s9 + $0xb8] sm:$0xff]
        %v2601 = vld [vmem:[%s9 + $0xc0] sm:$0xff]
        %v2602 = vld [vmem:[%s9 + $0xc8] sm:$0xff]
        %v2603 = vld [vmem:[%s9 + $0xd0] sm:$0xff]
        %v2604 = vld [vmem:[%s9 + $0xd8] sm:$0xff]
        %v2605 = vld [vmem:[%s9 + $0xe0] sm:$0xff]
        %v2606 = vld [vmem:[%s9 + $0xe8] sm:$0xff]
        %v2607 = vld [vmem:[%s9 + $0xf0] sm:$0xff]
        %v2608 = vld [vmem:[%s9 + $0xf8] sm:$0xff]
        %v2609 = vld [vmem:[%s9 + $0x100] sm:$0xff]
        %v2610 = vld [vmem:[%s9 + $0x108] sm:$0xff]
        %v2611 = vld [vmem:[%s9 + $0x110] sm:$0xff]
        %v2612 = vld [vmem:[%s9 + $0x118] sm:$0xff]
        %v2613 = vld [vmem:[%s9 + $0x120] sm:$0xff]
        %v2614 = vld [vmem:[%s9 + $0x128] sm:$0xff]
        %v2615 = vld [vmem:[%s9 + $0x130] sm:$0xff]
        %v2616 = vld [vmem:[%s9 + $0x138] sm:$0xff]
        %v2617 = vld [vmem:[%s9 + $0x140] sm:$0xff]
        %v2618 = vld [vmem:[%s9 + $0x148] sm:$0xff]
        %v2619 = vld [vmem:[%s9 + $0x150] sm:$0xff]
        %v2620 = vld [vmem:[%s9 + $0x158] sm:$0xff]
        %v2621 = vld [vmem:[%s9 + $0x160] sm:$0xff]
        %v2622 = vld [vmem:[%s9 + $0x168] sm:$0xff]
        %v2623 = vld [vmem:[%s9 + $0x170] sm:$0xff]
        %v2624 = vld [vmem:[%s9 + $0x178] sm:$0xff]
        %v2625 = vld [vmem:[%s9 + $0x180] sm:$0xff]
        %v2626 = vld [vmem:[%s9 + $0x188] sm:$0xff]
        %v2627 = vld [vmem:[%s9 + $0x190] sm:$0xff]
        %v2628 = vld [vmem:[%s9 + $0x198] sm:$0xff]
        %v2629 = vld [vmem:[%s9 + $0x1a0] sm:$0xff]
        %v2630 = vld [vmem:[%s9 + $0x1a8] sm:$0xff]
        %v2631 = vld [vmem:[%s9 + $0x1b0] sm:$0xff]
        %v2632 = vld [vmem:[%s9 + $0x1b8] sm:$0xff]
        %v2633 = vld [vmem:[%s9 + $0x1c0] sm:$0xff]
        %v2634 = vld [vmem:[%s9 + $0x1c8] sm:$0xff]
        %v2635 = vld [vmem:[%s9 + $0x1d0] sm:$0xff]
        %v2636 = vld [vmem:[%s9 + $0x1d8] sm:$0xff]
        %v2637 = vld [vmem:[%s9 + $0x1e0] sm:$0xff]
        %v2638 = vld [vmem:[%s9 + $0x1e8] sm:$0xff]
        %v2639 = vld [vmem:[%s9 + $0x1f0] sm:$0xff]
        %v2640 = vld [vmem:[%s9 + $0x1f8] sm:$0xff]
        %v2641 = vld [vmem:[%s9 + $0x200] sm:$0xff]
        %v2642 = vld [vmem:[%s9 + $0x208] sm:$0xff]
        %v2643 = vld [vmem:[%s9 + $0x210] sm:$0xff]
        %v2644 = vld [vmem:[%s9 + $0x218] sm:$0xff]
        %v2645 = vld [vmem:[%s9 + $0x220] sm:$0xff]
        %v2646 = vld [vmem:[%s9 + $0x228] sm:$0xff]
        %v2647 = vld [vmem:[%s9 + $0x230] sm:$0xff]
        %v2648 = vld [vmem:[%s9 + $0x238] sm:$0xff]
        %v2649 = vld [vmem:[%s9 + $0x240] sm:$0xff]
        %v2650 = vld [vmem:[%s9 + $0x248] sm:$0xff]
        %v2651 = vld [vmem:[%s9 + $0x250] sm:$0xff]
        %v2652 = vld [vmem:[%s9 + $0x258] sm:$0xff]
        %v2653 = vld [vmem:[%s9 + $0x260] sm:$0xff]
        %v2654 = vld [vmem:[%s9 + $0x268] sm:$0xff]
        %v2655 = vld [vmem:[%s9 + $0x270] sm:$0xff]
        %v2656 = vld [vmem:[%s9 + $0x278] sm:$0xff]
        %v2657 = vld [vmem:[%s9 + $0x280] sm:$0xff]
        %v2658 = vld [vmem:[%s9 + $0x288] sm:$0xff]
        %v2659 = vld [vmem:[%s9 + $0x290] sm:$0xff]
        %v2660 = vld [vmem:[%s9 + $0x298] sm:$0xff]
        %v2661 = vld [vmem:[%s9 + $0x2a0] sm:$0xff]
        %v2662 = vld [vmem:[%s9 + $0x2a8] sm:$0xff]
        %v2663 = vld [vmem:[%s9 + $0x2b0] sm:$0xff]
        %v2664 = vld [vmem:[%s9 + $0x2b8] sm:$0xff]
        %v2665 = vld [vmem:[%s9 + $0x2c0] sm:$0xff]
        %v2666 = vld [vmem:[%s9 + $0x2c8] sm:$0xff]
        %v2667 = vld [vmem:[%s9 + $0x2d0] sm:$0xff]
        %v2668 = vld [vmem:[%s9 + $0x2d8] sm:$0xff]
        %v2669 = vld [vmem:[%s9 + $0x2e0] sm:$0xff]
        %v2670 = vld [vmem:[%s9 + $0x2e8] sm:$0xff]
        %v2671 = vld [vmem:[%s9 + $0x2f0] sm:$0xff]
        %v2672 = vld [vmem:[%s9 + $0x2f8] sm:$0xff]
        %v2673 = vld [vmem:[%s9 + $0x300] sm:$0xff]
        %v2674 = vld [vmem:[%s9 + $0x308] sm:$0xff]
        %v2675 = vld [vmem:[%s9 + $0x310] sm:$0xff]
        %v2676 = vld [vmem:[%s9 + $0x318] sm:$0xff]
        %v2677 = vld [vmem:[%s9 + $0x320] sm:$0xff]
        %v2678 = vld [vmem:[%s9 + $0x328] sm:$0xff]
        %v2679 = vld [vmem:[%s9 + $0x330] sm:$0xff]
        %v2680 = vld [vmem:[%s9 + $0x338] sm:$0xff]
        %v2681 = vld [vmem:[%s9 + $0x340] sm:$0xff]
        %v2682 = vld [vmem:[%s9 + $0x348] sm:$0xff]
        %v2683 = vld [vmem:[%s9 + $0x350] sm:$0xff]
        %v2684 = vld [vmem:[%s9 + $0x358] sm:$0xff]
        %v2685 = vld [vmem:[%s9 + $0x360] sm:$0xff]
        %v2686 = vld [vmem:[%s9 + $0x368] sm:$0xff]
        %v2687 = vld [vmem:[%s9 + $0x370] sm:$0xff]
        %v2688 = vld [vmem:[%s9 + $0x378] sm:$0xff]
        %v2689 = vld [vmem:[%s9 + $0x380] sm:$0xff]
        %v2690 = vld [vmem:[%s9 + $0x388] sm:$0xff]
        %v2691 = vld [vmem:[%s9 + $0x390] sm:$0xff]
        %v2692 = vld [vmem:[%s9 + $0x398] sm:$0xff]
        %v2693 = vld [vmem:[%s9 + $0x3a0] sm:$0xff]
        %v2694 = vld [vmem:[%s9 + $0x3a8] sm:$0xff]
        %v2695 = vld [vmem:[%s9 + $0x3b0] sm:$0xff]
        %v2696 = vld [vmem:[%s9 + $0x3b8] sm:$0xff]
        %v2697 = vld [vmem:[%s9 + $0x3c0] sm:$0xff]
        %v2698 = vld [vmem:[%s9 + $0x3c8] sm:$0xff]
        %v2699 = vld [vmem:[%s9 + $0x3d0] sm:$0xff]
        %v2700 = vld [vmem:[%s9 + $0x3d8] sm:$0xff]
        %v2701 = vld [vmem:[%s9 + $0x3e0] sm:$0xff]
        %v2702 = vld [vmem:[%s9 + $0x3e8] sm:$0xff]
        %v2703 = vld [vmem:[%s9 + $0x3f0] sm:$0xff]
        %v2704 = vld [vmem:[%s9 + $0x3f8] sm:$0xff]
        %v2705 = vld [vmem:[%s9 + $0x400] sm:$0xff]
        %v2706 = vld [vmem:[%s9 + $0x408] sm:$0xff]
        %v2707 = vld [vmem:[%s9 + $0x410] sm:$0xff]
        %v2708 = vld [vmem:[%s9 + $0x418] sm:$0xff]
        %v2709 = vld [vmem:[%s9 + $0x420] sm:$0xff]
        %v2710 = vld [vmem:[%s9 + $0x428] sm:$0xff]
        %v2711 = vld [vmem:[%s9 + $0x430] sm:$0xff]
        %v2712 = vld [vmem:[%s9 + $0x438] sm:$0xff]
        %v2713 = vld [vmem:[%s9 + $0x440] sm:$0xff]
        %v2714 = vld [vmem:[%s9 + $0x448] sm:$0xff]
        %v2715 = vld [vmem:[%s9 + $0x450] sm:$0xff]
        %v2716 = vld [vmem:[%s9 + $0x458] sm:$0xff]
        %v2717 = vld [vmem:[%s9 + $0x460] sm:$0xff]
        %v2718 = vld [vmem:[%s9 + $0x468] sm:$0xff]
        %v2719 = vld [vmem:[%s9 + $0x470] sm:$0xff]
        %v2720 = vld [vmem:[%s9 + $0x478] sm:$0xff]
        %v2721 = vld [vmem:[%s9 + $0x480] sm:$0xff]
        %v2722 = vld [vmem:[%s9 + $0x488] sm:$0xff]
        %v2723 = vld [vmem:[%s9 + $0x490] sm:$0xff]
        %v2724 = vld [vmem:[%s9 + $0x498] sm:$0xff]
        %v2725 = vld [vmem:[%s9 + $0x4a0] sm:$0xff]
        %v2726 = vld [vmem:[%s9 + $0x4a8] sm:$0xff]
        %v2727 = vld [vmem:[%s9 + $0x4b0] sm:$0xff]
        %v2728 = vld [vmem:[%s9 + $0x4b8] sm:$0xff]
        %v2729 = vld [vmem:[%s9 + $0x4c0] sm:$0xff]
        %v2730 = vld [vmem:[%s9 + $0x4c8] sm:$0xff]
        %v2731 = vld [vmem:[%s9 + $0x4d0] sm:$0xff]
        %v2732 = vld [vmem:[%s9 + $0x4d8] sm:$0xff]
        %v2733 = vld [vmem:[%s9 + $0x4e0] sm:$0xff]
        %v2734 = vld [vmem:[%s9 + $0x4e8] sm:$0xff]
        %v2735 = vld [vmem:[%s9 + $0x4f0] sm:$0xff]
        %v2736 = vld [vmem:[%s9 + $0x4f8] sm:$0xff]
        %v2737 = vld [vmem:[%s9 + $0x500] sm:$0xff]
        %v2738 = vld [vmem:[%s9 + $0x508] sm:$0xff]
        %v2739 = vld [vmem:[%s9 + $0x510] sm:$0xff]
        %v2740 = vld [vmem:[%s9 + $0x518] sm:$0xff]
        %v2741 = vld [vmem:[%s9 + $0x520] sm:$0xff]
        %v2742 = vld [vmem:[%s9 + $0x528] sm:$0xff]
        %v2743 = vld [vmem:[%s9 + $0x530] sm:$0xff]
        %v2744 = vld [vmem:[%s9 + $0x538] sm:$0xff]
        %v2745 = vld [vmem:[%s9 + $0x540] sm:$0xff]
        %v2746 = vld [vmem:[%s9 + $0x548] sm:$0xff]
        %v2747 = vld [vmem:[%s9 + $0x550] sm:$0xff]
        %v2748 = vld [vmem:[%s9 + $0x558] sm:$0xff]
        %v2749 = vld [vmem:[%s9 + $0x560] sm:$0xff]
        %v2750 = vld [vmem:[%s9 + $0x568] sm:$0xff]
        %v2751 = vld [vmem:[%s9 + $0x570] sm:$0xff]
        %v2752 = vld [vmem:[%s9 + $0x578] sm:$0xff]
        %v2753 = vld [vmem:[%s9 + $0x580] sm:$0xff]
        %v2754 = vld [vmem:[%s9 + $0x588] sm:$0xff]
        %v2755 = vld [vmem:[%s9 + $0x590] sm:$0xff]
        %v2756 = vld [vmem:[%s9 + $0x598] sm:$0xff]
        %v2757 = vld [vmem:[%s9 + $0x5a0] sm:$0xff]
        %v2758 = vld [vmem:[%s9 + $0x5a8] sm:$0xff]
        %v2759 = vld [vmem:[%s9 + $0x5b0] sm:$0xff]
        %v2760 = vld [vmem:[%s9 + $0x5b8] sm:$0xff]
        %v2761 = vld [vmem:[%s9 + $0x5c0] sm:$0xff]
        %v2762 = vld [vmem:[%s9 + $0x5c8] sm:$0xff]
        %v2763 = vld [vmem:[%s9 + $0x5d0] sm:$0xff]
        %v2764 = vld [vmem:[%s9 + $0x5d8] sm:$0xff]
        %v2765 = vld [vmem:[%s9 + $0x5e0] sm:$0xff]
        %v2766 = vld [vmem:[%s9 + $0x5e8] sm:$0xff]
        %v2767 = vld [vmem:[%s9 + $0x5f0] sm:$0xff]
        %v2768 = vld [vmem:[%s9 + $0x5f8] sm:$0xff]
        %v2769 = vld [vmem:[%s9 + $0x600] sm:$0xff]
        %v2770 = vld [vmem:[%s9 + $0x608] sm:$0xff]
        %v2771 = vld [vmem:[%s9 + $0x610] sm:$0xff]
        %v2772 = vld [vmem:[%s9 + $0x618] sm:$0xff]
        %v2773 = vld [vmem:[%s9 + $0x620] sm:$0xff]
        %v2774 = vld [vmem:[%s9 + $0x628] sm:$0xff]
        %v2775 = vld [vmem:[%s9 + $0x630] sm:$0xff]
        %v2776 = vld [vmem:[%s9 + $0x638] sm:$0xff]
        %v2777 = vld [vmem:[%s9 + $0x640] sm:$0xff]
        %v2778 = vld [vmem:[%s9 + $0x648] sm:$0xff]
        %v2779 = vld [vmem:[%s9 + $0x650] sm:$0xff]
        %v2780 = vld [vmem:[%s9 + $0x658] sm:$0xff]
        %v2781 = vld [vmem:[%s9 + $0x660] sm:$0xff]
        %v2782 = vld [vmem:[%s9 + $0x668] sm:$0xff]
        %v2783 = vld [vmem:[%s9 + $0x670] sm:$0xff]
        %v2784 = vld [vmem:[%s9 + $0x678] sm:$0xff]
        %v2785 = vld [vmem:[%s9 + $0x680] sm:$0xff]
        %v2786 = vld [vmem:[%s9 + $0x688] sm:$0xff]
        %v2787 = vld [vmem:[%s9 + $0x690] sm:$0xff]
        %v2788 = vld [vmem:[%s9 + $0x698] sm:$0xff]
        %v2789 = vld [vmem:[%s9 + $0x6a0] sm:$0xff]
        %v2790 = vld [vmem:[%s9 + $0x6a8] sm:$0xff]
        %v2791 = vld [vmem:[%s9 + $0x6b0] sm:$0xff]
        %v2792 = vld [vmem:[%s9 + $0x6b8] sm:$0xff]
        %v2793 = vld [vmem:[%s9 + $0x6c0] sm:$0xff]
        %v2794 = vld [vmem:[%s9 + $0x6c8] sm:$0xff]
        %v2795 = vld [vmem:[%s9 + $0x6d0] sm:$0xff]
        %v2796 = vld [vmem:[%s9 + $0x6d8] sm:$0xff]
        %v2797 = vld [vmem:[%s9 + $0x6e0] sm:$0xff]
        %v2798 = vld [vmem:[%s9 + $0x6e8] sm:$0xff]
        %v2799 = vld [vmem:[%s9 + $0x6f0] sm:$0xff]
        %v2800 = vld [vmem:[%s9 + $0x6f8] sm:$0xff]
        %v2801 = vld [vmem:[%s9 + $0x700] sm:$0xff]
        %v2802 = vld [vmem:[%s9 + $0x708] sm:$0xff]
        %v2803 = vld [vmem:[%s9 + $0x710] sm:$0xff]
        %v2804 = vld [vmem:[%s9 + $0x718] sm:$0xff]
        %v2805 = vld [vmem:[%s9 + $0x720] sm:$0xff]
        %v2806 = vld [vmem:[%s9 + $0x728] sm:$0xff]
        %v2807 = vld [vmem:[%s9 + $0x730] sm:$0xff]
        %v2808 = vld [vmem:[%s9 + $0x738] sm:$0xff]
        %v2809 = vld [vmem:[%s9 + $0x740] sm:$0xff]
        %v2810 = vld [vmem:[%s9 + $0x748] sm:$0xff]
        %v2811 = vld [vmem:[%s9 + $0x750] sm:$0xff]
        %v2812 = vld [vmem:[%s9 + $0x758] sm:$0xff]
        %v2813 = vld [vmem:[%s9 + $0x760] sm:$0xff]
        %v2814 = vld [vmem:[%s9 + $0x768] sm:$0xff]
        %v2815 = vld [vmem:[%s9 + $0x770] sm:$0xff]
        %v2816 = vld [vmem:[%s9 + $0x778] sm:$0xff]
        %v2817 = vld [vmem:[%s9 + $0x780] sm:$0xff]
        %v2818 = vld [vmem:[%s9 + $0x788] sm:$0xff]
        %v2819 = vld [vmem:[%s9 + $0x790] sm:$0xff]
        %v2820 = vld [vmem:[%s9 + $0x798] sm:$0xff]
        %v2821 = vld [vmem:[%s9 + $0x7a0] sm:$0xff]
        %v2822 = vld [vmem:[%s9 + $0x7a8] sm:$0xff]
        %v2823 = vld [vmem:[%s9 + $0x7b0] sm:$0xff]
        %v2824 = vld [vmem:[%s9 + $0x7b8] sm:$0xff]
        %v2825 = vld [vmem:[%s9 + $0x7c0] sm:$0xff]
        %v2826 = vld [vmem:[%s9 + $0x7c8] sm:$0xff]
        %v2827 = vld [vmem:[%s9 + $0x7d0] sm:$0xff]
        %v2828 = vld [vmem:[%s9 + $0x7d8] sm:$0xff]
        %v2829 = vld [vmem:[%s9 + $0x7e0] sm:$0xff]
        %v2830 = vld [vmem:[%s9 + $0x7e8] sm:$0xff]
        %v2831 = vld [vmem:[%s9 + $0x7f0] sm:$0xff]
        %v2832 = vld [vmem:[%s9 + $0x7f8] sm:$0xff]
        %2833 = vmatprep.subr.mxu0 %v2578
        %2834 = vmatpush1.msra.mxu0 %v2577
        %2835 = vmatprep.subr.mxu0 %v2586
        %2836 = vmatpush1.msra.mxu0 %v2585
        %2837 = vmatprep.subr.mxu0 %v2594
        %2838 = vmatpush1.msra.mxu0 %v2593
        %2839 = vmatprep.subr.mxu0 %v2602
        %2840 = vmatpush1.msra.mxu0 %v2601
        %2841 = vmatprep.subr.mxu0 %v2610
        %2842 = vmatpush1.msra.mxu0 %v2609
        %2843 = vmatprep.subr.mxu0 %v2618
        %2844 = vmatpush1.msra.mxu0 %v2617
        %2845 = vmatprep.subr.mxu0 %v2626
        %2846 = vmatpush1.msra.mxu0 %v2625
        %2847 = vmatprep.subr.mxu0 %v2634
        %2848 = vmatpush1.msra.mxu0 %v2633
        %2849 = vmatprep.subr.mxu0 %v2642
        %2850 = vmatpush1.msra.mxu0 %v2641
        %2851 = vmatprep.subr.mxu0 %v2650
        %2852 = vmatpush1.msra.mxu0 %v2649
        %2853 = vmatprep.subr.mxu0 %v2658
        %2854 = vmatpush1.msra.mxu0 %v2657
        %2855 = vmatprep.subr.mxu0 %v2666
        %2856 = vmatpush1.msra.mxu0 %v2665
        %2857 = vmatprep.subr.mxu0 %v2674
        %2858 = vmatpush1.msra.mxu0 %v2673
        %2859 = vmatprep.subr.mxu0 %v2682
        %2860 = vmatpush1.msra.mxu0 %v2681
        %2861 = vmatprep.subr.mxu0 %v2690
        %2862 = vmatpush1.msra.mxu0 %v2689
        %2863 = vmatprep.subr.mxu0 %v2698
        %2864 = vmatpush1.msra.mxu0 %v2697
        %2865 = vmatprep.subr.mxu0 %v2706
        %2866 = vmatpush1.msra.mxu0 %v2705
        %2867 = vmatprep.subr.mxu0 %v2714
        %2868 = vmatpush1.msra.mxu0 %v2713
        %2869 = vmatprep.subr.mxu0 %v2722
        %2870 = vmatpush1.msra.mxu0 %v2721
        %2871 = vmatprep.subr.mxu0 %v2730
        %2872 = vmatpush1.msra.mxu0 %v2729
        %2873 = vmatprep.subr.mxu0 %v2738
        %2874 = vmatpush1.msra.mxu0 %v2737
        %2875 = vmatprep.subr.mxu0 %v2746
        %2876 = vmatpush1.msra.mxu0 %v2745
        %2877 = vmatprep.subr.mxu0 %v2754
        %2878 = vmatpush1.msra.mxu0 %v2753
        %2879 = vmatprep.subr.mxu0 %v2762
        %2880 = vmatpush1.msra.mxu0 %v2761
        %2881 = vmatprep.subr.mxu0 %v2770
        %2882 = vmatpush1.msra.mxu0 %v2769
        %2883 = vmatprep.subr.mxu0 %v2778
        %2884 = vmatpush1.msra.mxu0 %v2777
        %2885 = vmatprep.subr.mxu0 %v2786
        %2886 = vmatpush1.msra.mxu0 %v2785
        %2887 = vmatprep.subr.mxu0 %v2794
        %2888 = vmatpush1.msra.mxu0 %v2793
        %2889 = vmatprep.subr.mxu0 %v2802
        %2890 = vmatpush1.msra.mxu0 %v2801
        %2891 = vmatprep.subr.mxu0 %v2810
        %2892 = vmatpush1.msra.mxu0 %v2809
        %2893 = vmatprep.subr.mxu0 %v2818
        %2894 = vmatpush1.msra.mxu0 %v2817
        %2895 = vmatprep.subr.mxu0 %v2826
        %2896 = vmatpush1.msra.mxu0 %v2825
        %2897 = vmatprep.mubr.f32.mxu0 %v2576
        %2898 = vmatmul.mubr.f32.gmra.mrb[0].mxu0 %v2574
        %v2899 = vpop.f32.mrb[0].mxu0
        %v2900 = vadd.f32 0.0, %v2899
        %v2901 = vpop.f32.mrb[0].mxu0
        %v2902 = vadd.f32 0.0, %v2901
        %2903 = vdwg.mxu0
        %2904 = vmatprep.subr.mxu0 %v2580
        %2905 = vmatpush1.msra.mxu0 %v2579
        %2906 = vmatprep.subr.mxu0 %v2588
        %2907 = vmatpush1.msra.mxu0 %v2587
        %2908 = vmatprep.subr.mxu0 %v2596
        %2909 = vmatpush1.msra.mxu0 %v2595
        %2910 = vmatprep.subr.mxu0 %v2604
        %2911 = vmatpush1.msra.mxu0 %v2603
        %2912 = vmatprep.subr.mxu0 %v2612
        %2913 = vmatpush1.msra.mxu0 %v2611
        %2914 = vmatprep.subr.mxu0 %v2620
        %2915 = vmatpush1.msra.mxu0 %v2619
        %2916 = vmatprep.subr.mxu0 %v2628
        %2917 = vmatpush1.msra.mxu0 %v2627
        %2918 = vmatprep.subr.mxu0 %v2636
        %2919 = vmatpush1.msra.mxu0 %v2635
        %2920 = vmatprep.subr.mxu0 %v2644
        %2921 = vmatpush1.msra.mxu0 %v2643
        %2922 = vmatprep.subr.mxu0 %v2652
        %2923 = vmatpush1.msra.mxu0 %v2651
        %2924 = vmatprep.subr.mxu0 %v2660
        %2925 = vmatpush1.msra.mxu0 %v2659
        %2926 = vmatprep.subr.mxu0 %v2668
        %2927 = vmatpush1.msra.mxu0 %v2667
        %2928 = vmatprep.subr.mxu0 %v2676
        %2929 = vmatpush1.msra.mxu0 %v2675
        %2930 = vmatprep.subr.mxu0 %v2684
        %2931 = vmatpush1.msra.mxu0 %v2683
        %2932 = vmatprep.subr.mxu0 %v2692
        %2933 = vmatpush1.msra.mxu0 %v2691
        %2934 = vmatprep.subr.mxu0 %v2700
        %2935 = vmatpush1.msra.mxu0 %v2699
        %2936 = vmatprep.subr.mxu0 %v2708
        %2937 = vmatpush1.msra.mxu0 %v2707
        %2938 = vmatprep.subr.mxu0 %v2716
        %2939 = vmatpush1.msra.mxu0 %v2715
        %2940 = vmatprep.subr.mxu0 %v2724
        %2941 = vmatpush1.msra.mxu0 %v2723
        %2942 = vmatprep.subr.mxu0 %v2732
        %2943 = vmatpush1.msra.mxu0 %v2731
        %2944 = vmatprep.subr.mxu0 %v2740
        %2945 = vmatpush1.msra.mxu0 %v2739
        %2946 = vmatprep.subr.mxu0 %v2748
        %2947 = vmatpush1.msra.mxu0 %v2747
        %2948 = vmatprep.subr.mxu0 %v2756
        %2949 = vmatpush1.msra.mxu0 %v2755
        %2950 = vmatprep.subr.mxu0 %v2764
        %2951 = vmatpush1.msra.mxu0 %v2763
        %2952 = vmatprep.subr.mxu0 %v2772
        %2953 = vmatpush1.msra.mxu0 %v2771
        %2954 = vmatprep.subr.mxu0 %v2780
        %2955 = vmatpush1.msra.mxu0 %v2779
        %2956 = vmatprep.subr.mxu0 %v2788
        %2957 = vmatpush1.msra.mxu0 %v2787
        %2958 = vmatprep.subr.mxu0 %v2796
        %2959 = vmatpush1.msra.mxu0 %v2795
        %2960 = vmatprep.subr.mxu0 %v2804
        %2961 = vmatpush1.msra.mxu0 %v2803
        %2962 = vmatprep.subr.mxu0 %v2812
        %2963 = vmatpush1.msra.mxu0 %v2811
        %2964 = vmatprep.subr.mxu0 %v2820
        %2965 = vmatpush1.msra.mxu0 %v2819
        %2966 = vmatprep.subr.mxu0 %v2828
        %2967 = vmatpush1.msra.mxu0 %v2827
        %2968 = vmatprep.mubr.f32.mxu0 %v2576
        %2969 = vmatmul.mubr.f32.gmra.mrb[0].mxu0 %v2574
        %v2970 = vpop.f32.mrb[0].mxu0
        %v2971 = vadd.f32 0.0, %v2970
        %v2972 = vpop.f32.mrb[0].mxu0
        %v2973 = vadd.f32 0.0, %v2972
        %2974 = vdwg.mxu0
        %2975 = vmatprep.subr.mxu0 %v2582
        %2976 = vmatpush1.msra.mxu0 %v2581
        %2977 = vmatprep.subr.mxu0 %v2590
        %2978 = vmatpush1.msra.mxu0 %v2589
        %2979 = vmatprep.subr.mxu0 %v2598
        %2980 = vmatpush1.msra.mxu0 %v2597
        %2981 = vmatprep.subr.mxu0 %v2606
        %2982 = vmatpush1.msra.mxu0 %v2605
        %2983 = vmatprep.subr.mxu0 %v2614
        %2984 = vmatpush1.msra.mxu0 %v2613
        %2985 = vmatprep.subr.mxu0 %v2622
        %2986 = vmatpush1.msra.mxu0 %v2621
        %2987 = vmatprep.subr.mxu0 %v2630
        %2988 = vmatpush1.msra.mxu0 %v2629
        %2989 = vmatprep.subr.mxu0 %v2638
        %2990 = vmatpush1.msra.mxu0 %v2637
        %2991 = vmatprep.subr.mxu0 %v2646
        %2992 = vmatpush1.msra.mxu0 %v2645
        %2993 = vmatprep.subr.mxu0 %v2654
        %2994 = vmatpush1.msra.mxu0 %v2653
        %2995 = vmatprep.subr.mxu0 %v2662
        %2996 = vmatpush1.msra.mxu0 %v2661
        %2997 = vmatprep.subr.mxu0 %v2670
        %2998 = vmatpush1.msra.mxu0 %v2669
        %2999 = vmatprep.subr.mxu0 %v2678
        %3000 = vmatpush1.msra.mxu0 %v2677
        %3001 = vmatprep.subr.mxu0 %v2686
        %3002 = vmatpush1.msra.mxu0 %v2685
        %3003 = vmatprep.subr.mxu0 %v2694
        %3004 = vmatpush1.msra.mxu0 %v2693
        %3005 = vmatprep.subr.mxu0 %v2702
        %3006 = vmatpush1.msra.mxu0 %v2701
        %3007 = vmatprep.subr.mxu0 %v2710
        %3008 = vmatpush1.msra.mxu0 %v2709
        %3009 = vmatprep.subr.mxu0 %v2718
        %3010 = vmatpush1.msra.mxu0 %v2717
        %3011 = vmatprep.subr.mxu0 %v2726
        %3012 = vmatpush1.msra.mxu0 %v2725
        %3013 = vmatprep.subr.mxu0 %v2734
        %3014 = vmatpush1.msra.mxu0 %v2733
        %3015 = vmatprep.subr.mxu0 %v2742
        %3016 = vmatpush1.msra.mxu0 %v2741
        %3017 = vmatprep.subr.mxu0 %v2750
        %3018 = vmatpush1.msra.mxu0 %v2749
        %3019 = vmatprep.subr.mxu0 %v2758
        %3020 = vmatpush1.msra.mxu0 %v2757
        %3021 = vmatprep.subr.mxu0 %v2766
        %3022 = vmatpush1.msra.mxu0 %v2765
        %3023 = vmatprep.subr.mxu0 %v2774
        %3024 = vmatpush1.msra.mxu0 %v2773
        %3025 = vmatprep.subr.mxu0 %v2782
        %3026 = vmatpush1.msra.mxu0 %v2781
        %3027 = vmatprep.subr.mxu0 %v2790
        %3028 = vmatpush1.msra.mxu0 %v2789
        %3029 = vmatprep.subr.mxu0 %v2798
        %3030 = vmatpush1.msra.mxu0 %v2797
        %3031 = vmatprep.subr.mxu0 %v2806
        %3032 = vmatpush1.msra.mxu0 %v2805
        %3033 = vmatprep.subr.mxu0 %v2814
        %3034 = vmatpush1.msra.mxu0 %v2813
        %3035 = vmatprep.subr.mxu0 %v2822
        %3036 = vmatpush1.msra.mxu0 %v2821
        %3037 = vmatprep.subr.mxu0 %v2830
        %3038 = vmatpush1.msra.mxu0 %v2829
        %3039 = vmatprep.mubr.f32.mxu0 %v2576
        %3040 = vmatmul.mubr.f32.gmra.mrb[0].mxu0 %v2574
        %v3041 = vpop.f32.mrb[0].mxu0
        %v3042 = vadd.f32 0.0, %v3041
        %v3043 = vpop.f32.mrb[0].mxu0
        %v3044 = vadd.f32 0.0, %v3043
        %3045 = vdwg.mxu0
        %3046 = vmatprep.subr.mxu0 %v2584
        %3047 = vmatpush1.msra.mxu0 %v2583
        %3048 = vmatprep.subr.mxu0 %v2592
        %3049 = vmatpush1.msra.mxu0 %v2591
        %3050 = vmatprep.subr.mxu0 %v2600
        %3051 = vmatpush1.msra.mxu0 %v2599
        %3052 = vmatprep.subr.mxu0 %v2608
        %3053 = vmatpush1.msra.mxu0 %v2607
        %3054 = vmatprep.subr.mxu0 %v2616
        %3055 = vmatpush1.msra.mxu0 %v2615
        %3056 = vmatprep.subr.mxu0 %v2624
        %3057 = vmatpush1.msra.mxu0 %v2623
        %3058 = vmatprep.subr.mxu0 %v2632
        %3059 = vmatpush1.msra.mxu0 %v2631
        %3060 = vmatprep.subr.mxu0 %v2640
        %3061 = vmatpush1.msra.mxu0 %v2639
        %3062 = vmatprep.subr.mxu0 %v2648
        %3063 = vmatpush1.msra.mxu0 %v2647
        %3064 = vmatprep.subr.mxu0 %v2656
        %3065 = vmatpush1.msra.mxu0 %v2655
        %3066 = vmatprep.subr.mxu0 %v2664
        %3067 = vmatpush1.msra.mxu0 %v2663
        %3068 = vmatprep.subr.mxu0 %v2672
        %3069 = vmatpush1.msra.mxu0 %v2671
        %3070 = vmatprep.subr.mxu0 %v2680
        %3071 = vmatpush1.msra.mxu0 %v2679
        %3072 = vmatprep.subr.mxu0 %v2688
        %3073 = vmatpush1.msra.mxu0 %v2687
        %3074 = vmatprep.subr.mxu0 %v2696
        %3075 = vmatpush1.msra.mxu0 %v2695
        %3076 = vmatprep.subr.mxu0 %v2704
        %3077 = vmatpush1.msra.mxu0 %v2703
        %3078 = vmatprep.subr.mxu0 %v2712
        %3079 = vmatpush1.msra.mxu0 %v2711
        %3080 = vmatprep.subr.mxu0 %v2720
        %3081 = vmatpush1.msra.mxu0 %v2719
        %3082 = vmatprep.subr.mxu0 %v2728
        %3083 = vmatpush1.msra.mxu0 %v2727
        %3084 = vmatprep.subr.mxu0 %v2736
        %3085 = vmatpush1.msra.mxu0 %v2735
        %3086 = vmatprep.subr.mxu0 %v2744
        %3087 = vmatpush1.msra.mxu0 %v2743
        %3088 = vmatprep.subr.mxu0 %v2752
        %3089 = vmatpush1.msra.mxu0 %v2751
        %3090 = vmatprep.subr.mxu0 %v2760
        %3091 = vmatpush1.msra.mxu0 %v2759
        %3092 = vmatprep.subr.mxu0 %v2768
        %3093 = vmatpush1.msra.mxu0 %v2767
        %3094 = vmatprep.subr.mxu0 %v2776
        %3095 = vmatpush1.msra.mxu0 %v2775
        %3096 = vmatprep.subr.mxu0 %v2784
        %3097 = vmatpush1.msra.mxu0 %v2783
        %3098 = vmatprep.subr.mxu0 %v2792
        %3099 = vmatpush1.msra.mxu0 %v2791
        %3100 = vmatprep.subr.mxu0 %v2800
        %3101 = vmatpush1.msra.mxu0 %v2799
        %3102 = vmatprep.subr.mxu0 %v2808
        %3103 = vmatpush1.msra.mxu0 %v2807
        %3104 = vmatprep.subr.mxu0 %v2816
        %3105 = vmatpush1.msra.mxu0 %v2815
        %3106 = vmatprep.subr.mxu0 %v2824
        %3107 = vmatpush1.msra.mxu0 %v2823
        %3108 = vmatprep.subr.mxu0 %v2832
        %3109 = vmatpush1.msra.mxu0 %v2831
        %3110 = vmatprep.mubr.f32.mxu0 %v2576
        %3111 = vmatmul.mubr.f32.gmra.mrb[0].mxu0 %v2574
        %v3112 = vpop.f32.mrb[0].mxu0
        %v3113 = vadd.f32 0.0, %v3112
        %v3114 = vpop.f32.mrb[0].mxu0
        %v3115 = vadd.f32 0.0, %v3114
        %3116 = vdwg.mxu0
        %v3117 = vld [vmem:[%s435] sm:$0xff]
        %v3118 = vld [vmem:[%s435 + $0x8] sm:$0xff]
        %v3119 = vld [vmem:[%s435 + $0x10] sm:$0xff]
        %v3120 = vld [vmem:[%s435 + $0x18] sm:$0xff]
        %v3121 = vlaneseq
        %v3122 = vshrl.u32 %v3121, 7
        %v3123 = vsub.s32 0, %v3122
        %v3124 = vrot.slane %v2900, %v3123
        %v3125 = vlaneseq
        %v3126 = vshrl.u32 %v3125, 7
        %v3127 = vsub.s32 0, %v3126
        %v3128 = vrot.slane %v2902, %v3127
        %v3129 = vlaneseq
        %v3130 = vshrl.u32 %v3129, 7
        %v3131 = vsub.s32 0, %v3130
        %v3132 = vrot.slane %v2971, %v3131
        %v3133 = vlaneseq
        %v3134 = vshrl.u32 %v3133, 7
        %v3135 = vsub.s32 0, %v3134
        %v3136 = vrot.slane %v2973, %v3135
        %v3137 = vlaneseq
        %v3138 = vshrl.u32 %v3137, 7
        %v3139 = vsub.s32 0, %v3138
        %v3140 = vrot.slane %v3042, %v3139
        %v3141 = vlaneseq
        %v3142 = vshrl.u32 %v3141, 7
        %v3143 = vsub.s32 0, %v3142
        %v3144 = vrot.slane %v3044, %v3143
        %v3145 = vlaneseq
        %v3146 = vshrl.u32 %v3145, 7
        %v3147 = vsub.s32 0, %v3146
        %v3148 = vrot.slane %v3113, %v3147
        %v3149 = vlaneseq
        %v3150 = vshrl.u32 %v3149, 7
        %v3151 = vsub.s32 0, %v3150
        %v3152 = vrot.slane %v3115, %v3151
        %v3161 = vcombine.low %v3124, %v3128
        %v3162 = vcombine.low %v3132, %v3136
        %v3163 = vcombine.low %v3140, %v3144
        %v3164 = vcombine.low %v3148, %v3152
        %v3169 = vmul.f32 %v3117, %v3161
        %v3170 = vmul.f32 %v3118, %v3162
        %v3171 = vmul.f32 %v3119, %v3163
        %v3172 = vmul.f32 %v3120, %v3164
        %3173 = vst [vmem:[%s440] sm:$0xff] %v3169
        %3174 = vst [vmem:[%s440 + $0x8] sm:$0xff] %v3170
        %3175 = vst [vmem:[%s440 + $0x10] sm:$0xff] %v3171
        %3176 = vst [vmem:[%s440 + $0x18] sm:$0xff] %v3172
        %p3177 = scmp.lt.s32.totalorder %s23, 1
        %s3178 = scalar_select %p3177, %s23, 1
        %s3179 = smul.addr %s3178, 8
        %s3180 = smul.addr %s3179, 4
        %s3181 = scalar_lea.vmem %s11, %s3180
        // Predicated region
        $region69: #{attention_gate.1} parent=63 // pred_check
          %p3182 = pneg %p287
        $region70: #{attention_gate.1} parent=63 // pred_check_branch
          %3184 = sbr.rel (%p3182) target = $region72
        $region71: #{attention_gate.1} parent=63 // pred_region
          _
        $region72: #{attention_gate.1} parent=63 // pred_fallthru
          _
      $region64: #{attention_gate.1} parent=5 // pred_fallthru
        _
      %p3185 = scmp.le.s32.totalorder 2, %s18
      // Predicated region
      $region73: #{attention_gate.1} parent=5 // pred_check
        %p3186 = pneg %p3185
      $region74: #{attention_gate.1} parent=5 // pred_check_branch
        %3188 = sbr.rel (%p3186) target = $region76
      $region75: #{attention_gate.1} parent=5 // pred_region
        %s3189 = ssub.s32 %s18, 2
        // Predicated region
        $region77: #{attention_gate.1} parent=75 // pred_check
          %p3190 = pneg %p293
        $region78: #{attention_gate.1} parent=75 // pred_check_branch
          %3192 = sbr.rel (%p3190) target = $region80
        $region79: #{attention_gate.1} parent=75 // pred_region
          %p3193 = scmp.lt.s32.totalorder %s24, 1
          %s3194 = scalar_select %p3193, %s24, 1
          %s3195 = smul.addr %s3194, 8
          %s3196 = smul.addr %s3195, 4
          %s3197 = scalar_lea.vmem %s11, %s3196
        $region80: #{attention_gate.1} parent=75 // pred_fallthru
          _
      $region76: #{attention_gate.1} parent=5 // pred_fallthru
        _
    $region6: #{attention_gate.1} parent=1 // loop_footer
      %s22 = sadd.s32 1, %s18
    $region7: #{attention_gate.1} parent=1 // loop_footer_branch
      %17 = sbr.rel target = $region3
    $region8: #{attention_gate.1} parent=1 // loop_exit
      _
    %3198 = vsyncpa [#allocation3], 1
    %s3199 = scalar_lea.sflag [#allocation3], 1
    %3200 = vsyncpa %s3199, 1

</llo_original>
